<compile_context>
chip_gen: v7x
topology: tpu7x:2x2x1
jax: 0.10.0
libtpu: 0.0.40
codegen_flags: <defaults>
</compile_context>

<pallas_src>
import functools

import jax
import jax.numpy as jnp
from jax.experimental import pallas as pl
from jax.experimental.pallas import tpu as pltpu

USE_MASK = True  # stands in for config.use_mask

# ------------------------- problem sizes (small, synthetic) -------------------------
B = 2          # batch
T = 8          # seq_length
VOCAB = 50     # vocabulary size
E = 32         # word-embedding dim
H = 32         # num_hid (GRU hidden / joint dim)
K = 16         # num_objs
D = 32         # obj_dim
ATT_H = 32     # attention hidden dim
A = 16         # number of answers

B_PAD = 8      # pad batch to a full f32 sublane tile -> unmasked loads/stores
OUT_W = 128    # lane-dense packed output width (logits | mask | joint | zero pad)
assert 2 * A + H <= OUT_W


def _full_spec(shape):
    """BlockSpec covering the whole array (grid has a single dummy step)."""
    nd = len(shape)
    return pl.BlockSpec(shape, lambda i, _nd=nd: (0,) * _nd)


# ----------------------------------- fused kernel -----------------------------------
def fused_kernel(x_ref, v_ref,
                 wih_r_ref, wih_z_ref, wih_n_ref,
                 whh_r_ref, whh_z_ref, whh_n_ref,
                 b_r_ref, b_z_ref, b_in_ref, b_hn_ref,
                 att_wv_ref, att_wq_ref, att_b1_ref, att_w2_ref,
                 wqm_ref, bqm_ref, vn_w_ref, vn_b_ref,
                 cls_w1_ref, cls_b1_ref, cls_w2_ref, cls_b2_ref,
                 out_ref):
    f32 = jnp.float32

    # ---------------- GRU question encoder (returns last hidden state) ----------------
    # Input projection hoisted out of the serial time loop: one [T*B_PAD, E] matmul per
    # gate instead of T tiny ones. b_ih+b_hh folded for r/z gates (b_hn stays separate,
    # PyTorch applies it inside r * (W_hn h + b_hn)).
    x2 = x_ref[...]                                                      # [T*B_PAD, E]
    gi_r = jnp.dot(x2, wih_r_ref[...], preferred_element_type=f32) + b_r_ref[...]
    gi_z = jnp.dot(x2, wih_z_ref[...], preferred_element_type=f32) + b_z_ref[...]
    gi_n = jnp.dot(x2, wih_n_ref[...], preferred_element_type=f32) + b_in_ref[...]

    whh_r = whh_r_ref[...]
    whh_z = whh_z_ref[...]
    whh_n = whh_n_ref[...]
    b_hn = b_hn_ref[...]

    h = jnp.zeros((B_PAD, H), f32)
    for t in range(T):                      # static trip count -> fully unrolled
        lo = t * B_PAD                      # aligned, static sublane-tile slice
        gh_r = jnp.dot(h, whh_r, preferred_element_type=f32)
        gh_z = jnp.dot(h, whh_z, preferred_element_type=f32)
        gh_n = jnp.dot(h, whh_n, preferred_element_type=f32) + b_hn
        r = jax.nn.sigmoid(gi_r[lo:lo + B_PAD] + gh_r)
        z = jax.nn.sigmoid(gi_z[lo:lo + B_PAD] + gh_z)
        n = jnp.tanh(gi_n[lo:lo + B_PAD] + r * gh_n)
        h = (1.0 - z) * n + z * h
    q_emb = h                                                            # [B_PAD, H]

    # ---------------- attention over objects + weighted pooling ----------------
    v3 = v_ref[...]                                                      # [B_PAD, K, D]
    v2 = v3.reshape(B_PAD * K, D)                                        # flat matmul: one MXU pass
    pv = jnp.dot(v2, att_wv_ref[...], preferred_element_type=f32)        # [B_PAD*K, ATT_H]
    pq = jnp.dot(q_emb, att_wq_ref[...], preferred_element_type=f32)     # [B_PAD, ATT_H]
    joint_att = jax.nn.relu(pv.reshape(B_PAD, K, ATT_H)
                            + pq[:, None, :]
                            + att_b1_ref[...][None])                     # [B_PAD, K, ATT_H]
    # logits = joint . w2 done as VPU mul + lane reduce (avoids a width-1 MXU output).
    # The scalar bias of the final attention linear cancels under softmax -> omitted.
    logits_att = jnp.sum(joint_att * att_w2_ref[...][None], axis=-1)     # [B_PAD, K]
    m = jnp.max(logits_att, axis=-1, keepdims=True)
    e = jnp.exp(logits_att - m)
    att = e / jnp.sum(e, axis=-1, keepdims=True)                         # softmax over objects
    v_emb = jnp.sum(att[:, :, None] * v3, axis=1)                        # [B_PAD, D]

    # ---------------- q_net / v_net / classifier / answer_mask ----------------
    # q_net and answer_mask both consume q_emb -> one fused matmul, sliced once.
    qm = jnp.dot(q_emb, wqm_ref[...], preferred_element_type=f32) + bqm_ref[...]  # [B_PAD, H+A]
    q_repr = jax.nn.relu(qm[:, :H])
    mask = jax.nn.sigmoid(qm[:, H:H + A])
    v_repr = jax.nn.relu(jnp.dot(v_emb, vn_w_ref[...], preferred_element_type=f32)
                         + vn_b_ref[...])
    joint = q_repr * v_repr                                              # [B_PAD, H]
    hid = jax.nn.relu(jnp.dot(joint, cls_w1_ref[...], preferred_element_type=f32)
                      + cls_b1_ref[...])
    logits = jnp.dot(hid, cls_w2_ref[...], preferred_element_type=f32) + cls_b2_ref[...]
    if USE_MASK:
        logits = logits * mask

    # lane-dense packed output: [logits | mask | joint | zero pad] -> one [8, 128] store
    pad = jnp.zeros((B_PAD, OUT_W - (2 * A + H)), f32)
    out_ref[...] = jnp.concatenate([logits, mask, joint, pad], axis=-1)


# ------------------------------------ wrapper ---------------------------------------
@jax.jit
def base_model_forward(params, v, q):
    bsz = q.shape[0]

    # 1) word embedding lookup (gather glue), time-major, batch padded to sublane tile.
    # TODO(synk): could be fused in-kernel via PrefetchScalarGridSpec scalar-prefetched ids.
    w_emb = jnp.take(params['emb'], q, axis=0)                  # [B, T, E]
    x = jnp.transpose(w_emb, (1, 0, 2))                         # [T, B, E]
    x = jnp.pad(x, ((0, 0), (0, B_PAD - bsz), (0, 0)))          # [T, B_PAD, E]
    x = x.reshape(T * B_PAD, E)                                 # [T*B_PAD, E]
    v_p = jnp.pad(v, ((0, B_PAD - bsz), (0, 0), (0, 0)))        # [B_PAD, K, D]

    # per-gate GRU weights (PyTorch gate order r, z, n); fold b_ih + b_hh for r/z.
    wih, whh = params['gru_wih'], params['gru_whh']
    bih, bhh = params['gru_bih'], params['gru_bhh']
    wih_r, wih_z, wih_n = wih[:, :H], wih[:, H:2 * H], wih[:, 2 * H:]
    whh_r, whh_z, whh_n = whh[:, :H], whh[:, H:2 * H], whh[:, 2 * H:]
    b_r = bih[:, :H] + bhh[:, :H]
    b_z = bih[:, H:2 * H] + bhh[:, H:2 * H]
    b_in = bih[:, 2 * H:]
    b_hn = bhh[:, 2 * H:]

    # fuse q_net and answer_mask weights (both consume q_emb).
    wqm = jnp.concatenate([params['qn_w'], params['msk_w']], axis=1)   # [H, H+A]
    bqm = jnp.concatenate([params['qn_b'], params['msk_b']], axis=1)   # [1, H+A]
    att_w2_row = params['att_w2'].T                                    # [1, ATT_H]
    # note: params['att_b2'] is a per-row constant on the attention logits; it cancels
    # under softmax, so it is intentionally not passed to the kernel.

    ins = [x, v_p,
           wih_r, wih_z, wih_n, whh_r, whh_z, whh_n,
           b_r, b_z, b_in, b_hn,
           params['att_wv'], params['att_wq'], params['att_b1'], att_w2_row,
           wqm, bqm, params['vn_w'], params['vn_b'],
           params['cls_w1'], params['cls_b1'], params['cls_w2'], params['cls_b2']]

    out = pl.pallas_call(
        fused_kernel,
        grid=(1,),
        in_specs=[_full_spec(a.shape) for a in ins],
        out_specs=_full_spec((B_PAD, OUT_W)),
        out_shape=jax.ShapeDtypeStruct((B_PAD, OUT_W), jnp.float32),
        compiler_params=pltpu.CompilerParams(dimension_semantics=("arbitrary",)),
    )(*ins)

    logits = out[:bsz, 0:A]
    mask = out[:bsz, A:2 * A]
    joint_repr = out[:bsz, 2 * A:2 * A + H]
    if not USE_MASK:
        mask = None
    return logits, mask, joint_repr


def init_params(key):
    ks = jax.random.split(key, 16)
    n = functools.partial(jax.random.normal, dtype=jnp.float32)
    s = 0.1
    return {
        'emb':     s * n(ks[0], (VOCAB, E)),
        'gru_wih': s * n(ks[1], (E, 3 * H)),
        'gru_whh': s * n(ks[2], (H, 3 * H)),
        'gru_bih': s * n(ks[3], (1, 3 * H)),
        'gru_bhh': s * n(ks[4], (1, 3 * H)),
        'att_wv':  s * n(ks[5], (D, ATT_H)),
        'att_wq':  s * n(ks[6], (H, ATT_H)),
        'att_b1':  s * n(ks[7], (1, ATT_H)),
        'att_w2':  s * n(ks[8], (ATT_H, 1)),
        'att_b2':  jnp.zeros((1, 1), jnp.float32),
        'qn_w':    s * n(ks[9], (H, H)),
        'qn_b':    jnp.zeros((1, H), jnp.float32),
        'vn_w':    s * n(ks[10], (D, H)),
        'vn_b':    jnp.zeros((1, H), jnp.float32),
        'cls_w1':  s * n(ks[11], (H, 2 * H)),
        'cls_b1':  jnp.zeros((1, 2 * H), jnp.float32),
        'cls_w2':  s * n(ks[12], (2 * H, A)),
        'cls_b2':  jnp.zeros((1, A), jnp.float32),
        'msk_w':   s * n(ks[13], (H, A)),
        'msk_b':   jnp.zeros((1, A), jnp.float32),
    }


if __name__ == "__main__":
    key = jax.random.PRNGKey(0)
    kp, kv, kq = jax.random.split(key, 3)
    params = init_params(kp)

    v = jax.random.normal(kv, (B, K, D), jnp.float32)           # [batch, num_objs, obj_dim]
    q = jax.random.randint(kq, (B, T), 0, VOCAB, jnp.int32)     # [batch, seq_length]

    logits, mask, joint_repr = base_model_forward(params, v, q)
    jax.block_until_ready((logits, mask, joint_repr))

    assert logits.shape == (B, A)
    assert mask.shape == (B, A)
    assert joint_repr.shape == (B, H)
    assert bool(jnp.all(jnp.isfinite(logits)))
    assert bool(jnp.all(jnp.isfinite(mask)))
    assert bool(jnp.all(jnp.isfinite(joint_repr)))
    print("KERNEL_OK")
</pallas_src>

<mosaic_0001>
module attributes {stable_mosaic.version = 11 : i64} {
  func.func @fused_kernel(%arg0: i32, %arg1: memref<64x32xf32, #tpu.memory_space<vmem>>, %arg2: memref<8x16x32xf32, #tpu.memory_space<vmem>>, %arg3: memref<32x32xf32, #tpu.memory_space<vmem>>, %arg4: memref<32x32xf32, #tpu.memory_space<vmem>>, %arg5: memref<32x32xf32, #tpu.memory_space<vmem>>, %arg6: memref<32x32xf32, #tpu.memory_space<vmem>>, %arg7: memref<32x32xf32, #tpu.memory_space<vmem>>, %arg8: memref<32x32xf32, #tpu.memory_space<vmem>>, %arg9: memref<1x32xf32, #tpu.memory_space<vmem>>, %arg10: memref<1x32xf32, #tpu.memory_space<vmem>>, %arg11: memref<1x32xf32, #tpu.memory_space<vmem>>, %arg12: memref<1x32xf32, #tpu.memory_space<vmem>>, %arg13: memref<32x32xf32, #tpu.memory_space<vmem>>, %arg14: memref<32x32xf32, #tpu.memory_space<vmem>>, %arg15: memref<1x32xf32, #tpu.memory_space<vmem>>, %arg16: memref<1x32xf32, #tpu.memory_space<vmem>>, %arg17: memref<32x48xf32, #tpu.memory_space<vmem>>, %arg18: memref<1x48xf32, #tpu.memory_space<vmem>>, %arg19: memref<32x32xf32, #tpu.memory_space<vmem>>, %arg20: memref<1x32xf32, #tpu.memory_space<vmem>>, %arg21: memref<32x64xf32, #tpu.memory_space<vmem>>, %arg22: memref<1x64xf32, #tpu.memory_space<vmem>>, %arg23: memref<64x16xf32, #tpu.memory_space<vmem>>, %arg24: memref<1x16xf32, #tpu.memory_space<vmem>>, %arg25: memref<8x128xf32, #tpu.memory_space<vmem>>) attributes {dimension_semantics = [#tpu.dimension_semantics<arbitrary>], iteration_bounds = array<i64: 1>, scalar_prefetch = 0 : i64, scratch_operands = 0 : i64, tpu.core_type = #tpu.core_type<tc>, window_params = [{pipeline_mode = #tpu.pipeline_mode<synchronous>, transform_indices = @transform_0, window_bounds = array<i64: 64, 32>}, {pipeline_mode = #tpu.pipeline_mode<synchronous>, transform_indices = @transform_1, window_bounds = array<i64: 8, 16, 32>}, {pipeline_mode = #tpu.pipeline_mode<synchronous>, transform_indices = @transform_2, window_bounds = array<i64: 32, 32>}, {pipeline_mode = #tpu.pipeline_mode<synchronous>, transform_indices = @transform_3, window_bounds = array<i64: 32, 32>}, {pipeline_mode = #tpu.pipeline_mode<synchronous>, transform_indices = @transform_4, window_bounds = array<i64: 32, 32>}, {pipeline_mode = #tpu.pipeline_mode<synchronous>, transform_indices = @transform_5, window_bounds = array<i64: 32, 32>}, {pipeline_mode = #tpu.pipeline_mode<synchronous>, transform_indices = @transform_6, window_bounds = array<i64: 32, 32>}, {pipeline_mode = #tpu.pipeline_mode<synchronous>, transform_indices = @transform_7, window_bounds = array<i64: 32, 32>}, {pipeline_mode = #tpu.pipeline_mode<synchronous>, transform_indices = @transform_8, window_bounds = array<i64: 1, 32>}, {pipeline_mode = #tpu.pipeline_mode<synchronous>, transform_indices = @transform_9, window_bounds = array<i64: 1, 32>}, {pipeline_mode = #tpu.pipeline_mode<synchronous>, transform_indices = @transform_10, window_bounds = array<i64: 1, 32>}, {pipeline_mode = #tpu.pipeline_mode<synchronous>, transform_indices = @transform_11, window_bounds = array<i64: 1, 32>}, {pipeline_mode = #tpu.pipeline_mode<synchronous>, transform_indices = @transform_12, window_bounds = array<i64: 32, 32>}, {pipeline_mode = #tpu.pipeline_mode<synchronous>, transform_indices = @transform_13, window_bounds = array<i64: 32, 32>}, {pipeline_mode = #tpu.pipeline_mode<synchronous>, transform_indices = @transform_14, window_bounds = array<i64: 1, 32>}, {pipeline_mode = #tpu.pipeline_mode<synchronous>, transform_indices = @transform_15, window_bounds = array<i64: 1, 32>}, {pipeline_mode = #tpu.pipeline_mode<synchronous>, transform_indices = @transform_16, window_bounds = array<i64: 32, 48>}, {pipeline_mode = #tpu.pipeline_mode<synchronous>, transform_indices = @transform_17, window_bounds = array<i64: 1, 48>}, {pipeline_mode = #tpu.pipeline_mode<synchronous>, transform_indices = @transform_18, window_bounds = array<i64: 32, 32>}, {pipeline_mode = #tpu.pipeline_mode<synchronous>, transform_indices = @transform_19, window_bounds = array<i64: 1, 32>}, {pipeline_mode = #tpu.pipeline_mode<synchronous>, transform_indices = @transform_20, window_bounds = array<i64: 32, 64>}, {pipeline_mode = #tpu.pipeline_mode<synchronous>, transform_indices = @transform_21, window_bounds = array<i64: 1, 64>}, {pipeline_mode = #tpu.pipeline_mode<synchronous>, transform_indices = @transform_22, window_bounds = array<i64: 64, 16>}, {pipeline_mode = #tpu.pipeline_mode<synchronous>, transform_indices = @transform_23, window_bounds = array<i64: 1, 16>}, {pipeline_mode = #tpu.pipeline_mode<synchronous>, transform_indices = @transform_24, window_bounds = array<i64: 8, 128>}]} {
    %c0 = arith.constant 0 : index
    %c0_0 = arith.constant 0 : index
    %0 = vector.load %arg1[%c0, %c0_0] : memref<64x32xf32, #tpu.memory_space<vmem>>, vector<64x32xf32>
    %c0_1 = arith.constant 0 : index
    %c0_2 = arith.constant 0 : index
    %1 = vector.load %arg3[%c0_1, %c0_2] : memref<32x32xf32, #tpu.memory_space<vmem>>, vector<32x32xf32>
    %cst = arith.constant dense<0.000000e+00> : vector<64x32xf32>
    %2 = tpu.matmul %0, %1, %cst {dimension_numbers = #tpu.dot_dimension_numbers<[1], [0], [0], [1], [0, 0, 1, 1], [], []>} : vector<64x32xf32>, vector<32x32xf32>, vector<64x32xf32> -> vector<64x32xf32>
    %c0_3 = arith.constant 0 : index
    %c0_4 = arith.constant 0 : index
    %3 = vector.load %arg9[%c0_3, %c0_4] : memref<1x32xf32, #tpu.memory_space<vmem>>, vector<1x32xf32>
    %4 = vector.broadcast %3 : vector<1x32xf32> to vector<64x32xf32>
    %5 = arith.addf %2, %4 : vector<64x32xf32>
    %c0_5 = arith.constant 0 : index
    %c0_6 = arith.constant 0 : index
    %6 = vector.load %arg4[%c0_5, %c0_6] : memref<32x32xf32, #tpu.memory_space<vmem>>, vector<32x32xf32>
    %cst_7 = arith.constant dense<0.000000e+00> : vector<64x32xf32>
    %7 = tpu.matmul %0, %6, %cst_7 {dimension_numbers = #tpu.dot_dimension_numbers<[1], [0], [0], [1], [0, 0, 1, 1], [], []>} : vector<64x32xf32>, vector<32x32xf32>, vector<64x32xf32> -> vector<64x32xf32>
    %c0_8 = arith.constant 0 : index
    %c0_9 = arith.constant 0 : index
    %8 = vector.load %arg10[%c0_8, %c0_9] : memref<1x32xf32, #tpu.memory_space<vmem>>, vector<1x32xf32>
    %9 = vector.broadcast %8 : vector<1x32xf32> to vector<64x32xf32>
    %10 = arith.addf %7, %9 : vector<64x32xf32>
    %c0_10 = arith.constant 0 : index
    %c0_11 = arith.constant 0 : index
    %11 = vector.load %arg5[%c0_10, %c0_11] : memref<32x32xf32, #tpu.memory_space<vmem>>, vector<32x32xf32>
    %cst_12 = arith.constant dense<0.000000e+00> : vector<64x32xf32>
    %12 = tpu.matmul %0, %11, %cst_12 {dimension_numbers = #tpu.dot_dimension_numbers<[1], [0], [0], [1], [0, 0, 1, 1], [], []>} : vector<64x32xf32>, vector<32x32xf32>, vector<64x32xf32> -> vector<64x32xf32>
    %c0_13 = arith.constant 0 : index
    %c0_14 = arith.constant 0 : index
    %13 = vector.load %arg11[%c0_13, %c0_14] : memref<1x32xf32, #tpu.memory_space<vmem>>, vector<1x32xf32>
    %14 = vector.broadcast %13 : vector<1x32xf32> to vector<64x32xf32>
    %15 = arith.addf %12, %14 : vector<64x32xf32>
    %c0_15 = arith.constant 0 : index
    %c0_16 = arith.constant 0 : index
    %16 = vector.load %arg6[%c0_15, %c0_16] : memref<32x32xf32, #tpu.memory_space<vmem>>, vector<32x32xf32>
    %c0_17 = arith.constant 0 : index
    %c0_18 = arith.constant 0 : index
    %17 = vector.load %arg7[%c0_17, %c0_18] : memref<32x32xf32, #tpu.memory_space<vmem>>, vector<32x32xf32>
    %c0_19 = arith.constant 0 : index
    %c0_20 = arith.constant 0 : index
    %18 = vector.load %arg8[%c0_19, %c0_20] : memref<32x32xf32, #tpu.memory_space<vmem>>, vector<32x32xf32>
    %c0_21 = arith.constant 0 : index
    %c0_22 = arith.constant 0 : index
    %19 = vector.load %arg12[%c0_21, %c0_22] : memref<1x32xf32, #tpu.memory_space<vmem>>, vector<1x32xf32>
    %cst_23 = arith.constant 0.000000e+00 : f32
    %20 = vector.broadcast %cst_23 : f32 to vector<8x32xf32>
    %cst_24 = arith.constant dense<0.000000e+00> : vector<8x32xf32>
    %21 = tpu.matmul %20, %16, %cst_24 {dimension_numbers = #tpu.dot_dimension_numbers<[1], [0], [0], [1], [0, 0, 1, 1], [], []>} : vector<8x32xf32>, vector<32x32xf32>, vector<8x32xf32> -> vector<8x32xf32>
    %cst_25 = arith.constant dense<0.000000e+00> : vector<8x32xf32>
    %22 = tpu.matmul %20, %17, %cst_25 {dimension_numbers = #tpu.dot_dimension_numbers<[1], [0], [0], [1], [0, 0, 1, 1], [], []>} : vector<8x32xf32>, vector<32x32xf32>, vector<8x32xf32> -> vector<8x32xf32>
    %cst_26 = arith.constant dense<0.000000e+00> : vector<8x32xf32>
    %23 = tpu.matmul %20, %18, %cst_26 {dimension_numbers = #tpu.dot_dimension_numbers<[1], [0], [0], [1], [0, 0, 1, 1], [], []>} : vector<8x32xf32>, vector<32x32xf32>, vector<8x32xf32> -> vector<8x32xf32>
    %24 = vector.broadcast %19 : vector<1x32xf32> to vector<8x32xf32>
    %25 = arith.addf %23, %24 : vector<8x32xf32>
    %26 = vector.extract_strided_slice %5 {offsets = [0, 0], sizes = [8, 32], strides = [1, 1]} : vector<64x32xf32> to vector<8x32xf32>
    %27 = arith.addf %26, %21 : vector<8x32xf32>
    %28 = arith.negf %27 : vector<8x32xf32>
    %29 = math.exp %28 : vector<8x32xf32>
    %cst_27 = arith.constant 1.000000e+00 : f32
    %30 = vector.broadcast %cst_27 : f32 to vector<8x32xf32>
    %31 = arith.addf %30, %29 : vector<8x32xf32>
    %32 = arith.divf %30, %31 : vector<8x32xf32>
    %33 = vector.extract_strided_slice %10 {offsets = [0, 0], sizes = [8, 32], strides = [1, 1]} : vector<64x32xf32> to vector<8x32xf32>
    %34 = arith.addf %33, %22 : vector<8x32xf32>
    %35 = arith.negf %34 : vector<8x32xf32>
    %36 = math.exp %35 : vector<8x32xf32>
    %cst_28 = arith.constant 1.000000e+00 : f32
    %37 = vector.broadcast %cst_28 : f32 to vector<8x32xf32>
    %38 = arith.addf %37, %36 : vector<8x32xf32>
    %39 = arith.divf %37, %38 : vector<8x32xf32>
    %40 = vector.extract_strided_slice %15 {offsets = [0, 0], sizes = [8, 32], strides = [1, 1]} : vector<64x32xf32> to vector<8x32xf32>
    %41 = arith.mulf %32, %25 : vector<8x32xf32>
    %42 = arith.addf %40, %41 : vector<8x32xf32>
    %43 = math.tanh %42 : vector<8x32xf32>
    %cst_29 = arith.constant 1.000000e+00 : f32
    %44 = vector.broadcast %cst_29 : f32 to vector<8x32xf32>
    %45 = arith.subf %44, %39 : vector<8x32xf32>
    %46 = arith.mulf %45, %43 : vector<8x32xf32>
    %47 = arith.mulf %39, %20 : vector<8x32xf32>
    %48 = arith.addf %46, %47 : vector<8x32xf32>
    %cst_30 = arith.constant dense<0.000000e+00> : vector<8x32xf32>
    %49 = tpu.matmul %48, %16, %cst_30 {dimension_numbers = #tpu.dot_dimension_numbers<[1], [0], [0], [1], [0, 0, 1, 1], [], []>} : vector<8x32xf32>, vector<32x32xf32>, vector<8x32xf32> -> vector<8x32xf32>
    %cst_31 = arith.constant dense<0.000000e+00> : vector<8x32xf32>
    %50 = tpu.matmul %48, %17, %cst_31 {dimension_numbers = #tpu.dot_dimension_numbers<[1], [0], [0], [1], [0, 0, 1, 1], [], []>} : vector<8x32xf32>, vector<32x32xf32>, vector<8x32xf32> -> vector<8x32xf32>
    %cst_32 = arith.constant dense<0.000000e+00> : vector<8x32xf32>
    %51 = tpu.matmul %48, %18, %cst_32 {dimension_numbers = #tpu.dot_dimension_numbers<[1], [0], [0], [1], [0, 0, 1, 1], [], []>} : vector<8x32xf32>, vector<32x32xf32>, vector<8x32xf32> -> vector<8x32xf32>
    %52 = vector.broadcast %19 : vector<1x32xf32> to vector<8x32xf32>
    %53 = arith.addf %51, %52 : vector<8x32xf32>
    %54 = vector.extract_strided_slice %5 {offsets = [8, 0], sizes = [8, 32], strides = [1, 1]} : vector<64x32xf32> to vector<8x32xf32>
    %55 = arith.addf %54, %49 : vector<8x32xf32>
    %56 = arith.negf %55 : vector<8x32xf32>
    %57 = math.exp %56 : vector<8x32xf32>
    %cst_33 = arith.constant 1.000000e+00 : f32
    %58 = vector.broadcast %cst_33 : f32 to vector<8x32xf32>
    %59 = arith.addf %58, %57 : vector<8x32xf32>
    %60 = arith.divf %58, %59 : vector<8x32xf32>
    %61 = vector.extract_strided_slice %10 {offsets = [8, 0], sizes = [8, 32], strides = [1, 1]} : vector<64x32xf32> to vector<8x32xf32>
    %62 = arith.addf %61, %50 : vector<8x32xf32>
    %63 = arith.negf %62 : vector<8x32xf32>
    %64 = math.exp %63 : vector<8x32xf32>
    %cst_34 = arith.constant 1.000000e+00 : f32
    %65 = vector.broadcast %cst_34 : f32 to vector<8x32xf32>
    %66 = arith.addf %65, %64 : vector<8x32xf32>
    %67 = arith.divf %65, %66 : vector<8x32xf32>
    %68 = vector.extract_strided_slice %15 {offsets = [8, 0], sizes = [8, 32], strides = [1, 1]} : vector<64x32xf32> to vector<8x32xf32>
    %69 = arith.mulf %60, %53 : vector<8x32xf32>
    %70 = arith.addf %68, %69 : vector<8x32xf32>
    %71 = math.tanh %70 : vector<8x32xf32>
    %cst_35 = arith.constant 1.000000e+00 : f32
    %72 = vector.broadcast %cst_35 : f32 to vector<8x32xf32>
    %73 = arith.subf %72, %67 : vector<8x32xf32>
    %74 = arith.mulf %73, %71 : vector<8x32xf32>
    %75 = arith.mulf %67, %48 : vector<8x32xf32>
    %76 = arith.addf %74, %75 : vector<8x32xf32>
    %cst_36 = arith.constant dense<0.000000e+00> : vector<8x32xf32>
    %77 = tpu.matmul %76, %16, %cst_36 {dimension_numbers = #tpu.dot_dimension_numbers<[1], [0], [0], [1], [0, 0, 1, 1], [], []>} : vector<8x32xf32>, vector<32x32xf32>, vector<8x32xf32> -> vector<8x32xf32>
    %cst_37 = arith.constant dense<0.000000e+00> : vector<8x32xf32>
    %78 = tpu.matmul %76, %17, %cst_37 {dimension_numbers = #tpu.dot_dimension_numbers<[1], [0], [0], [1], [0, 0, 1, 1], [], []>} : vector<8x32xf32>, vector<32x32xf32>, vector<8x32xf32> -> vector<8x32xf32>
    %cst_38 = arith.constant dense<0.000000e+00> : vector<8x32xf32>
    %79 = tpu.matmul %76, %18, %cst_38 {dimension_numbers = #tpu.dot_dimension_numbers<[1], [0], [0], [1], [0, 0, 1, 1], [], []>} : vector<8x32xf32>, vector<32x32xf32>, vector<8x32xf32> -> vector<8x32xf32>
    %80 = vector.broadcast %19 : vector<1x32xf32> to vector<8x32xf32>
    %81 = arith.addf %79, %80 : vector<8x32xf32>
    %82 = vector.extract_strided_slice %5 {offsets = [16, 0], sizes = [8, 32], strides = [1, 1]} : vector<64x32xf32> to vector<8x32xf32>
    %83 = arith.addf %82, %77 : vector<8x32xf32>
    %84 = arith.negf %83 : vector<8x32xf32>
    %85 = math.exp %84 : vector<8x32xf32>
    %cst_39 = arith.constant 1.000000e+00 : f32
    %86 = vector.broadcast %cst_39 : f32 to vector<8x32xf32>
    %87 = arith.addf %86, %85 : vector<8x32xf32>
    %88 = arith.divf %86, %87 : vector<8x32xf32>
    %89 = vector.extract_strided_slice %10 {offsets = [16, 0], sizes = [8, 32], strides = [1, 1]} : vector<64x32xf32> to vector<8x32xf32>
    %90 = arith.addf %89, %78 : vector<8x32xf32>
    %91 = arith.negf %90 : vector<8x32xf32>
    %92 = math.exp %91 : vector<8x32xf32>
    %cst_40 = arith.constant 1.000000e+00 : f32
    %93 = vector.broadcast %cst_40 : f32 to vector<8x32xf32>
    %94 = arith.addf %93, %92 : vector<8x32xf32>
    %95 = arith.divf %93, %94 : vector<8x32xf32>
    %96 = vector.extract_strided_slice %15 {offsets = [16, 0], sizes = [8, 32], strides = [1, 1]} : vector<64x32xf32> to vector<8x32xf32>
    %97 = arith.mulf %88, %81 : vector<8x32xf32>
    %98 = arith.addf %96, %97 : vector<8x32xf32>
    %99 = math.tanh %98 : vector<8x32xf32>
    %cst_41 = arith.constant 1.000000e+00 : f32
    %100 = vector.broadcast %cst_41 : f32 to vector<8x32xf32>
    %101 = arith.subf %100, %95 : vector<8x32xf32>
    %102 = arith.mulf %101, %99 : vector<8x32xf32>
    %103 = arith.mulf %95, %76 : vector<8x32xf32>
    %104 = arith.addf %102, %103 : vector<8x32xf32>
    %cst_42 = arith.constant dense<0.000000e+00> : vector<8x32xf32>
    %105 = tpu.matmul %104, %16, %cst_42 {dimension_numbers = #tpu.dot_dimension_numbers<[1], [0], [0], [1], [0, 0, 1, 1], [], []>} : vector<8x32xf32>, vector<32x32xf32>, vector<8x32xf32> -> vector<8x32xf32>
    %cst_43 = arith.constant dense<0.000000e+00> : vector<8x32xf32>
    %106 = tpu.matmul %104, %17, %cst_43 {dimension_numbers = #tpu.dot_dimension_numbers<[1], [0], [0], [1], [0, 0, 1, 1], [], []>} : vector<8x32xf32>, vector<32x32xf32>, vector<8x32xf32> -> vector<8x32xf32>
    %cst_44 = arith.constant dense<0.000000e+00> : vector<8x32xf32>
    %107 = tpu.matmul %104, %18, %cst_44 {dimension_numbers = #tpu.dot_dimension_numbers<[1], [0], [0], [1], [0, 0, 1, 1], [], []>} : vector<8x32xf32>, vector<32x32xf32>, vector<8x32xf32> -> vector<8x32xf32>
    %108 = vector.broadcast %19 : vector<1x32xf32> to vector<8x32xf32>
    %109 = arith.addf %107, %108 : vector<8x32xf32>
    %110 = vector.extract_strided_slice %5 {offsets = [24, 0], sizes = [8, 32], strides = [1, 1]} : vector<64x32xf32> to vector<8x32xf32>
    %111 = arith.addf %110, %105 : vector<8x32xf32>
    %112 = arith.negf %111 : vector<8x32xf32>
    %113 = math.exp %112 : vector<8x32xf32>
    %cst_45 = arith.constant 1.000000e+00 : f32
    %114 = vector.broadcast %cst_45 : f32 to vector<8x32xf32>
    %115 = arith.addf %114, %113 : vector<8x32xf32>
    %116 = arith.divf %114, %115 : vector<8x32xf32>
    %117 = vector.extract_strided_slice %10 {offsets = [24, 0], sizes = [8, 32], strides = [1, 1]} : vector<64x32xf32> to vector<8x32xf32>
    %118 = arith.addf %117, %106 : vector<8x32xf32>
    %119 = arith.negf %118 : vector<8x32xf32>
    %120 = math.exp %119 : vector<8x32xf32>
    %cst_46 = arith.constant 1.000000e+00 : f32
    %121 = vector.broadcast %cst_46 : f32 to vector<8x32xf32>
    %122 = arith.addf %121, %120 : vector<8x32xf32>
    %123 = arith.divf %121, %122 : vector<8x32xf32>
    %124 = vector.extract_strided_slice %15 {offsets = [24, 0], sizes = [8, 32], strides = [1, 1]} : vector<64x32xf32> to vector<8x32xf32>
    %125 = arith.mulf %116, %109 : vector<8x32xf32>
    %126 = arith.addf %124, %125 : vector<8x32xf32>
    %127 = math.tanh %126 : vector<8x32xf32>
    %cst_47 = arith.constant 1.000000e+00 : f32
    %128 = vector.broadcast %cst_47 : f32 to vector<8x32xf32>
    %129 = arith.subf %128, %123 : vector<8x32xf32>
    %130 = arith.mulf %129, %127 : vector<8x32xf32>
    %131 = arith.mulf %123, %104 : vector<8x32xf32>
    %132 = arith.addf %130, %131 : vector<8x32xf32>
    %cst_48 = arith.constant dense<0.000000e+00> : vector<8x32xf32>
    %133 = tpu.matmul %132, %16, %cst_48 {dimension_numbers = #tpu.dot_dimension_numbers<[1], [0], [0], [1], [0, 0, 1, 1], [], []>} : vector<8x32xf32>, vector<32x32xf32>, vector<8x32xf32> -> vector<8x32xf32>
    %cst_49 = arith.constant dense<0.000000e+00> : vector<8x32xf32>
    %134 = tpu.matmul %132, %17, %cst_49 {dimension_numbers = #tpu.dot_dimension_numbers<[1], [0], [0], [1], [0, 0, 1, 1], [], []>} : vector<8x32xf32>, vector<32x32xf32>, vector<8x32xf32> -> vector<8x32xf32>
    %cst_50 = arith.constant dense<0.000000e+00> : vector<8x32xf32>
    %135 = tpu.matmul %132, %18, %cst_50 {dimension_numbers = #tpu.dot_dimension_numbers<[1], [0], [0], [1], [0, 0, 1, 1], [], []>} : vector<8x32xf32>, vector<32x32xf32>, vector<8x32xf32> -> vector<8x32xf32>
    %136 = vector.broadcast %19 : vector<1x32xf32> to vector<8x32xf32>
    %137 = arith.addf %135, %136 : vector<8x32xf32>
    %138 = vector.extract_strided_slice %5 {offsets = [32, 0], sizes = [8, 32], strides = [1, 1]} : vector<64x32xf32> to vector<8x32xf32>
    %139 = arith.addf %138, %133 : vector<8x32xf32>
    %140 = arith.negf %139 : vector<8x32xf32>
    %141 = math.exp %140 : vector<8x32xf32>
    %cst_51 = arith.constant 1.000000e+00 : f32
    %142 = vector.broadcast %cst_51 : f32 to vector<8x32xf32>
    %143 = arith.addf %142, %141 : vector<8x32xf32>
    %144 = arith.divf %142, %143 : vector<8x32xf32>
    %145 = vector.extract_strided_slice %10 {offsets = [32, 0], sizes = [8, 32], strides = [1, 1]} : vector<64x32xf32> to vector<8x32xf32>
    %146 = arith.addf %145, %134 : vector<8x32xf32>
    %147 = arith.negf %146 : vector<8x32xf32>
    %148 = math.exp %147 : vector<8x32xf32>
    %cst_52 = arith.constant 1.000000e+00 : f32
    %149 = vector.broadcast %cst_52 : f32 to vector<8x32xf32>
    %150 = arith.addf %149, %148 : vector<8x32xf32>
    %151 = arith.divf %149, %150 : vector<8x32xf32>
    %152 = vector.extract_strided_slice %15 {offsets = [32, 0], sizes = [8, 32], strides = [1, 1]} : vector<64x32xf32> to vector<8x32xf32>
    %153 = arith.mulf %144, %137 : vector<8x32xf32>
    %154 = arith.addf %152, %153 : vector<8x32xf32>
    %155 = math.tanh %154 : vector<8x32xf32>
    %cst_53 = arith.constant 1.000000e+00 : f32
    %156 = vector.broadcast %cst_53 : f32 to vector<8x32xf32>
    %157 = arith.subf %156, %151 : vector<8x32xf32>
    %158 = arith.mulf %157, %155 : vector<8x32xf32>
    %159 = arith.mulf %151, %132 : vector<8x32xf32>
    %160 = arith.addf %158, %159 : vector<8x32xf32>
    %cst_54 = arith.constant dense<0.000000e+00> : vector<8x32xf32>
    %161 = tpu.matmul %160, %16, %cst_54 {dimension_numbers = #tpu.dot_dimension_numbers<[1], [0], [0], [1], [0, 0, 1, 1], [], []>} : vector<8x32xf32>, vector<32x32xf32>, vector<8x32xf32> -> vector<8x32xf32>
    %cst_55 = arith.constant dense<0.000000e+00> : vector<8x32xf32>
    %162 = tpu.matmul %160, %17, %cst_55 {dimension_numbers = #tpu.dot_dimension_numbers<[1], [0], [0], [1], [0, 0, 1, 1], [], []>} : vector<8x32xf32>, vector<32x32xf32>, vector<8x32xf32> -> vector<8x32xf32>
    %cst_56 = arith.constant dense<0.000000e+00> : vector<8x32xf32>
    %163 = tpu.matmul %160, %18, %cst_56 {dimension_numbers = #tpu.dot_dimension_numbers<[1], [0], [0], [1], [0, 0, 1, 1], [], []>} : vector<8x32xf32>, vector<32x32xf32>, vector<8x32xf32> -> vector<8x32xf32>
    %164 = vector.broadcast %19 : vector<1x32xf32> to vector<8x32xf32>
    %165 = arith.addf %163, %164 : vector<8x32xf32>
    %166 = vector.extract_strided_slice %5 {offsets = [40, 0], sizes = [8, 32], strides = [1, 1]} : vector<64x32xf32> to vector<8x32xf32>
    %167 = arith.addf %166, %161 : vector<8x32xf32>
    %168 = arith.negf %167 : vector<8x32xf32>
    %169 = math.exp %168 : vector<8x32xf32>
    %cst_57 = arith.constant 1.000000e+00 : f32
    %170 = vector.broadcast %cst_57 : f32 to vector<8x32xf32>
    %171 = arith.addf %170, %169 : vector<8x32xf32>
    %172 = arith.divf %170, %171 : vector<8x32xf32>
    %173 = vector.extract_strided_slice %10 {offsets = [40, 0], sizes = [8, 32], strides = [1, 1]} : vector<64x32xf32> to vector<8x32xf32>
    %174 = arith.addf %173, %162 : vector<8x32xf32>
    %175 = arith.negf %174 : vector<8x32xf32>
    %176 = math.exp %175 : vector<8x32xf32>
    %cst_58 = arith.constant 1.000000e+00 : f32
    %177 = vector.broadcast %cst_58 : f32 to vector<8x32xf32>
    %178 = arith.addf %177, %176 : vector<8x32xf32>
    %179 = arith.divf %177, %178 : vector<8x32xf32>
    %180 = vector.extract_strided_slice %15 {offsets = [40, 0], sizes = [8, 32], strides = [1, 1]} : vector<64x32xf32> to vector<8x32xf32>
    %181 = arith.mulf %172, %165 : vector<8x32xf32>
    %182 = arith.addf %180, %181 : vector<8x32xf32>
    %183 = math.tanh %182 : vector<8x32xf32>
    %cst_59 = arith.constant 1.000000e+00 : f32
    %184 = vector.broadcast %cst_59 : f32 to vector<8x32xf32>
    %185 = arith.subf %184, %179 : vector<8x32xf32>
    %186 = arith.mulf %185, %183 : vector<8x32xf32>
    %187 = arith.mulf %179, %160 : vector<8x32xf32>
    %188 = arith.addf %186, %187 : vector<8x32xf32>
    %cst_60 = arith.constant dense<0.000000e+00> : vector<8x32xf32>
    %189 = tpu.matmul %188, %16, %cst_60 {dimension_numbers = #tpu.dot_dimension_numbers<[1], [0], [0], [1], [0, 0, 1, 1], [], []>} : vector<8x32xf32>, vector<32x32xf32>, vector<8x32xf32> -> vector<8x32xf32>
    %cst_61 = arith.constant dense<0.000000e+00> : vector<8x32xf32>
    %190 = tpu.matmul %188, %17, %cst_61 {dimension_numbers = #tpu.dot_dimension_numbers<[1], [0], [0], [1], [0, 0, 1, 1], [], []>} : vector<8x32xf32>, vector<32x32xf32>, vector<8x32xf32> -> vector<8x32xf32>
    %cst_62 = arith.constant dense<0.000000e+00> : vector<8x32xf32>
    %191 = tpu.matmul %188, %18, %cst_62 {dimension_numbers = #tpu.dot_dimension_numbers<[1], [0], [0], [1], [0, 0, 1, 1], [], []>} : vector<8x32xf32>, vector<32x32xf32>, vector<8x32xf32> -> vector<8x32xf32>
    %192 = vector.broadcast %19 : vector<1x32xf32> to vector<8x32xf32>
    %193 = arith.addf %191, %192 : vector<8x32xf32>
    %194 = vector.extract_strided_slice %5 {offsets = [48, 0], sizes = [8, 32], strides = [1, 1]} : vector<64x32xf32> to vector<8x32xf32>
    %195 = arith.addf %194, %189 : vector<8x32xf32>
    %196 = arith.negf %195 : vector<8x32xf32>
    %197 = math.exp %196 : vector<8x32xf32>
    %cst_63 = arith.constant 1.000000e+00 : f32
    %198 = vector.broadcast %cst_63 : f32 to vector<8x32xf32>
    %199 = arith.addf %198, %197 : vector<8x32xf32>
    %200 = arith.divf %198, %199 : vector<8x32xf32>
    %201 = vector.extract_strided_slice %10 {offsets = [48, 0], sizes = [8, 32], strides = [1, 1]} : vector<64x32xf32> to vector<8x32xf32>
    %202 = arith.addf %201, %190 : vector<8x32xf32>
    %203 = arith.negf %202 : vector<8x32xf32>
    %204 = math.exp %203 : vector<8x32xf32>
    %cst_64 = arith.constant 1.000000e+00 : f32
    %205 = vector.broadcast %cst_64 : f32 to vector<8x32xf32>
    %206 = arith.addf %205, %204 : vector<8x32xf32>
    %207 = arith.divf %205, %206 : vector<8x32xf32>
    %208 = vector.extract_strided_slice %15 {offsets = [48, 0], sizes = [8, 32], strides = [1, 1]} : vector<64x32xf32> to vector<8x32xf32>
    %209 = arith.mulf %200, %193 : vector<8x32xf32>
    %210 = arith.addf %208, %209 : vector<8x32xf32>
    %211 = math.tanh %210 : vector<8x32xf32>
    %cst_65 = arith.constant 1.000000e+00 : f32
    %212 = vector.broadcast %cst_65 : f32 to vector<8x32xf32>
    %213 = arith.subf %212, %207 : vector<8x32xf32>
    %214 = arith.mulf %213, %211 : vector<8x32xf32>
    %215 = arith.mulf %207, %188 : vector<8x32xf32>
    %216 = arith.addf %214, %215 : vector<8x32xf32>
    %cst_66 = arith.constant dense<0.000000e+00> : vector<8x32xf32>
    %217 = tpu.matmul %216, %16, %cst_66 {dimension_numbers = #tpu.dot_dimension_numbers<[1], [0], [0], [1], [0, 0, 1, 1], [], []>} : vector<8x32xf32>, vector<32x32xf32>, vector<8x32xf32> -> vector<8x32xf32>
    %cst_67 = arith.constant dense<0.000000e+00> : vector<8x32xf32>
    %218 = tpu.matmul %216, %17, %cst_67 {dimension_numbers = #tpu.dot_dimension_numbers<[1], [0], [0], [1], [0, 0, 1, 1], [], []>} : vector<8x32xf32>, vector<32x32xf32>, vector<8x32xf32> -> vector<8x32xf32>
    %cst_68 = arith.constant dense<0.000000e+00> : vector<8x32xf32>
    %219 = tpu.matmul %216, %18, %cst_68 {dimension_numbers = #tpu.dot_dimension_numbers<[1], [0], [0], [1], [0, 0, 1, 1], [], []>} : vector<8x32xf32>, vector<32x32xf32>, vector<8x32xf32> -> vector<8x32xf32>
    %220 = vector.broadcast %19 : vector<1x32xf32> to vector<8x32xf32>
    %221 = arith.addf %219, %220 : vector<8x32xf32>
    %222 = vector.extract_strided_slice %5 {offsets = [56, 0], sizes = [8, 32], strides = [1, 1]} : vector<64x32xf32> to vector<8x32xf32>
    %223 = arith.addf %222, %217 : vector<8x32xf32>
    %224 = arith.negf %223 : vector<8x32xf32>
    %225 = math.exp %224 : vector<8x32xf32>
    %cst_69 = arith.constant 1.000000e+00 : f32
    %226 = vector.broadcast %cst_69 : f32 to vector<8x32xf32>
    %227 = arith.addf %226, %225 : vector<8x32xf32>
    %228 = arith.divf %226, %227 : vector<8x32xf32>
    %229 = vector.extract_strided_slice %10 {offsets = [56, 0], sizes = [8, 32], strides = [1, 1]} : vector<64x32xf32> to vector<8x32xf32>
    %230 = arith.addf %229, %218 : vector<8x32xf32>
    %231 = arith.negf %230 : vector<8x32xf32>
    %232 = math.exp %231 : vector<8x32xf32>
    %cst_70 = arith.constant 1.000000e+00 : f32
    %233 = vector.broadcast %cst_70 : f32 to vector<8x32xf32>
    %234 = arith.addf %233, %232 : vector<8x32xf32>
    %235 = arith.divf %233, %234 : vector<8x32xf32>
    %236 = vector.extract_strided_slice %15 {offsets = [56, 0], sizes = [8, 32], strides = [1, 1]} : vector<64x32xf32> to vector<8x32xf32>
    %237 = arith.mulf %228, %221 : vector<8x32xf32>
    %238 = arith.addf %236, %237 : vector<8x32xf32>
    %239 = math.tanh %238 : vector<8x32xf32>
    %cst_71 = arith.constant 1.000000e+00 : f32
    %240 = vector.broadcast %cst_71 : f32 to vector<8x32xf32>
    %241 = arith.subf %240, %235 : vector<8x32xf32>
    %242 = arith.mulf %241, %239 : vector<8x32xf32>
    %243 = arith.mulf %235, %216 : vector<8x32xf32>
    %244 = arith.addf %242, %243 : vector<8x32xf32>
    %c0_72 = arith.constant 0 : index
    %c0_73 = arith.constant 0 : index
    %c0_74 = arith.constant 0 : index
    %245 = vector.load %arg2[%c0_72, %c0_73, %c0_74] : memref<8x16x32xf32, #tpu.memory_space<vmem>>, vector<8x16x32xf32>
    %246 = vector.shape_cast %245 : vector<8x16x32xf32> to vector<128x32xf32>
    %c0_75 = arith.constant 0 : index
    %c0_76 = arith.constant 0 : index
    %247 = vector.load %arg13[%c0_75, %c0_76] : memref<32x32xf32, #tpu.memory_space<vmem>>, vector<32x32xf32>
    %cst_77 = arith.constant dense<0.000000e+00> : vector<128x32xf32>
    %248 = tpu.matmul %246, %247, %cst_77 {dimension_numbers = #tpu.dot_dimension_numbers<[1], [0], [0], [1], [0, 0, 1, 1], [], []>} : vector<128x32xf32>, vector<32x32xf32>, vector<128x32xf32> -> vector<128x32xf32>
    %c0_78 = arith.constant 0 : index
    %c0_79 = arith.constant 0 : index
    %249 = vector.load %arg14[%c0_78, %c0_79] : memref<32x32xf32, #tpu.memory_space<vmem>>, vector<32x32xf32>
    %cst_80 = arith.constant dense<0.000000e+00> : vector<8x32xf32>
    %250 = tpu.matmul %244, %249, %cst_80 {dimension_numbers = #tpu.dot_dimension_numbers<[1], [0], [0], [1], [0, 0, 1, 1], [], []>} : vector<8x32xf32>, vector<32x32xf32>, vector<8x32xf32> -> vector<8x32xf32>
    %251 = vector.shape_cast %248 : vector<128x32xf32> to vector<8x16x32xf32>
    %252 = vector.shape_cast %250 : vector<8x32xf32> to vector<8x1x32xf32>
    %253 = vector.broadcast %252 : vector<8x1x32xf32> to vector<8x16x32xf32>
    %254 = arith.addf %251, %253 : vector<8x16x32xf32>
    %c0_81 = arith.constant 0 : index
    %c0_82 = arith.constant 0 : index
    %255 = vector.load %arg15[%c0_81, %c0_82] : memref<1x32xf32, #tpu.memory_space<vmem>>, vector<1x32xf32>
    %256 = vector.shape_cast %255 : vector<1x32xf32> to vector<1x1x32xf32>
    %257 = vector.broadcast %256 : vector<1x1x32xf32> to vector<8x16x32xf32>
    %258 = arith.addf %254, %257 : vector<8x16x32xf32>
    %cst_83 = arith.constant 0.000000e+00 : f32
    %259 = vector.broadcast %cst_83 : f32 to vector<8x16x32xf32>
    %260 = arith.maximumf %258, %259 : vector<8x16x32xf32>
    %c0_84 = arith.constant 0 : index
    %c0_85 = arith.constant 0 : index
    %261 = vector.load %arg16[%c0_84, %c0_85] : memref<1x32xf32, #tpu.memory_space<vmem>>, vector<1x32xf32>
    %262 = vector.shape_cast %261 : vector<1x32xf32> to vector<1x1x32xf32>
    %263 = vector.broadcast %262 : vector<1x1x32xf32> to vector<8x16x32xf32>
    %264 = arith.mulf %260, %263 : vector<8x16x32xf32>
    %cst_86 = arith.constant dense<0.000000e+00> : vector<8x16xf32>
    %265 = vector.multi_reduction <add>, %264, %cst_86 [2] : vector<8x16x32xf32> to vector<8x16xf32>
    %cst_87 = arith.constant dense<0xFF800000> : vector<8xf32>
    %266 = vector.multi_reduction <maximumf>, %265, %cst_87 [1] : vector<8x16xf32> to vector<8xf32>
    %267 = vector.shape_cast %266 : vector<8xf32> to vector<8x1xf32>
    %268 = vector.broadcast %267 : vector<8x1xf32> to vector<8x16xf32>
    %269 = arith.subf %265, %268 : vector<8x16xf32>
    %270 = math.exp %269 : vector<8x16xf32>
    %cst_88 = arith.constant dense<0.000000e+00> : vector<8xf32>
    %271 = vector.multi_reduction <add>, %270, %cst_88 [1] : vector<8x16xf32> to vector<8xf32>
    %272 = vector.shape_cast %271 : vector<8xf32> to vector<8x1xf32>
    %273 = vector.broadcast %272 : vector<8x1xf32> to vector<8x16xf32>
    %274 = arith.divf %270, %273 : vector<8x16xf32>
    %275 = vector.shape_cast %274 : vector<8x16xf32> to vector<8x16x1xf32>
    %276 = vector.broadcast %275 : vector<8x16x1xf32> to vector<8x16x32xf32>
    %277 = arith.mulf %276, %245 : vector<8x16x32xf32>
    %cst_89 = arith.constant dense<0.000000e+00> : vector<8x32xf32>
    %278 = vector.multi_reduction <add>, %277, %cst_89 [1] : vector<8x16x32xf32> to vector<8x32xf32>
    %c0_90 = arith.constant 0 : index
    %c0_91 = arith.constant 0 : index
    %279 = vector.load %arg17[%c0_90, %c0_91] : memref<32x48xf32, #tpu.memory_space<vmem>>, vector<32x48xf32>
    %cst_92 = arith.constant dense<0.000000e+00> : vector<8x48xf32>
    %280 = tpu.matmul %244, %279, %cst_92 {dimension_numbers = #tpu.dot_dimension_numbers<[1], [0], [0], [1], [0, 0, 1, 1], [], []>} : vector<8x32xf32>, vector<32x48xf32>, vector<8x48xf32> -> vector<8x48xf32>
    %c0_93 = arith.constant 0 : index
    %c0_94 = arith.constant 0 : index
    %281 = vector.load %arg18[%c0_93, %c0_94] : memref<1x48xf32, #tpu.memory_space<vmem>>, vector<1x48xf32>
    %282 = vector.broadcast %281 : vector<1x48xf32> to vector<8x48xf32>
    %283 = arith.addf %280, %282 : vector<8x48xf32>
    %284 = vector.extract_strided_slice %283 {offsets = [0, 0], sizes = [8, 32], strides = [1, 1]} : vector<8x48xf32> to vector<8x32xf32>
    %cst_95 = arith.constant 0.000000e+00 : f32
    %285 = vector.broadcast %cst_95 : f32 to vector<8x32xf32>
    %286 = arith.maximumf %284, %285 : vector<8x32xf32>
    %287 = vector.extract_strided_slice %283 {offsets = [0, 32], sizes = [8, 16], strides = [1, 1]} : vector<8x48xf32> to vector<8x16xf32>
    %288 = arith.negf %287 : vector<8x16xf32>
    %289 = math.exp %288 : vector<8x16xf32>
    %cst_96 = arith.constant 1.000000e+00 : f32
    %290 = vector.broadcast %cst_96 : f32 to vector<8x16xf32>
    %291 = arith.addf %290, %289 : vector<8x16xf32>
    %292 = arith.divf %290, %291 : vector<8x16xf32>
    %c0_97 = arith.constant 0 : index
    %c0_98 = arith.constant 0 : index
    %293 = vector.load %arg19[%c0_97, %c0_98] : memref<32x32xf32, #tpu.memory_space<vmem>>, vector<32x32xf32>
    %cst_99 = arith.constant dense<0.000000e+00> : vector<8x32xf32>
    %294 = tpu.matmul %278, %293, %cst_99 {dimension_numbers = #tpu.dot_dimension_numbers<[1], [0], [0], [1], [0, 0, 1, 1], [], []>} : vector<8x32xf32>, vector<32x32xf32>, vector<8x32xf32> -> vector<8x32xf32>
    %c0_100 = arith.constant 0 : index
    %c0_101 = arith.constant 0 : index
    %295 = vector.load %arg20[%c0_100, %c0_101] : memref<1x32xf32, #tpu.memory_space<vmem>>, vector<1x32xf32>
    %296 = vector.broadcast %295 : vector<1x32xf32> to vector<8x32xf32>
    %297 = arith.addf %294, %296 : vector<8x32xf32>
    %cst_102 = arith.constant 0.000000e+00 : f32
    %298 = vector.broadcast %cst_102 : f32 to vector<8x32xf32>
    %299 = arith.maximumf %297, %298 : vector<8x32xf32>
    %300 = arith.mulf %286, %299 : vector<8x32xf32>
    %c0_103 = arith.constant 0 : index
    %c0_104 = arith.constant 0 : index
    %301 = vector.load %arg21[%c0_103, %c0_104] : memref<32x64xf32, #tpu.memory_space<vmem>>, vector<32x64xf32>
    %cst_105 = arith.constant dense<0.000000e+00> : vector<8x64xf32>
    %302 = tpu.matmul %300, %301, %cst_105 {dimension_numbers = #tpu.dot_dimension_numbers<[1], [0], [0], [1], [0, 0, 1, 1], [], []>} : vector<8x32xf32>, vector<32x64xf32>, vector<8x64xf32> -> vector<8x64xf32>
    %c0_106 = arith.constant 0 : index
    %c0_107 = arith.constant 0 : index
    %303 = vector.load %arg22[%c0_106, %c0_107] : memref<1x64xf32, #tpu.memory_space<vmem>>, vector<1x64xf32>
    %304 = vector.broadcast %303 : vector<1x64xf32> to vector<8x64xf32>
    %305 = arith.addf %302, %304 : vector<8x64xf32>
    %cst_108 = arith.constant 0.000000e+00 : f32
    %306 = vector.broadcast %cst_108 : f32 to vector<8x64xf32>
    %307 = arith.maximumf %305, %306 : vector<8x64xf32>
    %c0_109 = arith.constant 0 : index
    %c0_110 = arith.constant 0 : index
    %308 = vector.load %arg23[%c0_109, %c0_110] : memref<64x16xf32, #tpu.memory_space<vmem>>, vector<64x16xf32>
    %cst_111 = arith.constant dense<0.000000e+00> : vector<8x16xf32>
    %309 = tpu.matmul %307, %308, %cst_111 {dimension_numbers = #tpu.dot_dimension_numbers<[1], [0], [0], [1], [0, 0, 1, 1], [], []>} : vector<8x64xf32>, vector<64x16xf32>, vector<8x16xf32> -> vector<8x16xf32>
    %c0_112 = arith.constant 0 : index
    %c0_113 = arith.constant 0 : index
    %310 = vector.load %arg24[%c0_112, %c0_113] : memref<1x16xf32, #tpu.memory_space<vmem>>, vector<1x16xf32>
    %311 = vector.broadcast %310 : vector<1x16xf32> to vector<8x16xf32>
    %312 = arith.addf %309, %311 : vector<8x16xf32>
    %313 = arith.mulf %312, %292 : vector<8x16xf32>
    %cst_114 = arith.constant 0.000000e+00 : f32
    %314 = vector.broadcast %cst_114 : f32 to vector<8x64xf32>
    %315 = tpu.concatenate %313, %292, %300, %314 in 1 : vector<8x16xf32>, vector<8x16xf32>, vector<8x32xf32>, vector<8x64xf32> -> vector<8x128xf32>
    %c0_115 = arith.constant 0 : index
    %c0_116 = arith.constant 0 : index
    %316 = vector.load %arg25[%c0_115, %c0_116] : memref<8x128xf32, #tpu.memory_space<vmem>>, vector<8x128xf32>
    tpu.vector_store %arg25[%c0_115, %c0_116], %315 {strides = array<i32>} : memref<8x128xf32, #tpu.memory_space<vmem>>, vector<8x128xf32>,
    return
  }
  func.func @transform_0(%arg0: i32) -> (i32, i32) {
    %c0_i32 = arith.constant 0 : i32
    %c0_i32_0 = arith.constant 0 : i32
    %c0_i32_1 = arith.constant 0 : i32
    return %c0_i32, %c0_i32_0 : i32, i32
  }
  func.func @transform_1(%arg0: i32) -> (i32, i32, i32) {
    %c0_i32 = arith.constant 0 : i32
    %c0_i32_0 = arith.constant 0 : i32
    %c0_i32_1 = arith.constant 0 : i32
    %c0_i32_2 = arith.constant 0 : i32
    return %c0_i32, %c0_i32_0, %c0_i32_1 : i32, i32, i32
  }
  func.func @transform_2(%arg0: i32) -> (i32, i32) {
    %c0_i32 = arith.constant 0 : i32
    %c0_i32_0 = arith.constant 0 : i32
    %c0_i32_1 = arith.constant 0 : i32
    return %c0_i32, %c0_i32_0 : i32, i32
  }
  func.func @transform_3(%arg0: i32) -> (i32, i32) {
    %c0_i32 = arith.constant 0 : i32
    %c0_i32_0 = arith.constant 0 : i32
    %c0_i32_1 = arith.constant 0 : i32
    return %c0_i32, %c0_i32_0 : i32, i32
  }
  func.func @transform_4(%arg0: i32) -> (i32, i32) {
    %c0_i32 = arith.constant 0 : i32
    %c0_i32_0 = arith.constant 0 : i32
    %c0_i32_1 = arith.constant 0 : i32
    return %c0_i32, %c0_i32_0 : i32, i32
  }
  func.func @transform_5(%arg0: i32) -> (i32, i32) {
    %c0_i32 = arith.constant 0 : i32
    %c0_i32_0 = arith.constant 0 : i32
    %c0_i32_1 = arith.constant 0 : i32
    return %c0_i32, %c0_i32_0 : i32, i32
  }
  func.func @transform_6(%arg0: i32) -> (i32, i32) {
    %c0_i32 = arith.constant 0 : i32
    %c0_i32_0 = arith.constant 0 : i32
    %c0_i32_1 = arith.constant 0 : i32
    return %c0_i32, %c0_i32_0 : i32, i32
  }
  func.func @transform_7(%arg0: i32) -> (i32, i32) {
    %c0_i32 = arith.constant 0 : i32
    %c0_i32_0 = arith.constant 0 : i32
    %c0_i32_1 = arith.constant 0 : i32
    return %c0_i32, %c0_i32_0 : i32, i32
  }
  func.func @transform_8(%arg0: i32) -> (i32, i32) {
    %c0_i32 = arith.constant 0 : i32
    %c0_i32_0 = arith.constant 0 : i32
    %c0_i32_1 = arith.constant 0 : i32
    return %c0_i32, %c0_i32_0 : i32, i32
  }
  func.func @transform_9(%arg0: i32) -> (i32, i32) {
    %c0_i32 = arith.constant 0 : i32
    %c0_i32_0 = arith.constant 0 : i32
    %c0_i32_1 = arith.constant 0 : i32
    return %c0_i32, %c0_i32_0 : i32, i32
  }
  func.func @transform_10(%arg0: i32) -> (i32, i32) {
    %c0_i32 = arith.constant 0 : i32
    %c0_i32_0 = arith.constant 0 : i32
    %c0_i32_1 = arith.constant 0 : i32
    return %c0_i32, %c0_i32_0 : i32, i32
  }
  func.func @transform_11(%arg0: i32) -> (i32, i32) {
    %c0_i32 = arith.constant 0 : i32
    %c0_i32_0 = arith.constant 0 : i32
    %c0_i32_1 = arith.constant 0 : i32
    return %c0_i32, %c0_i32_0 : i32, i32
  }
  func.func @transform_12(%arg0: i32) -> (i32, i32) {
    %c0_i32 = arith.constant 0 : i32
    %c0_i32_0 = arith.constant 0 : i32
    %c0_i32_1 = arith.constant 0 : i32
    return %c0_i32, %c0_i32_0 : i32, i32
  }
  func.func @transform_13(%arg0: i32) -> (i32, i32) {
    %c0_i32 = arith.constant 0 : i32
    %c0_i32_0 = arith.constant 0 : i32
    %c0_i32_1 = arith.constant 0 : i32
    return %c0_i32, %c0_i32_0 : i32, i32
  }
  func.func @transform_14(%arg0: i32) -> (i32, i32) {
    %c0_i32 = arith.constant 0 : i32
    %c0_i32_0 = arith.constant 0 : i32
    %c0_i32_1 = arith.constant 0 : i32
    return %c0_i32, %c0_i32_0 : i32, i32
  }
  func.func @transform_15(%arg0: i32) -> (i32, i32) {
    %c0_i32 = arith.constant 0 : i32
    %c0_i32_0 = arith.constant 0 : i32
    %c0_i32_1 = arith.constant 0 : i32
    return %c0_i32, %c0_i32_0 : i32, i32
  }
  func.func @transform_16(%arg0: i32) -> (i32, i32) {
    %c0_i32 = arith.constant 0 : i32
    %c0_i32_0 = arith.constant 0 : i32
    %c0_i32_1 = arith.constant 0 : i32
    return %c0_i32, %c0_i32_0 : i32, i32
  }
  func.func @transform_17(%arg0: i32) -> (i32, i32) {
    %c0_i32 = arith.constant 0 : i32
    %c0_i32_0 = arith.constant 0 : i32
    %c0_i32_1 = arith.constant 0 : i32
    return %c0_i32, %c0_i32_0 : i32, i32
  }
  func.func @transform_18(%arg0: i32) -> (i32, i32) {
    %c0_i32 = arith.constant 0 : i32
    %c0_i32_0 = arith.constant 0 : i32
    %c0_i32_1 = arith.constant 0 : i32
    return %c0_i32, %c0_i32_0 : i32, i32
  }
  func.func @transform_19(%arg0: i32) -> (i32, i32) {
    %c0_i32 = arith.constant 0 : i32
    %c0_i32_0 = arith.constant 0 : i32
    %c0_i32_1 = arith.constant 0 : i32
    return %c0_i32, %c0_i32_0 : i32, i32
  }
  func.func @transform_20(%arg0: i32) -> (i32, i32) {
    %c0_i32 = arith.constant 0 : i32
    %c0_i32_0 = arith.constant 0 : i32
    %c0_i32_1 = arith.constant 0 : i32
    return %c0_i32, %c0_i32_0 : i32, i32
  }
  func.func @transform_21(%arg0: i32) -> (i32, i32) {
    %c0_i32 = arith.constant 0 : i32
    %c0_i32_0 = arith.constant 0 : i32
    %c0_i32_1 = arith.constant 0 : i32
    return %c0_i32, %c0_i32_0 : i32, i32
  }
  func.func @transform_22(%arg0: i32) -> (i32, i32) {
    %c0_i32 = arith.constant 0 : i32
    %c0_i32_0 = arith.constant 0 : i32
    %c0_i32_1 = arith.constant 0 : i32
    return %c0_i32, %c0_i32_0 : i32, i32
  }
  func.func @transform_23(%arg0: i32) -> (i32, i32) {
    %c0_i32 = arith.constant 0 : i32
    %c0_i32_0 = arith.constant 0 : i32
    %c0_i32_1 = arith.constant 0 : i32
    return %c0_i32, %c0_i32_0 : i32, i32
  }
  func.func @transform_24(%arg0: i32) -> (i32, i32) {
    %c0_i32 = arith.constant 0 : i32
    %c0_i32_0 = arith.constant 0 : i32
    %c0_i32_1 = arith.constant 0 : i32
    return %c0_i32, %c0_i32_0 : i32, i32
  }
}

</mosaic_0001>

<llo_original>
// kernel: base_model_forward.1
$region0: #{base_model_forward.1}
  #allocation0 [shape = 'u32[]', space=smem, size = 0x4, offset = 0x4, fixed_abs, tag = 'smem constant byte address 0x4 - core index']
  #allocation1 [shape = 'u32[144,128]{1,0:T(1,128)}', space=vmem, size = 0x12000, scoped, tag = 'internal scratch']
  %s0 = inlined_call_operand.vmem [shape: f32[64,32], index: 0, kind: input, shape index: {}]
  %s1 = inlined_call_operand.vmem [shape: f32[8,16,32], index: 1, kind: input, shape index: {}]
  %s2 = inlined_call_operand.vmem [shape: f32[32,32], index: 2, kind: input, shape index: {}]
  %s3 = inlined_call_operand.vmem [shape: f32[32,32], index: 3, kind: input, shape index: {}]
  %s4 = inlined_call_operand.vmem [shape: f32[32,32], index: 4, kind: input, shape index: {}]
  %s5 = inlined_call_operand.vmem [shape: f32[32,32], index: 5, kind: input, shape index: {}]
  %s6 = inlined_call_operand.vmem [shape: f32[32,32], index: 6, kind: input, shape index: {}]
  %s7 = inlined_call_operand.vmem [shape: f32[32,32], index: 7, kind: input, shape index: {}]
  %s8 = inlined_call_operand.vmem [shape: f32[1,32], index: 8, kind: input, shape index: {}]
  %s9 = inlined_call_operand.vmem [shape: f32[1,32], index: 9, kind: input, shape index: {}]
  %s10 = inlined_call_operand.vmem [shape: f32[1,32], index: 10, kind: input, shape index: {}]
  %s11 = inlined_call_operand.vmem [shape: f32[1,32], index: 11, kind: input, shape index: {}]
  %s12 = inlined_call_operand.vmem [shape: f32[32,32], index: 12, kind: input, shape index: {}]
  %s13 = inlined_call_operand.vmem [shape: f32[32,32], index: 13, kind: input, shape index: {}]
  %s14 = inlined_call_operand.vmem [shape: f32[1,32], index: 14, kind: input, shape index: {}]
  %s15 = inlined_call_operand.vmem [shape: f32[1,32], index: 15, kind: input, shape index: {}]
  %s16 = inlined_call_operand.vmem [shape: f32[32,48], index: 16, kind: input, shape index: {}]
  %s17 = inlined_call_operand.vmem [shape: f32[1,48], index: 17, kind: input, shape index: {}]
  %s18 = inlined_call_operand.vmem [shape: f32[32,32], index: 18, kind: input, shape index: {}]
  %s19 = inlined_call_operand.vmem [shape: f32[1,32], index: 19, kind: input, shape index: {}]
  %s20 = inlined_call_operand.vmem [shape: f32[32,64], index: 20, kind: input, shape index: {}]
  %s21 = inlined_call_operand.vmem [shape: f32[1,64], index: 21, kind: input, shape index: {}]
  %s22 = inlined_call_operand.vmem [shape: f32[64,16], index: 22, kind: input, shape index: {}]
  %s23 = inlined_call_operand.vmem [shape: f32[1,16], index: 23, kind: input, shape index: {}]
  %s24 = inlined_call_operand.vmem [shape: f32[8,128], index: 24, kind: output, shape index: {}]
  %s25 = sld [smem:[#allocation0]]
  $region106: #{base_model_forward.1} parent=0
    _
  %s27 = ssub.s32 1, %s25
  %s28 = scalar_select 0, %s27, %s25
  // Predicated region
  $region2: #{base_model_forward.1} parent=0 // pred_check
    _
  $region3: #{base_model_forward.1} parent=0 // pred_check_branch
    %30 = sbr.rel (0) target = $region5
  $region4: #{base_model_forward.1} parent=0 // pred_region
    _
  $region5: #{base_model_forward.1} parent=0 // pred_fallthru
    _
  // Predicated region
  $region6: #{base_model_forward.1} parent=0 // pred_check
    _
  $region7: #{base_model_forward.1} parent=0 // pred_check_branch
    %32 = sbr.rel (0) target = $region9
  $region8: #{base_model_forward.1} parent=0 // pred_region
    _
  $region9: #{base_model_forward.1} parent=0 // pred_fallthru
    _
  // Predicated region
  $region10: #{base_model_forward.1} parent=0 // pred_check
    _
  $region11: #{base_model_forward.1} parent=0 // pred_check_branch
    %34 = sbr.rel (0) target = $region13
  $region12: #{base_model_forward.1} parent=0 // pred_region
    _
  $region13: #{base_model_forward.1} parent=0 // pred_fallthru
    _
  // Predicated region
  $region14: #{base_model_forward.1} parent=0 // pred_check
    _
  $region15: #{base_model_forward.1} parent=0 // pred_check_branch
    %36 = sbr.rel (0) target = $region17
  $region16: #{base_model_forward.1} parent=0 // pred_region
    _
  $region17: #{base_model_forward.1} parent=0 // pred_fallthru
    _
  // Predicated region
  $region18: #{base_model_forward.1} parent=0 // pred_check
    _
  $region19: #{base_model_forward.1} parent=0 // pred_check_branch
    %38 = sbr.rel (0) target = $region21
  $region20: #{base_model_forward.1} parent=0 // pred_region
    _
  $region21: #{base_model_forward.1} parent=0 // pred_fallthru
    _
  // Predicated region
  $region22: #{base_model_forward.1} parent=0 // pred_check
    _
  $region23: #{base_model_forward.1} parent=0 // pred_check_branch
    %40 = sbr.rel (0) target = $region25
  $region24: #{base_model_forward.1} parent=0 // pred_region
    _
  $region25: #{base_model_forward.1} parent=0 // pred_fallthru
    _
  // Predicated region
  $region26: #{base_model_forward.1} parent=0 // pred_check
    _
  $region27: #{base_model_forward.1} parent=0 // pred_check_branch
    %42 = sbr.rel (0) target = $region29
  $region28: #{base_model_forward.1} parent=0 // pred_region
    _
  $region29: #{base_model_forward.1} parent=0 // pred_fallthru
    _
  // Predicated region
  $region30: #{base_model_forward.1} parent=0 // pred_check
    _
  $region31: #{base_model_forward.1} parent=0 // pred_check_branch
    %44 = sbr.rel (0) target = $region33
  $region32: #{base_model_forward.1} parent=0 // pred_region
    _
  $region33: #{base_model_forward.1} parent=0 // pred_fallthru
    _
  // Predicated region
  $region34: #{base_model_forward.1} parent=0 // pred_check
    _
  $region35: #{base_model_forward.1} parent=0 // pred_check_branch
    %46 = sbr.rel (0) target = $region37
  $region36: #{base_model_forward.1} parent=0 // pred_region
    _
  $region37: #{base_model_forward.1} parent=0 // pred_fallthru
    _
  // Predicated region
  $region38: #{base_model_forward.1} parent=0 // pred_check
    _
  $region39: #{base_model_forward.1} parent=0 // pred_check_branch
    %48 = sbr.rel (0) target = $region41
  $region40: #{base_model_forward.1} parent=0 // pred_region
    _
  $region41: #{base_model_forward.1} parent=0 // pred_fallthru
    _
  // Predicated region
  $region42: #{base_model_forward.1} parent=0 // pred_check
    _
  $region43: #{base_model_forward.1} parent=0 // pred_check_branch
    %50 = sbr.rel (0) target = $region45
  $region44: #{base_model_forward.1} parent=0 // pred_region
    _
  $region45: #{base_model_forward.1} parent=0 // pred_fallthru
    _
  // Predicated region
  $region46: #{base_model_forward.1} parent=0 // pred_check
    _
  $region47: #{base_model_forward.1} parent=0 // pred_check_branch
    %52 = sbr.rel (0) target = $region49
  $region48: #{base_model_forward.1} parent=0 // pred_region
    _
  $region49: #{base_model_forward.1} parent=0 // pred_fallthru
    _
  // Predicated region
  $region50: #{base_model_forward.1} parent=0 // pred_check
    _
  $region51: #{base_model_forward.1} parent=0 // pred_check_branch
    %54 = sbr.rel (0) target = $region53
  $region52: #{base_model_forward.1} parent=0 // pred_region
    _
  $region53: #{base_model_forward.1} parent=0 // pred_fallthru
    _
  // Predicated region
  $region54: #{base_model_forward.1} parent=0 // pred_check
    _
  $region55: #{base_model_forward.1} parent=0 // pred_check_branch
    %56 = sbr.rel (0) target = $region57
  $region56: #{base_model_forward.1} parent=0 // pred_region
    _
  $region57: #{base_model_forward.1} parent=0 // pred_fallthru
    _
  // Predicated region
  $region58: #{base_model_forward.1} parent=0 // pred_check
    _
  $region59: #{base_model_forward.1} parent=0 // pred_check_branch
    %58 = sbr.rel (0) target = $region61
  $region60: #{base_model_forward.1} parent=0 // pred_region
    _
  $region61: #{base_model_forward.1} parent=0 // pred_fallthru
    _
  // Predicated region
  $region62: #{base_model_forward.1} parent=0 // pred_check
    _
  $region63: #{base_model_forward.1} parent=0 // pred_check_branch
    %60 = sbr.rel (0) target = $region65
  $region64: #{base_model_forward.1} parent=0 // pred_region
    _
  $region65: #{base_model_forward.1} parent=0 // pred_fallthru
    _
  // Predicated region
  $region66: #{base_model_forward.1} parent=0 // pred_check
    _
  $region67: #{base_model_forward.1} parent=0 // pred_check_branch
    %62 = sbr.rel (0) target = $region69
  $region68: #{base_model_forward.1} parent=0 // pred_region
    _
  $region69: #{base_model_forward.1} parent=0 // pred_fallthru
    _
  // Predicated region
  $region70: #{base_model_forward.1} parent=0 // pred_check
    _
  $region71: #{base_model_forward.1} parent=0 // pred_check_branch
    %64 = sbr.rel (0) target = $region73
  $region72: #{base_model_forward.1} parent=0 // pred_region
    _
  $region73: #{base_model_forward.1} parent=0 // pred_fallthru
    _
  // Predicated region
  $region74: #{base_model_forward.1} parent=0 // pred_check
    _
  $region75: #{base_model_forward.1} parent=0 // pred_check_branch
    %66 = sbr.rel (0) target = $region77
  $region76: #{base_model_forward.1} parent=0 // pred_region
    _
  $region77: #{base_model_forward.1} parent=0 // pred_fallthru
    _
  // Predicated region
  $region78: #{base_model_forward.1} parent=0 // pred_check
    _
  $region79: #{base_model_forward.1} parent=0 // pred_check_branch
    %68 = sbr.rel (0) target = $region81
  $region80: #{base_model_forward.1} parent=0 // pred_region
    _
  $region81: #{base_model_forward.1} parent=0 // pred_fallthru
    _
  // Predicated region
  $region82: #{base_model_forward.1} parent=0 // pred_check
    _
  $region83: #{base_model_forward.1} parent=0 // pred_check_branch
    %70 = sbr.rel (0) target = $region85
  $region84: #{base_model_forward.1} parent=0 // pred_region
    _
  $region85: #{base_model_forward.1} parent=0 // pred_fallthru
    _
  // Predicated region
  $region86: #{base_model_forward.1} parent=0 // pred_check
    _
  $region87: #{base_model_forward.1} parent=0 // pred_check_branch
    %72 = sbr.rel (0) target = $region89
  $region88: #{base_model_forward.1} parent=0 // pred_region
    _
  $region89: #{base_model_forward.1} parent=0 // pred_fallthru
    _
  // Predicated region
  $region90: #{base_model_forward.1} parent=0 // pred_check
    _
  $region91: #{base_model_forward.1} parent=0 // pred_check_branch
    %74 = sbr.rel (0) target = $region93
  $region92: #{base_model_forward.1} parent=0 // pred_region
    _
  $region93: #{base_model_forward.1} parent=0 // pred_fallthru
    _
  // Predicated region
  $region94: #{base_model_forward.1} parent=0 // pred_check
    _
  $region95: #{base_model_forward.1} parent=0 // pred_check_branch
    %76 = sbr.rel (0) target = $region97
  $region96: #{base_model_forward.1} parent=0 // pred_region
    _
  $region97: #{base_model_forward.1} parent=0 // pred_fallthru
    _
  %v77 = vld [vmem:[%s0] sm:$0xff]
  %v78 = vld [vmem:[%s0 + $0x8] sm:$0xff]
  %v79 = vld [vmem:[%s0 + $0x10] sm:$0xff]
  %v80 = vld [vmem:[%s0 + $0x18] sm:$0xff]
  %v81 = vld [vmem:[%s0 + $0x20] sm:$0xff]
  %v82 = vld [vmem:[%s0 + $0x28] sm:$0xff]
  %v83 = vld [vmem:[%s0 + $0x30] sm:$0xff]
  %v84 = vld [vmem:[%s0 + $0x38] sm:$0xff]
  %v85 = vld [vmem:[%s2] sm:$0xff]
  %v86 = vld [vmem:[%s2 + $0x8] sm:$0xff]
  %v87 = vld [vmem:[%s2 + $0x10] sm:$0xff]
  %v88 = vld [vmem:[%s2 + $0x18] sm:$0xff]
  %v89 = vld [vmem:[%s8] sm:$0x1]
  %v91 = vlaneseq
  %v92 = vshrl.u32 %v91, 7
  %v93 = vsub.s32 0, %v92
  %v94 = vrot.slane %v89, %v93
  %vm96 = vcmask 261120
  %v98 = vsel %vm96, %v77, 0
  %v101 = vsel %vm96, %v78, 0
  %v104 = vsel %vm96, %v79, 0
  %v107 = vsel %vm96, %v80, 0
  %v110 = vsel %vm96, %v81, 0
  %v113 = vsel %vm96, %v82, 0
  %v116 = vsel %vm96, %v83, 0
  %v119 = vsel %vm96, %v84, 0
  %121 = vmatprep.subr.mxu0 0.0
  %122 = vmatpush1.msra.mxu0 %v85
  %123 = vmatprep.subr.mxu0 0.0
  %124 = vmatpush1.msra.mxu0 %v86
  %125 = vmatprep.subr.mxu0 0.0
  %126 = vmatpush1.msra.mxu0 %v87
  %127 = vmatprep.subr.mxu0 0.0
  %128 = vmatpush1.msra.mxu0 %v88
  %129 = vmatprep.subr.mxu0 0.0
  %130 = vmatpush1.msra.mxu0 0.0
  %131 = vmatprep.subr.mxu0 0.0
  %132 = vmatpush1.msra.mxu0 0.0
  %133 = vmatprep.subr.mxu0 0.0
  %134 = vmatpush1.msra.mxu0 0.0
  %135 = vmatprep.subr.mxu0 0.0
  %136 = vmatpush1.msra.mxu0 0.0
  %137 = vmatprep.subr.mxu0 0.0
  %138 = vmatpush1.msra.mxu0 0.0
  %139 = vmatprep.subr.mxu0 0.0
  %140 = vmatpush1.msra.mxu0 0.0
  %141 = vmatprep.subr.mxu0 0.0
  %142 = vmatpush1.msra.mxu0 0.0
  %143 = vmatprep.subr.mxu0 0.0
  %144 = vmatpush1.msra.mxu0 0.0
  %145 = vmatprep.subr.mxu0 0.0
  %146 = vmatpush1.msra.mxu0 0.0
  %147 = vmatprep.subr.mxu0 0.0
  %148 = vmatpush1.msra.mxu0 0.0
  %149 = vmatprep.subr.mxu0 0.0
  %150 = vmatpush1.msra.mxu0 0.0
  %151 = vmatprep.subr.mxu0 0.0
  %152 = vmatpush1.msra.mxu0 0.0
  %153 = vmatprep.subr.mxu0 0.0
  %154 = vmatpush1.msra.mxu0 0.0
  %155 = vmatprep.subr.mxu0 0.0
  %156 = vmatpush1.msra.mxu0 0.0
  %157 = vmatprep.subr.mxu0 0.0
  %158 = vmatpush1.msra.mxu0 0.0
  %159 = vmatprep.subr.mxu0 0.0
  %160 = vmatpush1.msra.mxu0 0.0
  %161 = vmatprep.subr.mxu0 0.0
  %162 = vmatpush1.msra.mxu0 0.0
  %163 = vmatprep.subr.mxu0 0.0
  %164 = vmatpush1.msra.mxu0 0.0
  %165 = vmatprep.subr.mxu0 0.0
  %166 = vmatpush1.msra.mxu0 0.0
  %167 = vmatprep.subr.mxu0 0.0
  %168 = vmatpush1.msra.mxu0 0.0
  %169 = vmatprep.subr.mxu0 0.0
  %170 = vmatpush1.msra.mxu0 0.0
  %171 = vmatprep.subr.mxu0 0.0
  %172 = vmatpush1.msra.mxu0 0.0
  %173 = vmatprep.subr.mxu0 0.0
  %174 = vmatpush1.msra.mxu0 0.0
  %175 = vmatprep.subr.mxu0 0.0
  %176 = vmatpush1.msra.mxu0 0.0
  %177 = vmatprep.subr.mxu0 0.0
  %178 = vmatpush1.msra.mxu0 0.0
  %179 = vmatprep.subr.mxu0 0.0
  %180 = vmatpush1.msra.mxu0 0.0
  %181 = vmatprep.subr.mxu0 0.0
  %182 = vmatpush1.msra.mxu0 0.0
  %183 = vmatprep.subr.mxu0 0.0
  %184 = vmatpush1.msra.mxu0 0.0
  %185 = vmatprep.mubr.f32.mxu0 0.0
  %186 = vmatmul.mubr.f32.gmra.mrb[0].mxu0 %v98
  %v187 = vpop.f32.mrb[0].mxu0
  %v188 = vadd.f32 %v94, %v187
  %v189 = vpop.f32.mrb[0].mxu0
  %190 = vmatprep.mubr.f32.mxu0 0.0
  %191 = vmatmul.mubr.f32.gmra.mrb[0].mxu0 %v101
  %v192 = vpop.f32.mrb[0].mxu0
  %v193 = vadd.f32 %v94, %v192
  %v194 = vpop.f32.mrb[0].mxu0
  %195 = vmatprep.mubr.f32.mxu0 0.0
  %196 = vmatmul.mubr.f32.gmra.mrb[0].mxu0 %v104
  %v197 = vpop.f32.mrb[0].mxu0
  %v198 = vadd.f32 %v94, %v197
  %v199 = vpop.f32.mrb[0].mxu0
  %200 = vmatprep.mubr.f32.mxu0 0.0
  %201 = vmatmul.mubr.f32.gmra.mrb[0].mxu0 %v107
  %v202 = vpop.f32.mrb[0].mxu0
  %v203 = vadd.f32 %v94, %v202
  %v204 = vpop.f32.mrb[0].mxu0
  %205 = vmatprep.mubr.f32.mxu0 0.0
  %206 = vmatmul.mubr.f32.gmra.mrb[0].mxu0 %v110
  %v207 = vpop.f32.mrb[0].mxu0
  %v208 = vadd.f32 %v94, %v207
  %v209 = vpop.f32.mrb[0].mxu0
  %210 = vmatprep.mubr.f32.mxu0 0.0
  %211 = vmatmul.mubr.f32.gmra.mrb[0].mxu0 %v113
  %v212 = vpop.f32.mrb[0].mxu0
  %v213 = vadd.f32 %v94, %v212
  %v214 = vpop.f32.mrb[0].mxu0
  %215 = vmatprep.mubr.f32.mxu0 0.0
  %216 = vmatmul.mubr.f32.gmra.mrb[0].mxu0 %v116
  %v217 = vpop.f32.mrb[0].mxu0
  %v218 = vadd.f32 %v94, %v217
  %v219 = vpop.f32.mrb[0].mxu0
  %220 = vmatprep.mubr.f32.mxu0 0.0
  %221 = vmatmul.mubr.f32.gmra.mrb[0].mxu0 %v119
  %v222 = vpop.f32.mrb[0].mxu0
  %v223 = vadd.f32 %v94, %v222
  %v224 = vpop.f32.mrb[0].mxu0
  %225 = vdwg.mxu0
  %v226 = vld [vmem:[%s3] sm:$0xff]
  %v227 = vld [vmem:[%s3 + $0x8] sm:$0xff]
  %v228 = vld [vmem:[%s3 + $0x10] sm:$0xff]
  %v229 = vld [vmem:[%s3 + $0x18] sm:$0xff]
  %v230 = vld [vmem:[%s9] sm:$0x1]
  %v232 = vlaneseq
  %v233 = vshrl.u32 %v232, 7
  %v234 = vsub.s32 0, %v233
  %v235 = vrot.slane %v230, %v234
  %237 = vmatprep.subr.mxu0 0.0
  %238 = vmatpush1.msra.mxu0 %v226
  %239 = vmatprep.subr.mxu0 0.0
  %240 = vmatpush1.msra.mxu0 %v227
  %241 = vmatprep.subr.mxu0 0.0
  %242 = vmatpush1.msra.mxu0 %v228
  %243 = vmatprep.subr.mxu0 0.0
  %244 = vmatpush1.msra.mxu0 %v229
  %245 = vmatprep.subr.mxu0 0.0
  %246 = vmatpush1.msra.mxu0 0.0
  %247 = vmatprep.subr.mxu0 0.0
  %248 = vmatpush1.msra.mxu0 0.0
  %249 = vmatprep.subr.mxu0 0.0
  %250 = vmatpush1.msra.mxu0 0.0
  %251 = vmatprep.subr.mxu0 0.0
  %252 = vmatpush1.msra.mxu0 0.0
  %253 = vmatprep.subr.mxu0 0.0
  %254 = vmatpush1.msra.mxu0 0.0
  %255 = vmatprep.subr.mxu0 0.0
  %256 = vmatpush1.msra.mxu0 0.0
  %257 = vmatprep.subr.mxu0 0.0
  %258 = vmatpush1.msra.mxu0 0.0
  %259 = vmatprep.subr.mxu0 0.0
  %260 = vmatpush1.msra.mxu0 0.0
  %261 = vmatprep.subr.mxu0 0.0
  %262 = vmatpush1.msra.mxu0 0.0
  %263 = vmatprep.subr.mxu0 0.0
  %264 = vmatpush1.msra.mxu0 0.0
  %265 = vmatprep.subr.mxu0 0.0
  %266 = vmatpush1.msra.mxu0 0.0
  %267 = vmatprep.subr.mxu0 0.0
  %268 = vmatpush1.msra.mxu0 0.0
  %269 = vmatprep.subr.mxu0 0.0
  %270 = vmatpush1.msra.mxu0 0.0
  %271 = vmatprep.subr.mxu0 0.0
  %272 = vmatpush1.msra.mxu0 0.0
  %273 = vmatprep.subr.mxu0 0.0
  %274 = vmatpush1.msra.mxu0 0.0
  %275 = vmatprep.subr.mxu0 0.0
  %276 = vmatpush1.msra.mxu0 0.0
  %277 = vmatprep.subr.mxu0 0.0
  %278 = vmatpush1.msra.mxu0 0.0
  %279 = vmatprep.subr.mxu0 0.0
  %280 = vmatpush1.msra.mxu0 0.0
  %281 = vmatprep.subr.mxu0 0.0
  %282 = vmatpush1.msra.mxu0 0.0
  %283 = vmatprep.subr.mxu0 0.0
  %284 = vmatpush1.msra.mxu0 0.0
  %285 = vmatprep.subr.mxu0 0.0
  %286 = vmatpush1.msra.mxu0 0.0
  %287 = vmatprep.subr.mxu0 0.0
  %288 = vmatpush1.msra.mxu0 0.0
  %289 = vmatprep.subr.mxu0 0.0
  %290 = vmatpush1.msra.mxu0 0.0
  %291 = vmatprep.subr.mxu0 0.0
  %292 = vmatpush1.msra.mxu0 0.0
  %293 = vmatprep.subr.mxu0 0.0
  %294 = vmatpush1.msra.mxu0 0.0
  %295 = vmatprep.subr.mxu0 0.0
  %296 = vmatpush1.msra.mxu0 0.0
  %297 = vmatprep.subr.mxu0 0.0
  %298 = vmatpush1.msra.mxu0 0.0
  %299 = vmatprep.subr.mxu0 0.0
  %300 = vmatpush1.msra.mxu0 0.0
  %301 = vmatprep.mubr.f32.mxu0 0.0
  %302 = vmatmul.mubr.f32.gmra.mrb[0].mxu0 %v98
  %v303 = vpop.f32.mrb[0].mxu0
  %v304 = vadd.f32 %v235, %v303
  %v305 = vpop.f32.mrb[0].mxu0
  %306 = vmatprep.mubr.f32.mxu0 0.0
  %307 = vmatmul.mubr.f32.gmra.mrb[0].mxu0 %v101
  %v308 = vpop.f32.mrb[0].mxu0
  %v309 = vadd.f32 %v235, %v308
  %v310 = vpop.f32.mrb[0].mxu0
  %311 = vmatprep.mubr.f32.mxu0 0.0
  %312 = vmatmul.mubr.f32.gmra.mrb[0].mxu0 %v104
  %v313 = vpop.f32.mrb[0].mxu0
  %v314 = vadd.f32 %v235, %v313
  %v315 = vpop.f32.mrb[0].mxu0
  %316 = vmatprep.mubr.f32.mxu0 0.0
  %317 = vmatmul.mubr.f32.gmra.mrb[0].mxu0 %v107
  %v318 = vpop.f32.mrb[0].mxu0
  %v319 = vadd.f32 %v235, %v318
  %v320 = vpop.f32.mrb[0].mxu0
  %321 = vmatprep.mubr.f32.mxu0 0.0
  %322 = vmatmul.mubr.f32.gmra.mrb[0].mxu0 %v110
  %v323 = vpop.f32.mrb[0].mxu0
  %v324 = vadd.f32 %v235, %v323
  %v325 = vpop.f32.mrb[0].mxu0
  %326 = vmatprep.mubr.f32.mxu0 0.0
  %327 = vmatmul.mubr.f32.gmra.mrb[0].mxu0 %v113
  %v328 = vpop.f32.mrb[0].mxu0
  %v329 = vadd.f32 %v235, %v328
  %v330 = vpop.f32.mrb[0].mxu0
  %331 = vmatprep.mubr.f32.mxu0 0.0
  %332 = vmatmul.mubr.f32.gmra.mrb[0].mxu0 %v116
  %v333 = vpop.f32.mrb[0].mxu0
  %v334 = vadd.f32 %v235, %v333
  %v335 = vpop.f32.mrb[0].mxu0
  %336 = vmatprep.mubr.f32.mxu0 0.0
  %337 = vmatmul.mubr.f32.gmra.mrb[0].mxu0 %v119
  %v338 = vpop.f32.mrb[0].mxu0
  %v339 = vadd.f32 %v235, %v338
  %v340 = vpop.f32.mrb[0].mxu0
  %341 = vdwg.mxu0
  %v342 = vld [vmem:[%s4] sm:$0xff]
  %v343 = vld [vmem:[%s4 + $0x8] sm:$0xff]
  %v344 = vld [vmem:[%s4 + $0x10] sm:$0xff]
  %v345 = vld [vmem:[%s4 + $0x18] sm:$0xff]
  %v346 = vld [vmem:[%s10] sm:$0x1]
  %v348 = vlaneseq
  %v349 = vshrl.u32 %v348, 7
  %v350 = vsub.s32 0, %v349
  %v351 = vrot.slane %v346, %v350
  %353 = vmatprep.subr.mxu0 0.0
  %354 = vmatpush1.msra.mxu0 %v342
  %355 = vmatprep.subr.mxu0 0.0
  %356 = vmatpush1.msra.mxu0 %v343
  %357 = vmatprep.subr.mxu0 0.0
  %358 = vmatpush1.msra.mxu0 %v344
  %359 = vmatprep.subr.mxu0 0.0
  %360 = vmatpush1.msra.mxu0 %v345
  %361 = vmatprep.subr.mxu0 0.0
  %362 = vmatpush1.msra.mxu0 0.0
  %363 = vmatprep.subr.mxu0 0.0
  %364 = vmatpush1.msra.mxu0 0.0
  %365 = vmatprep.subr.mxu0 0.0
  %366 = vmatpush1.msra.mxu0 0.0
  %367 = vmatprep.subr.mxu0 0.0
  %368 = vmatpush1.msra.mxu0 0.0
  %369 = vmatprep.subr.mxu0 0.0
  %370 = vmatpush1.msra.mxu0 0.0
  %371 = vmatprep.subr.mxu0 0.0
  %372 = vmatpush1.msra.mxu0 0.0
  %373 = vmatprep.subr.mxu0 0.0
  %374 = vmatpush1.msra.mxu0 0.0
  %375 = vmatprep.subr.mxu0 0.0
  %376 = vmatpush1.msra.mxu0 0.0
  %377 = vmatprep.subr.mxu0 0.0
  %378 = vmatpush1.msra.mxu0 0.0
  %379 = vmatprep.subr.mxu0 0.0
  %380 = vmatpush1.msra.mxu0 0.0
  %381 = vmatprep.subr.mxu0 0.0
  %382 = vmatpush1.msra.mxu0 0.0
  %383 = vmatprep.subr.mxu0 0.0
  %384 = vmatpush1.msra.mxu0 0.0
  %385 = vmatprep.subr.mxu0 0.0
  %386 = vmatpush1.msra.mxu0 0.0
  %387 = vmatprep.subr.mxu0 0.0
  %388 = vmatpush1.msra.mxu0 0.0
  %389 = vmatprep.subr.mxu0 0.0
  %390 = vmatpush1.msra.mxu0 0.0
  %391 = vmatprep.subr.mxu0 0.0
  %392 = vmatpush1.msra.mxu0 0.0
  %393 = vmatprep.subr.mxu0 0.0
  %394 = vmatpush1.msra.mxu0 0.0
  %395 = vmatprep.subr.mxu0 0.0
  %396 = vmatpush1.msra.mxu0 0.0
  %397 = vmatprep.subr.mxu0 0.0
  %398 = vmatpush1.msra.mxu0 0.0
  %399 = vmatprep.subr.mxu0 0.0
  %400 = vmatpush1.msra.mxu0 0.0
  %401 = vmatprep.subr.mxu0 0.0
  %402 = vmatpush1.msra.mxu0 0.0
  %403 = vmatprep.subr.mxu0 0.0
  %404 = vmatpush1.msra.mxu0 0.0
  %405 = vmatprep.subr.mxu0 0.0
  %406 = vmatpush1.msra.mxu0 0.0
  %407 = vmatprep.subr.mxu0 0.0
  %408 = vmatpush1.msra.mxu0 0.0
  %409 = vmatprep.subr.mxu0 0.0
  %410 = vmatpush1.msra.mxu0 0.0
  %411 = vmatprep.subr.mxu0 0.0
  %412 = vmatpush1.msra.mxu0 0.0
  %413 = vmatprep.subr.mxu0 0.0
  %414 = vmatpush1.msra.mxu0 0.0
  %415 = vmatprep.subr.mxu0 0.0
  %416 = vmatpush1.msra.mxu0 0.0
  %417 = vmatprep.mubr.f32.mxu0 0.0
  %418 = vmatmul.mubr.f32.gmra.mrb[0].mxu0 %v98
  %v419 = vpop.f32.mrb[0].mxu0
  %v420 = vadd.f32 %v351, %v419
  %v421 = vpop.f32.mrb[0].mxu0
  %422 = vmatprep.mubr.f32.mxu0 0.0
  %423 = vmatmul.mubr.f32.gmra.mrb[0].mxu0 %v101
  %v424 = vpop.f32.mrb[0].mxu0
  %v425 = vadd.f32 %v351, %v424
  %v426 = vpop.f32.mrb[0].mxu0
  %427 = vmatprep.mubr.f32.mxu0 0.0
  %428 = vmatmul.mubr.f32.gmra.mrb[0].mxu0 %v104
  %v429 = vpop.f32.mrb[0].mxu0
  %v430 = vadd.f32 %v351, %v429
  %v431 = vpop.f32.mrb[0].mxu0
  %432 = vmatprep.mubr.f32.mxu0 0.0
  %433 = vmatmul.mubr.f32.gmra.mrb[0].mxu0 %v107
  %v434 = vpop.f32.mrb[0].mxu0
  %v435 = vadd.f32 %v351, %v434
  %v436 = vpop.f32.mrb[0].mxu0
  %437 = vmatprep.mubr.f32.mxu0 0.0
  %438 = vmatmul.mubr.f32.gmra.mrb[0].mxu0 %v110
  %v439 = vpop.f32.mrb[0].mxu0
  %v440 = vadd.f32 %v351, %v439
  %v441 = vpop.f32.mrb[0].mxu0
  %442 = vmatprep.mubr.f32.mxu0 0.0
  %443 = vmatmul.mubr.f32.gmra.mrb[0].mxu0 %v113
  %v444 = vpop.f32.mrb[0].mxu0
  %v445 = vadd.f32 %v351, %v444
  %v446 = vpop.f32.mrb[0].mxu0
  %447 = vmatprep.mubr.f32.mxu0 0.0
  %448 = vmatmul.mubr.f32.gmra.mrb[0].mxu0 %v116
  %v449 = vpop.f32.mrb[0].mxu0
  %v450 = vadd.f32 %v351, %v449
  %v451 = vpop.f32.mrb[0].mxu0
  %452 = vmatprep.mubr.f32.mxu0 0.0
  %453 = vmatmul.mubr.f32.gmra.mrb[0].mxu0 %v119
  %v454 = vpop.f32.mrb[0].mxu0
  %v455 = vadd.f32 %v351, %v454
  %v456 = vpop.f32.mrb[0].mxu0
  %457 = vdwg.mxu0
  %v458 = vld [vmem:[%s5] sm:$0xff]
  %v459 = vld [vmem:[%s5 + $0x8] sm:$0xff]
  %v460 = vld [vmem:[%s5 + $0x10] sm:$0xff]
  %v461 = vld [vmem:[%s5 + $0x18] sm:$0xff]
  %v462 = vld [vmem:[%s6] sm:$0xff]
  %v463 = vld [vmem:[%s6 + $0x8] sm:$0xff]
  %v464 = vld [vmem:[%s6 + $0x10] sm:$0xff]
  %v465 = vld [vmem:[%s6 + $0x18] sm:$0xff]
  %v466 = vld [vmem:[%s7] sm:$0xff]
  %v467 = vld [vmem:[%s7 + $0x8] sm:$0xff]
  %v468 = vld [vmem:[%s7 + $0x10] sm:$0xff]
  %v469 = vld [vmem:[%s7 + $0x18] sm:$0xff]
  %v470 = vld [vmem:[%s11] sm:$0x1]
  %v472 = vsel %vm96, 0.0, 0
  %474 = vmatprep.subr.mxu0 0.0
  %475 = vmatpush1.msra.mxu0 %v458
  %476 = vmatprep.subr.mxu0 0.0
  %477 = vmatpush1.msra.mxu0 %v459
  %478 = vmatprep.subr.mxu0 0.0
  %479 = vmatpush1.msra.mxu0 %v460
  %480 = vmatprep.subr.mxu0 0.0
  %481 = vmatpush1.msra.mxu0 %v461
  %482 = vmatprep.subr.mxu0 0.0
  %483 = vmatpush1.msra.mxu0 0.0
  %484 = vmatprep.subr.mxu0 0.0
  %485 = vmatpush1.msra.mxu0 0.0
  %486 = vmatprep.subr.mxu0 0.0
  %487 = vmatpush1.msra.mxu0 0.0
  %488 = vmatprep.subr.mxu0 0.0
  %489 = vmatpush1.msra.mxu0 0.0
  %490 = vmatprep.subr.mxu0 0.0
  %491 = vmatpush1.msra.mxu0 0.0
  %492 = vmatprep.subr.mxu0 0.0
  %493 = vmatpush1.msra.mxu0 0.0
  %494 = vmatprep.subr.mxu0 0.0
  %495 = vmatpush1.msra.mxu0 0.0
  %496 = vmatprep.subr.mxu0 0.0
  %497 = vmatpush1.msra.mxu0 0.0
  %498 = vmatprep.subr.mxu0 0.0
  %499 = vmatpush1.msra.mxu0 0.0
  %500 = vmatprep.subr.mxu0 0.0
  %501 = vmatpush1.msra.mxu0 0.0
  %502 = vmatprep.subr.mxu0 0.0
  %503 = vmatpush1.msra.mxu0 0.0
  %504 = vmatprep.subr.mxu0 0.0
  %505 = vmatpush1.msra.mxu0 0.0
  %506 = vmatprep.subr.mxu0 0.0
  %507 = vmatpush1.msra.mxu0 0.0
  %508 = vmatprep.subr.mxu0 0.0
  %509 = vmatpush1.msra.mxu0 0.0
  %510 = vmatprep.subr.mxu0 0.0
  %511 = vmatpush1.msra.mxu0 0.0
  %512 = vmatprep.subr.mxu0 0.0
  %513 = vmatpush1.msra.mxu0 0.0
  %514 = vmatprep.subr.mxu0 0.0
  %515 = vmatpush1.msra.mxu0 0.0
  %516 = vmatprep.subr.mxu0 0.0
  %517 = vmatpush1.msra.mxu0 0.0
  %518 = vmatprep.subr.mxu0 0.0
  %519 = vmatpush1.msra.mxu0 0.0
  %520 = vmatprep.subr.mxu0 0.0
  %521 = vmatpush1.msra.mxu0 0.0
  %522 = vmatprep.subr.mxu0 0.0
  %523 = vmatpush1.msra.mxu0 0.0
  %524 = vmatprep.subr.mxu0 0.0
  %525 = vmatpush1.msra.mxu0 0.0
  %526 = vmatprep.subr.mxu0 0.0
  %527 = vmatpush1.msra.mxu0 0.0
  %528 = vmatprep.subr.mxu0 0.0
  %529 = vmatpush1.msra.mxu0 0.0
  %530 = vmatprep.subr.mxu0 0.0
  %531 = vmatpush1.msra.mxu0 0.0
  %532 = vmatprep.subr.mxu0 0.0
  %533 = vmatpush1.msra.mxu0 0.0
  %534 = vmatprep.subr.mxu0 0.0
  %535 = vmatpush1.msra.mxu0 0.0
  %536 = vmatprep.subr.mxu0 0.0
  %537 = vmatpush1.msra.mxu0 0.0
  %538 = vmatprep.mubr.f32.mxu0 0.0
  %539 = vmatmul.mubr.f32.gmra.mrb[0].mxu0 %v472
  %v540 = vpop.f32.mrb[0].mxu0
  %v541 = vadd.f32 0.0, %v540
  %v542 = vpop.f32.mrb[0].mxu0
  %543 = vdwg.mxu0
  %544 = vmatprep.subr.mxu0 0.0
  %545 = vmatpush1.msra.mxu0 %v462
  %546 = vmatprep.subr.mxu0 0.0
  %547 = vmatpush1.msra.mxu0 %v463
  %548 = vmatprep.subr.mxu0 0.0
  %549 = vmatpush1.msra.mxu0 %v464
  %550 = vmatprep.subr.mxu0 0.0
  %551 = vmatpush1.msra.mxu0 %v465
  %552 = vmatprep.subr.mxu0 0.0
  %553 = vmatpush1.msra.mxu0 0.0
  %554 = vmatprep.subr.mxu0 0.0
  %555 = vmatpush1.msra.mxu0 0.0
  %556 = vmatprep.subr.mxu0 0.0
  %557 = vmatpush1.msra.mxu0 0.0
  %558 = vmatprep.subr.mxu0 0.0
  %559 = vmatpush1.msra.mxu0 0.0
  %560 = vmatprep.subr.mxu0 0.0
  %561 = vmatpush1.msra.mxu0 0.0
  %562 = vmatprep.subr.mxu0 0.0
  %563 = vmatpush1.msra.mxu0 0.0
  %564 = vmatprep.subr.mxu0 0.0
  %565 = vmatpush1.msra.mxu0 0.0
  %566 = vmatprep.subr.mxu0 0.0
  %567 = vmatpush1.msra.mxu0 0.0
  %568 = vmatprep.subr.mxu0 0.0
  %569 = vmatpush1.msra.mxu0 0.0
  %570 = vmatprep.subr.mxu0 0.0
  %571 = vmatpush1.msra.mxu0 0.0
  %572 = vmatprep.subr.mxu0 0.0
  %573 = vmatpush1.msra.mxu0 0.0
  %574 = vmatprep.subr.mxu0 0.0
  %575 = vmatpush1.msra.mxu0 0.0
  %576 = vmatprep.subr.mxu0 0.0
  %577 = vmatpush1.msra.mxu0 0.0
  %578 = vmatprep.subr.mxu0 0.0
  %579 = vmatpush1.msra.mxu0 0.0
  %580 = vmatprep.subr.mxu0 0.0
  %581 = vmatpush1.msra.mxu0 0.0
  %582 = vmatprep.subr.mxu0 0.0
  %583 = vmatpush1.msra.mxu0 0.0
  %584 = vmatprep.subr.mxu0 0.0
  %585 = vmatpush1.msra.mxu0 0.0
  %586 = vmatprep.subr.mxu0 0.0
  %587 = vmatpush1.msra.mxu0 0.0
  %588 = vmatprep.subr.mxu0 0.0
  %589 = vmatpush1.msra.mxu0 0.0
  %590 = vmatprep.subr.mxu0 0.0
  %591 = vmatpush1.msra.mxu0 0.0
  %592 = vmatprep.subr.mxu0 0.0
  %593 = vmatpush1.msra.mxu0 0.0
  %594 = vmatprep.subr.mxu0 0.0
  %595 = vmatpush1.msra.mxu0 0.0
  %596 = vmatprep.subr.mxu0 0.0
  %597 = vmatpush1.msra.mxu0 0.0
  %598 = vmatprep.subr.mxu0 0.0
  %599 = vmatpush1.msra.mxu0 0.0
  %600 = vmatprep.subr.mxu0 0.0
  %601 = vmatpush1.msra.mxu0 0.0
  %602 = vmatprep.subr.mxu0 0.0
  %603 = vmatpush1.msra.mxu0 0.0
  %604 = vmatprep.subr.mxu0 0.0
  %605 = vmatpush1.msra.mxu0 0.0
  %606 = vmatprep.subr.mxu0 0.0
  %607 = vmatpush1.msra.mxu0 0.0
  %608 = vmatprep.mubr.f32.mxu0 0.0
  %609 = vmatmul.mubr.f32.gmra.mrb[0].mxu0 %v472
  %v610 = vpop.f32.mrb[0].mxu0
  %v611 = vadd.f32 0.0, %v610
  %v612 = vpop.f32.mrb[0].mxu0
  %613 = vdwg.mxu0
  %v615 = vlaneseq
  %v616 = vshrl.u32 %v615, 7
  %v617 = vsub.s32 0, %v616
  %v618 = vrot.slane %v470, %v617
  %620 = vmatprep.subr.mxu0 0.0
  %621 = vmatpush1.msra.mxu0 %v466
  %622 = vmatprep.subr.mxu0 0.0
  %623 = vmatpush1.msra.mxu0 %v467
  %624 = vmatprep.subr.mxu0 0.0
  %625 = vmatpush1.msra.mxu0 %v468
  %626 = vmatprep.subr.mxu0 0.0
  %627 = vmatpush1.msra.mxu0 %v469
  %628 = vmatprep.subr.mxu0 0.0
  %629 = vmatpush1.msra.mxu0 0.0
  %630 = vmatprep.subr.mxu0 0.0
  %631 = vmatpush1.msra.mxu0 0.0
  %632 = vmatprep.subr.mxu0 0.0
  %633 = vmatpush1.msra.mxu0 0.0
  %634 = vmatprep.subr.mxu0 0.0
  %635 = vmatpush1.msra.mxu0 0.0
  %636 = vmatprep.subr.mxu0 0.0
  %637 = vmatpush1.msra.mxu0 0.0
  %638 = vmatprep.subr.mxu0 0.0
  %639 = vmatpush1.msra.mxu0 0.0
  %640 = vmatprep.subr.mxu0 0.0
  %641 = vmatpush1.msra.mxu0 0.0
  %642 = vmatprep.subr.mxu0 0.0
  %643 = vmatpush1.msra.mxu0 0.0
  %644 = vmatprep.subr.mxu0 0.0
  %645 = vmatpush1.msra.mxu0 0.0
  %646 = vmatprep.subr.mxu0 0.0
  %647 = vmatpush1.msra.mxu0 0.0
  %648 = vmatprep.subr.mxu0 0.0
  %649 = vmatpush1.msra.mxu0 0.0
  %650 = vmatprep.subr.mxu0 0.0
  %651 = vmatpush1.msra.mxu0 0.0
  %652 = vmatprep.subr.mxu0 0.0
  %653 = vmatpush1.msra.mxu0 0.0
  %654 = vmatprep.subr.mxu0 0.0
  %655 = vmatpush1.msra.mxu0 0.0
  %656 = vmatprep.subr.mxu0 0.0
  %657 = vmatpush1.msra.mxu0 0.0
  %658 = vmatprep.subr.mxu0 0.0
  %659 = vmatpush1.msra.mxu0 0.0
  %660 = vmatprep.subr.mxu0 0.0
  %661 = vmatpush1.msra.mxu0 0.0
  %662 = vmatprep.subr.mxu0 0.0
  %663 = vmatpush1.msra.mxu0 0.0
  %664 = vmatprep.subr.mxu0 0.0
  %665 = vmatpush1.msra.mxu0 0.0
  %666 = vmatprep.subr.mxu0 0.0
  %667 = vmatpush1.msra.mxu0 0.0
  %668 = vmatprep.subr.mxu0 0.0
  %669 = vmatpush1.msra.mxu0 0.0
  %670 = vmatprep.subr.mxu0 0.0
  %671 = vmatpush1.msra.mxu0 0.0
  %672 = vmatprep.subr.mxu0 0.0
  %673 = vmatpush1.msra.mxu0 0.0
  %674 = vmatprep.subr.mxu0 0.0
  %675 = vmatpush1.msra.mxu0 0.0
  %676 = vmatprep.subr.mxu0 0.0
  %677 = vmatpush1.msra.mxu0 0.0
  %678 = vmatprep.subr.mxu0 0.0
  %679 = vmatpush1.msra.mxu0 0.0
  %680 = vmatprep.subr.mxu0 0.0
  %681 = vmatpush1.msra.mxu0 0.0
  %682 = vmatprep.subr.mxu0 0.0
  %683 = vmatpush1.msra.mxu0 0.0
  %684 = vmatprep.mubr.f32.mxu0 0.0
  %685 = vmatmul.mubr.f32.gmra.mrb[0].mxu0 %v472
  %v686 = vpop.f32.mrb[0].mxu0
  %v687 = vadd.f32 %v618, %v686
  %v688 = vpop.f32.mrb[0].mxu0
  %689 = vdwg.mxu0
  %v690 = vadd.f32 %v188, %v541
  %v691 = vxor.u32 %v690, 2147483648
  %v692 = vmul.f32 %v691, 1.442695
  %v693 = vpow.pop %v692
  %v694 = vadd.f32 %v693, 1.0
  %v695 = vrcp.pop %v694
  %v696 = vmul.f32 1.0, %v695
  %v697 = vadd.f32 %v304, %v611
  %v698 = vxor.u32 %v697, 2147483648
  %v699 = vmul.f32 %v698, 1.442695
  %v700 = vpow.pop %v699
  %v701 = vadd.f32 %v700, 1.0
  %v702 = vrcp.pop %v701
  %v703 = vmul.f32 1.0, %v702
  %v704 = vmul.f32 %v696, %v687
  %v705 = vadd.f32 %v420, %v704
  %v706 = vtanh.pop %v705
  %v707 = vsub.f32 1.0, %v703
  %v708 = vmul.f32 %v707, %v706
  %v709 = vmul.f32 %v703, 0.0
  %v710 = vadd.f32 %v708, %v709
  %v712 = vsel %vm96, %v710, 0
  %714 = vmatprep.subr.mxu0 0.0
  %715 = vmatpush1.msra.mxu0 %v458
  %716 = vmatprep.subr.mxu0 0.0
  %717 = vmatpush1.msra.mxu0 %v459
  %718 = vmatprep.subr.mxu0 0.0
  %719 = vmatpush1.msra.mxu0 %v460
  %720 = vmatprep.subr.mxu0 0.0
  %721 = vmatpush1.msra.mxu0 %v461
  %722 = vmatprep.subr.mxu0 0.0
  %723 = vmatpush1.msra.mxu0 0.0
  %724 = vmatprep.subr.mxu0 0.0
  %725 = vmatpush1.msra.mxu0 0.0
  %726 = vmatprep.subr.mxu0 0.0
  %727 = vmatpush1.msra.mxu0 0.0
  %728 = vmatprep.subr.mxu0 0.0
  %729 = vmatpush1.msra.mxu0 0.0
  %730 = vmatprep.subr.mxu0 0.0
  %731 = vmatpush1.msra.mxu0 0.0
  %732 = vmatprep.subr.mxu0 0.0
  %733 = vmatpush1.msra.mxu0 0.0
  %734 = vmatprep.subr.mxu0 0.0
  %735 = vmatpush1.msra.mxu0 0.0
  %736 = vmatprep.subr.mxu0 0.0
  %737 = vmatpush1.msra.mxu0 0.0
  %738 = vmatprep.subr.mxu0 0.0
  %739 = vmatpush1.msra.mxu0 0.0
  %740 = vmatprep.subr.mxu0 0.0
  %741 = vmatpush1.msra.mxu0 0.0
  %742 = vmatprep.subr.mxu0 0.0
  %743 = vmatpush1.msra.mxu0 0.0
  %744 = vmatprep.subr.mxu0 0.0
  %745 = vmatpush1.msra.mxu0 0.0
  %746 = vmatprep.subr.mxu0 0.0
  %747 = vmatpush1.msra.mxu0 0.0
  %748 = vmatprep.subr.mxu0 0.0
  %749 = vmatpush1.msra.mxu0 0.0
  %750 = vmatprep.subr.mxu0 0.0
  %751 = vmatpush1.msra.mxu0 0.0
  %752 = vmatprep.subr.mxu0 0.0
  %753 = vmatpush1.msra.mxu0 0.0
  %754 = vmatprep.subr.mxu0 0.0
  %755 = vmatpush1.msra.mxu0 0.0
  %756 = vmatprep.subr.mxu0 0.0
  %757 = vmatpush1.msra.mxu0 0.0
  %758 = vmatprep.subr.mxu0 0.0
  %759 = vmatpush1.msra.mxu0 0.0
  %760 = vmatprep.subr.mxu0 0.0
  %761 = vmatpush1.msra.mxu0 0.0
  %762 = vmatprep.subr.mxu0 0.0
  %763 = vmatpush1.msra.mxu0 0.0
  %764 = vmatprep.subr.mxu0 0.0
  %765 = vmatpush1.msra.mxu0 0.0
  %766 = vmatprep.subr.mxu0 0.0
  %767 = vmatpush1.msra.mxu0 0.0
  %768 = vmatprep.subr.mxu0 0.0
  %769 = vmatpush1.msra.mxu0 0.0
  %770 = vmatprep.subr.mxu0 0.0
  %771 = vmatpush1.msra.mxu0 0.0
  %772 = vmatprep.subr.mxu0 0.0
  %773 = vmatpush1.msra.mxu0 0.0
  %774 = vmatprep.subr.mxu0 0.0
  %775 = vmatpush1.msra.mxu0 0.0
  %776 = vmatprep.subr.mxu0 0.0
  %777 = vmatpush1.msra.mxu0 0.0
  %778 = vmatprep.mubr.f32.mxu0 0.0
  %779 = vmatmul.mubr.f32.gmra.mrb[0].mxu0 %v712
  %v780 = vpop.f32.mrb[0].mxu0
  %v781 = vadd.f32 0.0, %v780
  %v782 = vpop.f32.mrb[0].mxu0
  %783 = vdwg.mxu0
  %784 = vmatprep.subr.mxu0 0.0
  %785 = vmatpush1.msra.mxu0 %v462
  %786 = vmatprep.subr.mxu0 0.0
  %787 = vmatpush1.msra.mxu0 %v463
  %788 = vmatprep.subr.mxu0 0.0
  %789 = vmatpush1.msra.mxu0 %v464
  %790 = vmatprep.subr.mxu0 0.0
  %791 = vmatpush1.msra.mxu0 %v465
  %792 = vmatprep.subr.mxu0 0.0
  %793 = vmatpush1.msra.mxu0 0.0
  %794 = vmatprep.subr.mxu0 0.0
  %795 = vmatpush1.msra.mxu0 0.0
  %796 = vmatprep.subr.mxu0 0.0
  %797 = vmatpush1.msra.mxu0 0.0
  %798 = vmatprep.subr.mxu0 0.0
  %799 = vmatpush1.msra.mxu0 0.0
  %800 = vmatprep.subr.mxu0 0.0
  %801 = vmatpush1.msra.mxu0 0.0
  %802 = vmatprep.subr.mxu0 0.0
  %803 = vmatpush1.msra.mxu0 0.0
  %804 = vmatprep.subr.mxu0 0.0
  %805 = vmatpush1.msra.mxu0 0.0
  %806 = vmatprep.subr.mxu0 0.0
  %807 = vmatpush1.msra.mxu0 0.0
  %808 = vmatprep.subr.mxu0 0.0
  %809 = vmatpush1.msra.mxu0 0.0
  %810 = vmatprep.subr.mxu0 0.0
  %811 = vmatpush1.msra.mxu0 0.0
  %812 = vmatprep.subr.mxu0 0.0
  %813 = vmatpush1.msra.mxu0 0.0
  %814 = vmatprep.subr.mxu0 0.0
  %815 = vmatpush1.msra.mxu0 0.0
  %816 = vmatprep.subr.mxu0 0.0
  %817 = vmatpush1.msra.mxu0 0.0
  %818 = vmatprep.subr.mxu0 0.0
  %819 = vmatpush1.msra.mxu0 0.0
  %820 = vmatprep.subr.mxu0 0.0
  %821 = vmatpush1.msra.mxu0 0.0
  %822 = vmatprep.subr.mxu0 0.0
  %823 = vmatpush1.msra.mxu0 0.0
  %824 = vmatprep.subr.mxu0 0.0
  %825 = vmatpush1.msra.mxu0 0.0
  %826 = vmatprep.subr.mxu0 0.0
  %827 = vmatpush1.msra.mxu0 0.0
  %828 = vmatprep.subr.mxu0 0.0
  %829 = vmatpush1.msra.mxu0 0.0
  %830 = vmatprep.subr.mxu0 0.0
  %831 = vmatpush1.msra.mxu0 0.0
  %832 = vmatprep.subr.mxu0 0.0
  %833 = vmatpush1.msra.mxu0 0.0
  %834 = vmatprep.subr.mxu0 0.0
  %835 = vmatpush1.msra.mxu0 0.0
  %836 = vmatprep.subr.mxu0 0.0
  %837 = vmatpush1.msra.mxu0 0.0
  %838 = vmatprep.subr.mxu0 0.0
  %839 = vmatpush1.msra.mxu0 0.0
  %840 = vmatprep.subr.mxu0 0.0
  %841 = vmatpush1.msra.mxu0 0.0
  %842 = vmatprep.subr.mxu0 0.0
  %843 = vmatpush1.msra.mxu0 0.0
  %844 = vmatprep.subr.mxu0 0.0
  %845 = vmatpush1.msra.mxu0 0.0
  %846 = vmatprep.subr.mxu0 0.0
  %847 = vmatpush1.msra.mxu0 0.0
  %848 = vmatprep.mubr.f32.mxu0 0.0
  %849 = vmatmul.mubr.f32.gmra.mrb[0].mxu0 %v712
  %v850 = vpop.f32.mrb[0].mxu0
  %v851 = vadd.f32 0.0, %v850
  %v852 = vpop.f32.mrb[0].mxu0
  %853 = vdwg.mxu0
  %854 = vmatprep.subr.mxu0 0.0
  %855 = vmatpush1.msra.mxu0 %v466
  %856 = vmatprep.subr.mxu0 0.0
  %857 = vmatpush1.msra.mxu0 %v467
  %858 = vmatprep.subr.mxu0 0.0
  %859 = vmatpush1.msra.mxu0 %v468
  %860 = vmatprep.subr.mxu0 0.0
  %861 = vmatpush1.msra.mxu0 %v469
  %862 = vmatprep.subr.mxu0 0.0
  %863 = vmatpush1.msra.mxu0 0.0
  %864 = vmatprep.subr.mxu0 0.0
  %865 = vmatpush1.msra.mxu0 0.0
  %866 = vmatprep.subr.mxu0 0.0
  %867 = vmatpush1.msra.mxu0 0.0
  %868 = vmatprep.subr.mxu0 0.0
  %869 = vmatpush1.msra.mxu0 0.0
  %870 = vmatprep.subr.mxu0 0.0
  %871 = vmatpush1.msra.mxu0 0.0
  %872 = vmatprep.subr.mxu0 0.0
  %873 = vmatpush1.msra.mxu0 0.0
  %874 = vmatprep.subr.mxu0 0.0
  %875 = vmatpush1.msra.mxu0 0.0
  %876 = vmatprep.subr.mxu0 0.0
  %877 = vmatpush1.msra.mxu0 0.0
  %878 = vmatprep.subr.mxu0 0.0
  %879 = vmatpush1.msra.mxu0 0.0
  %880 = vmatprep.subr.mxu0 0.0
  %881 = vmatpush1.msra.mxu0 0.0
  %882 = vmatprep.subr.mxu0 0.0
  %883 = vmatpush1.msra.mxu0 0.0
  %884 = vmatprep.subr.mxu0 0.0
  %885 = vmatpush1.msra.mxu0 0.0
  %886 = vmatprep.subr.mxu0 0.0
  %887 = vmatpush1.msra.mxu0 0.0
  %888 = vmatprep.subr.mxu0 0.0
  %889 = vmatpush1.msra.mxu0 0.0
  %890 = vmatprep.subr.mxu0 0.0
  %891 = vmatpush1.msra.mxu0 0.0
  %892 = vmatprep.subr.mxu0 0.0
  %893 = vmatpush1.msra.mxu0 0.0
  %894 = vmatprep.subr.mxu0 0.0
  %895 = vmatpush1.msra.mxu0 0.0
  %896 = vmatprep.subr.mxu0 0.0
  %897 = vmatpush1.msra.mxu0 0.0
  %898 = vmatprep.subr.mxu0 0.0
  %899 = vmatpush1.msra.mxu0 0.0
  %900 = vmatprep.subr.mxu0 0.0
  %901 = vmatpush1.msra.mxu0 0.0
  %902 = vmatprep.subr.mxu0 0.0
  %903 = vmatpush1.msra.mxu0 0.0
  %904 = vmatprep.subr.mxu0 0.0
  %905 = vmatpush1.msra.mxu0 0.0
  %906 = vmatprep.subr.mxu0 0.0
  %907 = vmatpush1.msra.mxu0 0.0
  %908 = vmatprep.subr.mxu0 0.0
  %909 = vmatpush1.msra.mxu0 0.0
  %910 = vmatprep.subr.mxu0 0.0
  %911 = vmatpush1.msra.mxu0 0.0
  %912 = vmatprep.subr.mxu0 0.0
  %913 = vmatpush1.msra.mxu0 0.0
  %914 = vmatprep.subr.mxu0 0.0
  %915 = vmatpush1.msra.mxu0 0.0
  %916 = vmatprep.subr.mxu0 0.0
  %917 = vmatpush1.msra.mxu0 0.0
  %918 = vmatprep.mubr.f32.mxu0 0.0
  %919 = vmatmul.mubr.f32.gmra.mrb[0].mxu0 %v712
  %v920 = vpop.f32.mrb[0].mxu0
  %v921 = vadd.f32 %v618, %v920
  %v922 = vpop.f32.mrb[0].mxu0
  %923 = vdwg.mxu0
  %v924 = vadd.f32 %v193, %v781
  %v925 = vxor.u32 %v924, 2147483648
  %v926 = vmul.f32 %v925, 1.442695
  %v927 = vpow.pop %v926
  %v928 = vadd.f32 %v927, 1.0
  %v929 = vrcp.pop %v928
  %v930 = vmul.f32 1.0, %v929
  %v931 = vadd.f32 %v309, %v851
  %v932 = vxor.u32 %v931, 2147483648
  %v933 = vmul.f32 %v932, 1.442695
  %v934 = vpow.pop %v933
  %v935 = vadd.f32 %v934, 1.0
  %v936 = vrcp.pop %v935
  %v937 = vmul.f32 1.0, %v936
  %v938 = vmul.f32 %v930, %v921
  %v939 = vadd.f32 %v425, %v938
  %v940 = vtanh.pop %v939
  %v941 = vsub.f32 1.0, %v937
  %v942 = vmul.f32 %v941, %v940
  %v943 = vmul.f32 %v937, %v710
  %v944 = vadd.f32 %v942, %v943
  %v946 = vsel %vm96, %v944, 0
  %948 = vmatprep.subr.mxu0 0.0
  %949 = vmatpush1.msra.mxu0 %v458
  %950 = vmatprep.subr.mxu0 0.0
  %951 = vmatpush1.msra.mxu0 %v459
  %952 = vmatprep.subr.mxu0 0.0
  %953 = vmatpush1.msra.mxu0 %v460
  %954 = vmatprep.subr.mxu0 0.0
  %955 = vmatpush1.msra.mxu0 %v461
  %956 = vmatprep.subr.mxu0 0.0
  %957 = vmatpush1.msra.mxu0 0.0
  %958 = vmatprep.subr.mxu0 0.0
  %959 = vmatpush1.msra.mxu0 0.0
  %960 = vmatprep.subr.mxu0 0.0
  %961 = vmatpush1.msra.mxu0 0.0
  %962 = vmatprep.subr.mxu0 0.0
  %963 = vmatpush1.msra.mxu0 0.0
  %964 = vmatprep.subr.mxu0 0.0
  %965 = vmatpush1.msra.mxu0 0.0
  %966 = vmatprep.subr.mxu0 0.0
  %967 = vmatpush1.msra.mxu0 0.0
  %968 = vmatprep.subr.mxu0 0.0
  %969 = vmatpush1.msra.mxu0 0.0
  %970 = vmatprep.subr.mxu0 0.0
  %971 = vmatpush1.msra.mxu0 0.0
  %972 = vmatprep.subr.mxu0 0.0
  %973 = vmatpush1.msra.mxu0 0.0
  %974 = vmatprep.subr.mxu0 0.0
  %975 = vmatpush1.msra.mxu0 0.0
  %976 = vmatprep.subr.mxu0 0.0
  %977 = vmatpush1.msra.mxu0 0.0
  %978 = vmatprep.subr.mxu0 0.0
  %979 = vmatpush1.msra.mxu0 0.0
  %980 = vmatprep.subr.mxu0 0.0
  %981 = vmatpush1.msra.mxu0 0.0
  %982 = vmatprep.subr.mxu0 0.0
  %983 = vmatpush1.msra.mxu0 0.0
  %984 = vmatprep.subr.mxu0 0.0
  %985 = vmatpush1.msra.mxu0 0.0
  %986 = vmatprep.subr.mxu0 0.0
  %987 = vmatpush1.msra.mxu0 0.0
  %988 = vmatprep.subr.mxu0 0.0
  %989 = vmatpush1.msra.mxu0 0.0
  %990 = vmatprep.subr.mxu0 0.0
  %991 = vmatpush1.msra.mxu0 0.0
  %992 = vmatprep.subr.mxu0 0.0
  %993 = vmatpush1.msra.mxu0 0.0
  %994 = vmatprep.subr.mxu0 0.0
  %995 = vmatpush1.msra.mxu0 0.0
  %996 = vmatprep.subr.mxu0 0.0
  %997 = vmatpush1.msra.mxu0 0.0
  %998 = vmatprep.subr.mxu0 0.0
  %999 = vmatpush1.msra.mxu0 0.0
  %1000 = vmatprep.subr.mxu0 0.0
  %1001 = vmatpush1.msra.mxu0 0.0
  %1002 = vmatprep.subr.mxu0 0.0
  %1003 = vmatpush1.msra.mxu0 0.0
  %1004 = vmatprep.subr.mxu0 0.0
  %1005 = vmatpush1.msra.mxu0 0.0
  %1006 = vmatprep.subr.mxu0 0.0
  %1007 = vmatpush1.msra.mxu0 0.0
  %1008 = vmatprep.subr.mxu0 0.0
  %1009 = vmatpush1.msra.mxu0 0.0
  %1010 = vmatprep.subr.mxu0 0.0
  %1011 = vmatpush1.msra.mxu0 0.0
  %1012 = vmatprep.mubr.f32.mxu0 0.0
  %1013 = vmatmul.mubr.f32.gmra.mrb[0].mxu0 %v946
  %v1014 = vpop.f32.mrb[0].mxu0
  %v1015 = vadd.f32 0.0, %v1014
  %v1016 = vpop.f32.mrb[0].mxu0
  %1017 = vdwg.mxu0
  %1018 = vmatprep.subr.mxu0 0.0
  %1019 = vmatpush1.msra.mxu0 %v462
  %1020 = vmatprep.subr.mxu0 0.0
  %1021 = vmatpush1.msra.mxu0 %v463
  %1022 = vmatprep.subr.mxu0 0.0
  %1023 = vmatpush1.msra.mxu0 %v464
  %1024 = vmatprep.subr.mxu0 0.0
  %1025 = vmatpush1.msra.mxu0 %v465
  %1026 = vmatprep.subr.mxu0 0.0
  %1027 = vmatpush1.msra.mxu0 0.0
  %1028 = vmatprep.subr.mxu0 0.0
  %1029 = vmatpush1.msra.mxu0 0.0
  %1030 = vmatprep.subr.mxu0 0.0
  %1031 = vmatpush1.msra.mxu0 0.0
  %1032 = vmatprep.subr.mxu0 0.0
  %1033 = vmatpush1.msra.mxu0 0.0
  %1034 = vmatprep.subr.mxu0 0.0
  %1035 = vmatpush1.msra.mxu0 0.0
  %1036 = vmatprep.subr.mxu0 0.0
  %1037 = vmatpush1.msra.mxu0 0.0
  %1038 = vmatprep.subr.mxu0 0.0
  %1039 = vmatpush1.msra.mxu0 0.0
  %1040 = vmatprep.subr.mxu0 0.0
  %1041 = vmatpush1.msra.mxu0 0.0
  %1042 = vmatprep.subr.mxu0 0.0
  %1043 = vmatpush1.msra.mxu0 0.0
  %1044 = vmatprep.subr.mxu0 0.0
  %1045 = vmatpush1.msra.mxu0 0.0
  %1046 = vmatprep.subr.mxu0 0.0
  %1047 = vmatpush1.msra.mxu0 0.0
  %1048 = vmatprep.subr.mxu0 0.0
  %1049 = vmatpush1.msra.mxu0 0.0
  %1050 = vmatprep.subr.mxu0 0.0
  %1051 = vmatpush1.msra.mxu0 0.0
  %1052 = vmatprep.subr.mxu0 0.0
  %1053 = vmatpush1.msra.mxu0 0.0
  %1054 = vmatprep.subr.mxu0 0.0
  %1055 = vmatpush1.msra.mxu0 0.0
  %1056 = vmatprep.subr.mxu0 0.0
  %1057 = vmatpush1.msra.mxu0 0.0
  %1058 = vmatprep.subr.mxu0 0.0
  %1059 = vmatpush1.msra.mxu0 0.0
  %1060 = vmatprep.subr.mxu0 0.0
  %1061 = vmatpush1.msra.mxu0 0.0
  %1062 = vmatprep.subr.mxu0 0.0
  %1063 = vmatpush1.msra.mxu0 0.0
  %1064 = vmatprep.subr.mxu0 0.0
  %1065 = vmatpush1.msra.mxu0 0.0
  %1066 = vmatprep.subr.mxu0 0.0
  %1067 = vmatpush1.msra.mxu0 0.0
  %1068 = vmatprep.subr.mxu0 0.0
  %1069 = vmatpush1.msra.mxu0 0.0
  %1070 = vmatprep.subr.mxu0 0.0
  %1071 = vmatpush1.msra.mxu0 0.0
  %1072 = vmatprep.subr.mxu0 0.0
  %1073 = vmatpush1.msra.mxu0 0.0
  %1074 = vmatprep.subr.mxu0 0.0
  %1075 = vmatpush1.msra.mxu0 0.0
  %1076 = vmatprep.subr.mxu0 0.0
  %1077 = vmatpush1.msra.mxu0 0.0
  %1078 = vmatprep.subr.mxu0 0.0
  %1079 = vmatpush1.msra.mxu0 0.0
  %1080 = vmatprep.subr.mxu0 0.0
  %1081 = vmatpush1.msra.mxu0 0.0
  %1082 = vmatprep.mubr.f32.mxu0 0.0
  %1083 = vmatmul.mubr.f32.gmra.mrb[0].mxu0 %v946
  %v1084 = vpop.f32.mrb[0].mxu0
  %v1085 = vadd.f32 0.0, %v1084
  %v1086 = vpop.f32.mrb[0].mxu0
  %1087 = vdwg.mxu0
  %1088 = vmatprep.subr.mxu0 0.0
  %1089 = vmatpush1.msra.mxu0 %v466
  %1090 = vmatprep.subr.mxu0 0.0
  %1091 = vmatpush1.msra.mxu0 %v467
  %1092 = vmatprep.subr.mxu0 0.0
  %1093 = vmatpush1.msra.mxu0 %v468
  %1094 = vmatprep.subr.mxu0 0.0
  %1095 = vmatpush1.msra.mxu0 %v469
  %1096 = vmatprep.subr.mxu0 0.0
  %1097 = vmatpush1.msra.mxu0 0.0
  %1098 = vmatprep.subr.mxu0 0.0
  %1099 = vmatpush1.msra.mxu0 0.0
  %1100 = vmatprep.subr.mxu0 0.0
  %1101 = vmatpush1.msra.mxu0 0.0
  %1102 = vmatprep.subr.mxu0 0.0
  %1103 = vmatpush1.msra.mxu0 0.0
  %1104 = vmatprep.subr.mxu0 0.0
  %1105 = vmatpush1.msra.mxu0 0.0
  %1106 = vmatprep.subr.mxu0 0.0
  %1107 = vmatpush1.msra.mxu0 0.0
  %1108 = vmatprep.subr.mxu0 0.0
  %1109 = vmatpush1.msra.mxu0 0.0
  %1110 = vmatprep.subr.mxu0 0.0
  %1111 = vmatpush1.msra.mxu0 0.0
  %1112 = vmatprep.subr.mxu0 0.0
  %1113 = vmatpush1.msra.mxu0 0.0
  %1114 = vmatprep.subr.mxu0 0.0
  %1115 = vmatpush1.msra.mxu0 0.0
  %1116 = vmatprep.subr.mxu0 0.0
  %1117 = vmatpush1.msra.mxu0 0.0
  %1118 = vmatprep.subr.mxu0 0.0
  %1119 = vmatpush1.msra.mxu0 0.0
  %1120 = vmatprep.subr.mxu0 0.0
  %1121 = vmatpush1.msra.mxu0 0.0
  %1122 = vmatprep.subr.mxu0 0.0
  %1123 = vmatpush1.msra.mxu0 0.0
  %1124 = vmatprep.subr.mxu0 0.0
  %1125 = vmatpush1.msra.mxu0 0.0
  %1126 = vmatprep.subr.mxu0 0.0
  %1127 = vmatpush1.msra.mxu0 0.0
  %1128 = vmatprep.subr.mxu0 0.0
  %1129 = vmatpush1.msra.mxu0 0.0
  %1130 = vmatprep.subr.mxu0 0.0
  %1131 = vmatpush1.msra.mxu0 0.0
  %1132 = vmatprep.subr.mxu0 0.0
  %1133 = vmatpush1.msra.mxu0 0.0
  %1134 = vmatprep.subr.mxu0 0.0
  %1135 = vmatpush1.msra.mxu0 0.0
  %1136 = vmatprep.subr.mxu0 0.0
  %1137 = vmatpush1.msra.mxu0 0.0
  %1138 = vmatprep.subr.mxu0 0.0
  %1139 = vmatpush1.msra.mxu0 0.0
  %1140 = vmatprep.subr.mxu0 0.0
  %1141 = vmatpush1.msra.mxu0 0.0
  %1142 = vmatprep.subr.mxu0 0.0
  %1143 = vmatpush1.msra.mxu0 0.0
  %1144 = vmatprep.subr.mxu0 0.0
  %1145 = vmatpush1.msra.mxu0 0.0
  %1146 = vmatprep.subr.mxu0 0.0
  %1147 = vmatpush1.msra.mxu0 0.0
  %1148 = vmatprep.subr.mxu0 0.0
  %1149 = vmatpush1.msra.mxu0 0.0
  %1150 = vmatprep.subr.mxu0 0.0
  %1151 = vmatpush1.msra.mxu0 0.0
  %1152 = vmatprep.mubr.f32.mxu0 0.0
  %1153 = vmatmul.mubr.f32.gmra.mrb[0].mxu0 %v946
  %v1154 = vpop.f32.mrb[0].mxu0
  %v1155 = vadd.f32 %v618, %v1154
  %v1156 = vpop.f32.mrb[0].mxu0
  %1157 = vdwg.mxu0
  %v1158 = vadd.f32 %v198, %v1015
  %v1159 = vxor.u32 %v1158, 2147483648
  %v1160 = vmul.f32 %v1159, 1.442695
  %v1161 = vpow.pop %v1160
  %v1162 = vadd.f32 %v1161, 1.0
  %v1163 = vrcp.pop %v1162
  %v1164 = vmul.f32 1.0, %v1163
  %v1165 = vadd.f32 %v314, %v1085
  %v1166 = vxor.u32 %v1165, 2147483648
  %v1167 = vmul.f32 %v1166, 1.442695
  %v1168 = vpow.pop %v1167
  %v1169 = vadd.f32 %v1168, 1.0
  %v1170 = vrcp.pop %v1169
  %v1171 = vmul.f32 1.0, %v1170
  %v1172 = vmul.f32 %v1164, %v1155
  %v1173 = vadd.f32 %v430, %v1172
  %v1174 = vtanh.pop %v1173
  %v1175 = vsub.f32 1.0, %v1171
  %v1176 = vmul.f32 %v1175, %v1174
  %v1177 = vmul.f32 %v1171, %v944
  %v1178 = vadd.f32 %v1176, %v1177
  %v1180 = vsel %vm96, %v1178, 0
  %1182 = vmatprep.subr.mxu0 0.0
  %1183 = vmatpush1.msra.mxu0 %v458
  %1184 = vmatprep.subr.mxu0 0.0
  %1185 = vmatpush1.msra.mxu0 %v459
  %1186 = vmatprep.subr.mxu0 0.0
  %1187 = vmatpush1.msra.mxu0 %v460
  %1188 = vmatprep.subr.mxu0 0.0
  %1189 = vmatpush1.msra.mxu0 %v461
  %1190 = vmatprep.subr.mxu0 0.0
  %1191 = vmatpush1.msra.mxu0 0.0
  %1192 = vmatprep.subr.mxu0 0.0
  %1193 = vmatpush1.msra.mxu0 0.0
  %1194 = vmatprep.subr.mxu0 0.0
  %1195 = vmatpush1.msra.mxu0 0.0
  %1196 = vmatprep.subr.mxu0 0.0
  %1197 = vmatpush1.msra.mxu0 0.0
  %1198 = vmatprep.subr.mxu0 0.0
  %1199 = vmatpush1.msra.mxu0 0.0
  %1200 = vmatprep.subr.mxu0 0.0
  %1201 = vmatpush1.msra.mxu0 0.0
  %1202 = vmatprep.subr.mxu0 0.0
  %1203 = vmatpush1.msra.mxu0 0.0
  %1204 = vmatprep.subr.mxu0 0.0
  %1205 = vmatpush1.msra.mxu0 0.0
  %1206 = vmatprep.subr.mxu0 0.0
  %1207 = vmatpush1.msra.mxu0 0.0
  %1208 = vmatprep.subr.mxu0 0.0
  %1209 = vmatpush1.msra.mxu0 0.0
  %1210 = vmatprep.subr.mxu0 0.0
  %1211 = vmatpush1.msra.mxu0 0.0
  %1212 = vmatprep.subr.mxu0 0.0
  %1213 = vmatpush1.msra.mxu0 0.0
  %1214 = vmatprep.subr.mxu0 0.0
  %1215 = vmatpush1.msra.mxu0 0.0
  %1216 = vmatprep.subr.mxu0 0.0
  %1217 = vmatpush1.msra.mxu0 0.0
  %1218 = vmatprep.subr.mxu0 0.0
  %1219 = vmatpush1.msra.mxu0 0.0
  %1220 = vmatprep.subr.mxu0 0.0
  %1221 = vmatpush1.msra.mxu0 0.0
  %1222 = vmatprep.subr.mxu0 0.0
  %1223 = vmatpush1.msra.mxu0 0.0
  %1224 = vmatprep.subr.mxu0 0.0
  %1225 = vmatpush1.msra.mxu0 0.0
  %1226 = vmatprep.subr.mxu0 0.0
  %1227 = vmatpush1.msra.mxu0 0.0
  %1228 = vmatprep.subr.mxu0 0.0
  %1229 = vmatpush1.msra.mxu0 0.0
  %1230 = vmatprep.subr.mxu0 0.0
  %1231 = vmatpush1.msra.mxu0 0.0
  %1232 = vmatprep.subr.mxu0 0.0
  %1233 = vmatpush1.msra.mxu0 0.0
  %1234 = vmatprep.subr.mxu0 0.0
  %1235 = vmatpush1.msra.mxu0 0.0
  %1236 = vmatprep.subr.mxu0 0.0
  %1237 = vmatpush1.msra.mxu0 0.0
  %1238 = vmatprep.subr.mxu0 0.0
  %1239 = vmatpush1.msra.mxu0 0.0
  %1240 = vmatprep.subr.mxu0 0.0
  %1241 = vmatpush1.msra.mxu0 0.0
  %1242 = vmatprep.subr.mxu0 0.0
  %1243 = vmatpush1.msra.mxu0 0.0
  %1244 = vmatprep.subr.mxu0 0.0
  %1245 = vmatpush1.msra.mxu0 0.0
  %1246 = vmatprep.mubr.f32.mxu0 0.0
  %1247 = vmatmul.mubr.f32.gmra.mrb[0].mxu0 %v1180
  %v1248 = vpop.f32.mrb[0].mxu0
  %v1249 = vadd.f32 0.0, %v1248
  %v1250 = vpop.f32.mrb[0].mxu0
  %1251 = vdwg.mxu0
  %1252 = vmatprep.subr.mxu0 0.0
  %1253 = vmatpush1.msra.mxu0 %v462
  %1254 = vmatprep.subr.mxu0 0.0
  %1255 = vmatpush1.msra.mxu0 %v463
  %1256 = vmatprep.subr.mxu0 0.0
  %1257 = vmatpush1.msra.mxu0 %v464
  %1258 = vmatprep.subr.mxu0 0.0
  %1259 = vmatpush1.msra.mxu0 %v465
  %1260 = vmatprep.subr.mxu0 0.0
  %1261 = vmatpush1.msra.mxu0 0.0
  %1262 = vmatprep.subr.mxu0 0.0
  %1263 = vmatpush1.msra.mxu0 0.0
  %1264 = vmatprep.subr.mxu0 0.0
  %1265 = vmatpush1.msra.mxu0 0.0
  %1266 = vmatprep.subr.mxu0 0.0
  %1267 = vmatpush1.msra.mxu0 0.0
  %1268 = vmatprep.subr.mxu0 0.0
  %1269 = vmatpush1.msra.mxu0 0.0
  %1270 = vmatprep.subr.mxu0 0.0
  %1271 = vmatpush1.msra.mxu0 0.0
  %1272 = vmatprep.subr.mxu0 0.0
  %1273 = vmatpush1.msra.mxu0 0.0
  %1274 = vmatprep.subr.mxu0 0.0
  %1275 = vmatpush1.msra.mxu0 0.0
  %1276 = vmatprep.subr.mxu0 0.0
  %1277 = vmatpush1.msra.mxu0 0.0
  %1278 = vmatprep.subr.mxu0 0.0
  %1279 = vmatpush1.msra.mxu0 0.0
  %1280 = vmatprep.subr.mxu0 0.0
  %1281 = vmatpush1.msra.mxu0 0.0
  %1282 = vmatprep.subr.mxu0 0.0
  %1283 = vmatpush1.msra.mxu0 0.0
  %1284 = vmatprep.subr.mxu0 0.0
  %1285 = vmatpush1.msra.mxu0 0.0
  %1286 = vmatprep.subr.mxu0 0.0
  %1287 = vmatpush1.msra.mxu0 0.0
  %1288 = vmatprep.subr.mxu0 0.0
  %1289 = vmatpush1.msra.mxu0 0.0
  %1290 = vmatprep.subr.mxu0 0.0
  %1291 = vmatpush1.msra.mxu0 0.0
  %1292 = vmatprep.subr.mxu0 0.0
  %1293 = vmatpush1.msra.mxu0 0.0
  %1294 = vmatprep.subr.mxu0 0.0
  %1295 = vmatpush1.msra.mxu0 0.0
  %1296 = vmatprep.subr.mxu0 0.0
  %1297 = vmatpush1.msra.mxu0 0.0
  %1298 = vmatprep.subr.mxu0 0.0
  %1299 = vmatpush1.msra.mxu0 0.0
  %1300 = vmatprep.subr.mxu0 0.0
  %1301 = vmatpush1.msra.mxu0 0.0
  %1302 = vmatprep.subr.mxu0 0.0
  %1303 = vmatpush1.msra.mxu0 0.0
  %1304 = vmatprep.subr.mxu0 0.0
  %1305 = vmatpush1.msra.mxu0 0.0
  %1306 = vmatprep.subr.mxu0 0.0
  %1307 = vmatpush1.msra.mxu0 0.0
  %1308 = vmatprep.subr.mxu0 0.0
  %1309 = vmatpush1.msra.mxu0 0.0
  %1310 = vmatprep.subr.mxu0 0.0
  %1311 = vmatpush1.msra.mxu0 0.0
  %1312 = vmatprep.subr.mxu0 0.0
  %1313 = vmatpush1.msra.mxu0 0.0
  %1314 = vmatprep.subr.mxu0 0.0
  %1315 = vmatpush1.msra.mxu0 0.0
  %1316 = vmatprep.mubr.f32.mxu0 0.0
  %1317 = vmatmul.mubr.f32.gmra.mrb[0].mxu0 %v1180
  %v1318 = vpop.f32.mrb[0].mxu0
  %v1319 = vadd.f32 0.0, %v1318
  %v1320 = vpop.f32.mrb[0].mxu0
  %1321 = vdwg.mxu0
  %1322 = vmatprep.subr.mxu0 0.0
  %1323 = vmatpush1.msra.mxu0 %v466
  %1324 = vmatprep.subr.mxu0 0.0
  %1325 = vmatpush1.msra.mxu0 %v467
  %1326 = vmatprep.subr.mxu0 0.0
  %1327 = vmatpush1.msra.mxu0 %v468
  %1328 = vmatprep.subr.mxu0 0.0
  %1329 = vmatpush1.msra.mxu0 %v469
  %1330 = vmatprep.subr.mxu0 0.0
  %1331 = vmatpush1.msra.mxu0 0.0
  %1332 = vmatprep.subr.mxu0 0.0
  %1333 = vmatpush1.msra.mxu0 0.0
  %1334 = vmatprep.subr.mxu0 0.0
  %1335 = vmatpush1.msra.mxu0 0.0
  %1336 = vmatprep.subr.mxu0 0.0
  %1337 = vmatpush1.msra.mxu0 0.0
  %1338 = vmatprep.subr.mxu0 0.0
  %1339 = vmatpush1.msra.mxu0 0.0
  %1340 = vmatprep.subr.mxu0 0.0
  %1341 = vmatpush1.msra.mxu0 0.0
  %1342 = vmatprep.subr.mxu0 0.0
  %1343 = vmatpush1.msra.mxu0 0.0
  %1344 = vmatprep.subr.mxu0 0.0
  %1345 = vmatpush1.msra.mxu0 0.0
  %1346 = vmatprep.subr.mxu0 0.0
  %1347 = vmatpush1.msra.mxu0 0.0
  %1348 = vmatprep.subr.mxu0 0.0
  %1349 = vmatpush1.msra.mxu0 0.0
  %1350 = vmatprep.subr.mxu0 0.0
  %1351 = vmatpush1.msra.mxu0 0.0
  %1352 = vmatprep.subr.mxu0 0.0
  %1353 = vmatpush1.msra.mxu0 0.0
  %1354 = vmatprep.subr.mxu0 0.0
  %1355 = vmatpush1.msra.mxu0 0.0
  %1356 = vmatprep.subr.mxu0 0.0
  %1357 = vmatpush1.msra.mxu0 0.0
  %1358 = vmatprep.subr.mxu0 0.0
  %1359 = vmatpush1.msra.mxu0 0.0
  %1360 = vmatprep.subr.mxu0 0.0
  %1361 = vmatpush1.msra.mxu0 0.0
  %1362 = vmatprep.subr.mxu0 0.0
  %1363 = vmatpush1.msra.mxu0 0.0
  %1364 = vmatprep.subr.mxu0 0.0
  %1365 = vmatpush1.msra.mxu0 0.0
  %1366 = vmatprep.subr.mxu0 0.0
  %1367 = vmatpush1.msra.mxu0 0.0
  %1368 = vmatprep.subr.mxu0 0.0
  %1369 = vmatpush1.msra.mxu0 0.0
  %1370 = vmatprep.subr.mxu0 0.0
  %1371 = vmatpush1.msra.mxu0 0.0
  %1372 = vmatprep.subr.mxu0 0.0
  %1373 = vmatpush1.msra.mxu0 0.0
  %1374 = vmatprep.subr.mxu0 0.0
  %1375 = vmatpush1.msra.mxu0 0.0
  %1376 = vmatprep.subr.mxu0 0.0
  %1377 = vmatpush1.msra.mxu0 0.0
  %1378 = vmatprep.subr.mxu0 0.0
  %1379 = vmatpush1.msra.mxu0 0.0
  %1380 = vmatprep.subr.mxu0 0.0
  %1381 = vmatpush1.msra.mxu0 0.0
  %1382 = vmatprep.subr.mxu0 0.0
  %1383 = vmatpush1.msra.mxu0 0.0
  %1384 = vmatprep.subr.mxu0 0.0
  %1385 = vmatpush1.msra.mxu0 0.0
  %1386 = vmatprep.mubr.f32.mxu0 0.0
  %1387 = vmatmul.mubr.f32.gmra.mrb[0].mxu0 %v1180
  %v1388 = vpop.f32.mrb[0].mxu0
  %v1389 = vadd.f32 %v618, %v1388
  %v1390 = vpop.f32.mrb[0].mxu0
  %1391 = vdwg.mxu0
  %v1392 = vadd.f32 %v203, %v1249
  %v1393 = vxor.u32 %v1392, 2147483648
  %v1394 = vmul.f32 %v1393, 1.442695
  %v1395 = vpow.pop %v1394
  %v1396 = vadd.f32 %v1395, 1.0
  %v1397 = vrcp.pop %v1396
  %v1398 = vmul.f32 1.0, %v1397
  %v1399 = vadd.f32 %v319, %v1319
  %v1400 = vxor.u32 %v1399, 2147483648
  %v1401 = vmul.f32 %v1400, 1.442695
  %v1402 = vpow.pop %v1401
  %v1403 = vadd.f32 %v1402, 1.0
  %v1404 = vrcp.pop %v1403
  %v1405 = vmul.f32 1.0, %v1404
  %v1406 = vmul.f32 %v1398, %v1389
  %v1407 = vadd.f32 %v435, %v1406
  %v1408 = vtanh.pop %v1407
  %v1409 = vsub.f32 1.0, %v1405
  %v1410 = vmul.f32 %v1409, %v1408
  %v1411 = vmul.f32 %v1405, %v1178
  %v1412 = vadd.f32 %v1410, %v1411
  %v1414 = vsel %vm96, %v1412, 0
  %1416 = vmatprep.subr.mxu0 0.0
  %1417 = vmatpush1.msra.mxu0 %v458
  %1418 = vmatprep.subr.mxu0 0.0
  %1419 = vmatpush1.msra.mxu0 %v459
  %1420 = vmatprep.subr.mxu0 0.0
  %1421 = vmatpush1.msra.mxu0 %v460
  %1422 = vmatprep.subr.mxu0 0.0
  %1423 = vmatpush1.msra.mxu0 %v461
  %1424 = vmatprep.subr.mxu0 0.0
  %1425 = vmatpush1.msra.mxu0 0.0
  %1426 = vmatprep.subr.mxu0 0.0
  %1427 = vmatpush1.msra.mxu0 0.0
  %1428 = vmatprep.subr.mxu0 0.0
  %1429 = vmatpush1.msra.mxu0 0.0
  %1430 = vmatprep.subr.mxu0 0.0
  %1431 = vmatpush1.msra.mxu0 0.0
  %1432 = vmatprep.subr.mxu0 0.0
  %1433 = vmatpush1.msra.mxu0 0.0
  %1434 = vmatprep.subr.mxu0 0.0
  %1435 = vmatpush1.msra.mxu0 0.0
  %1436 = vmatprep.subr.mxu0 0.0
  %1437 = vmatpush1.msra.mxu0 0.0
  %1438 = vmatprep.subr.mxu0 0.0
  %1439 = vmatpush1.msra.mxu0 0.0
  %1440 = vmatprep.subr.mxu0 0.0
  %1441 = vmatpush1.msra.mxu0 0.0
  %1442 = vmatprep.subr.mxu0 0.0
  %1443 = vmatpush1.msra.mxu0 0.0
  %1444 = vmatprep.subr.mxu0 0.0
  %1445 = vmatpush1.msra.mxu0 0.0
  %1446 = vmatprep.subr.mxu0 0.0
  %1447 = vmatpush1.msra.mxu0 0.0
  %1448 = vmatprep.subr.mxu0 0.0
  %1449 = vmatpush1.msra.mxu0 0.0
  %1450 = vmatprep.subr.mxu0 0.0
  %1451 = vmatpush1.msra.mxu0 0.0
  %1452 = vmatprep.subr.mxu0 0.0
  %1453 = vmatpush1.msra.mxu0 0.0
  %1454 = vmatprep.subr.mxu0 0.0
  %1455 = vmatpush1.msra.mxu0 0.0
  %1456 = vmatprep.subr.mxu0 0.0
  %1457 = vmatpush1.msra.mxu0 0.0
  %1458 = vmatprep.subr.mxu0 0.0
  %1459 = vmatpush1.msra.mxu0 0.0
  %1460 = vmatprep.subr.mxu0 0.0
  %1461 = vmatpush1.msra.mxu0 0.0
  %1462 = vmatprep.subr.mxu0 0.0
  %1463 = vmatpush1.msra.mxu0 0.0
  %1464 = vmatprep.subr.mxu0 0.0
  %1465 = vmatpush1.msra.mxu0 0.0
  %1466 = vmatprep.subr.mxu0 0.0
  %1467 = vmatpush1.msra.mxu0 0.0
  %1468 = vmatprep.subr.mxu0 0.0
  %1469 = vmatpush1.msra.mxu0 0.0
  %1470 = vmatprep.subr.mxu0 0.0
  %1471 = vmatpush1.msra.mxu0 0.0
  %1472 = vmatprep.subr.mxu0 0.0
  %1473 = vmatpush1.msra.mxu0 0.0
  %1474 = vmatprep.subr.mxu0 0.0
  %1475 = vmatpush1.msra.mxu0 0.0
  %1476 = vmatprep.subr.mxu0 0.0
  %1477 = vmatpush1.msra.mxu0 0.0
  %1478 = vmatprep.subr.mxu0 0.0
  %1479 = vmatpush1.msra.mxu0 0.0
  %1480 = vmatprep.mubr.f32.mxu0 0.0
  %1481 = vmatmul.mubr.f32.gmra.mrb[0].mxu0 %v1414
  %v1482 = vpop.f32.mrb[0].mxu0
  %v1483 = vadd.f32 0.0, %v1482
  %v1484 = vpop.f32.mrb[0].mxu0
  %1485 = vdwg.mxu0
  %1486 = vmatprep.subr.mxu0 0.0
  %1487 = vmatpush1.msra.mxu0 %v462
  %1488 = vmatprep.subr.mxu0 0.0
  %1489 = vmatpush1.msra.mxu0 %v463
  %1490 = vmatprep.subr.mxu0 0.0
  %1491 = vmatpush1.msra.mxu0 %v464
  %1492 = vmatprep.subr.mxu0 0.0
  %1493 = vmatpush1.msra.mxu0 %v465
  %1494 = vmatprep.subr.mxu0 0.0
  %1495 = vmatpush1.msra.mxu0 0.0
  %1496 = vmatprep.subr.mxu0 0.0
  %1497 = vmatpush1.msra.mxu0 0.0
  %1498 = vmatprep.subr.mxu0 0.0
  %1499 = vmatpush1.msra.mxu0 0.0
  %1500 = vmatprep.subr.mxu0 0.0
  %1501 = vmatpush1.msra.mxu0 0.0
  %1502 = vmatprep.subr.mxu0 0.0
  %1503 = vmatpush1.msra.mxu0 0.0
  %1504 = vmatprep.subr.mxu0 0.0
  %1505 = vmatpush1.msra.mxu0 0.0
  %1506 = vmatprep.subr.mxu0 0.0
  %1507 = vmatpush1.msra.mxu0 0.0
  %1508 = vmatprep.subr.mxu0 0.0
  %1509 = vmatpush1.msra.mxu0 0.0
  %1510 = vmatprep.subr.mxu0 0.0
  %1511 = vmatpush1.msra.mxu0 0.0
  %1512 = vmatprep.subr.mxu0 0.0
  %1513 = vmatpush1.msra.mxu0 0.0
  %1514 = vmatprep.subr.mxu0 0.0
  %1515 = vmatpush1.msra.mxu0 0.0
  %1516 = vmatprep.subr.mxu0 0.0
  %1517 = vmatpush1.msra.mxu0 0.0
  %1518 = vmatprep.subr.mxu0 0.0
  %1519 = vmatpush1.msra.mxu0 0.0
  %1520 = vmatprep.subr.mxu0 0.0
  %1521 = vmatpush1.msra.mxu0 0.0
  %1522 = vmatprep.subr.mxu0 0.0
  %1523 = vmatpush1.msra.mxu0 0.0
  %1524 = vmatprep.subr.mxu0 0.0
  %1525 = vmatpush1.msra.mxu0 0.0
  %1526 = vmatprep.subr.mxu0 0.0
  %1527 = vmatpush1.msra.mxu0 0.0
  %1528 = vmatprep.subr.mxu0 0.0
  %1529 = vmatpush1.msra.mxu0 0.0
  %1530 = vmatprep.subr.mxu0 0.0
  %1531 = vmatpush1.msra.mxu0 0.0
  %1532 = vmatprep.subr.mxu0 0.0
  %1533 = vmatpush1.msra.mxu0 0.0
  %1534 = vmatprep.subr.mxu0 0.0
  %1535 = vmatpush1.msra.mxu0 0.0
  %1536 = vmatprep.subr.mxu0 0.0
  %1537 = vmatpush1.msra.mxu0 0.0
  %1538 = vmatprep.subr.mxu0 0.0
  %1539 = vmatpush1.msra.mxu0 0.0
  %1540 = vmatprep.subr.mxu0 0.0
  %1541 = vmatpush1.msra.mxu0 0.0
  %1542 = vmatprep.subr.mxu0 0.0
  %1543 = vmatpush1.msra.mxu0 0.0
  %1544 = vmatprep.subr.mxu0 0.0
  %1545 = vmatpush1.msra.mxu0 0.0
  %1546 = vmatprep.subr.mxu0 0.0
  %1547 = vmatpush1.msra.mxu0 0.0
  %1548 = vmatprep.subr.mxu0 0.0
  %1549 = vmatpush1.msra.mxu0 0.0
  %1550 = vmatprep.mubr.f32.mxu0 0.0
  %1551 = vmatmul.mubr.f32.gmra.mrb[0].mxu0 %v1414
  %v1552 = vpop.f32.mrb[0].mxu0
  %v1553 = vadd.f32 0.0, %v1552
  %v1554 = vpop.f32.mrb[0].mxu0
  %1555 = vdwg.mxu0
  %1556 = vmatprep.subr.mxu0 0.0
  %1557 = vmatpush1.msra.mxu0 %v466
  %1558 = vmatprep.subr.mxu0 0.0
  %1559 = vmatpush1.msra.mxu0 %v467
  %1560 = vmatprep.subr.mxu0 0.0
  %1561 = vmatpush1.msra.mxu0 %v468
  %1562 = vmatprep.subr.mxu0 0.0
  %1563 = vmatpush1.msra.mxu0 %v469
  %1564 = vmatprep.subr.mxu0 0.0
  %1565 = vmatpush1.msra.mxu0 0.0
  %1566 = vmatprep.subr.mxu0 0.0
  %1567 = vmatpush1.msra.mxu0 0.0
  %1568 = vmatprep.subr.mxu0 0.0
  %1569 = vmatpush1.msra.mxu0 0.0
  %1570 = vmatprep.subr.mxu0 0.0
  %1571 = vmatpush1.msra.mxu0 0.0
  %1572 = vmatprep.subr.mxu0 0.0
  %1573 = vmatpush1.msra.mxu0 0.0
  %1574 = vmatprep.subr.mxu0 0.0
  %1575 = vmatpush1.msra.mxu0 0.0
  %1576 = vmatprep.subr.mxu0 0.0
  %1577 = vmatpush1.msra.mxu0 0.0
  %1578 = vmatprep.subr.mxu0 0.0
  %1579 = vmatpush1.msra.mxu0 0.0
  %1580 = vmatprep.subr.mxu0 0.0
  %1581 = vmatpush1.msra.mxu0 0.0
  %1582 = vmatprep.subr.mxu0 0.0
  %1583 = vmatpush1.msra.mxu0 0.0
  %1584 = vmatprep.subr.mxu0 0.0
  %1585 = vmatpush1.msra.mxu0 0.0
  %1586 = vmatprep.subr.mxu0 0.0
  %1587 = vmatpush1.msra.mxu0 0.0
  %1588 = vmatprep.subr.mxu0 0.0
  %1589 = vmatpush1.msra.mxu0 0.0
  %1590 = vmatprep.subr.mxu0 0.0
  %1591 = vmatpush1.msra.mxu0 0.0
  %1592 = vmatprep.subr.mxu0 0.0
  %1593 = vmatpush1.msra.mxu0 0.0
  %1594 = vmatprep.subr.mxu0 0.0
  %1595 = vmatpush1.msra.mxu0 0.0
  %1596 = vmatprep.subr.mxu0 0.0
  %1597 = vmatpush1.msra.mxu0 0.0
  %1598 = vmatprep.subr.mxu0 0.0
  %1599 = vmatpush1.msra.mxu0 0.0
  %1600 = vmatprep.subr.mxu0 0.0
  %1601 = vmatpush1.msra.mxu0 0.0
  %1602 = vmatprep.subr.mxu0 0.0
  %1603 = vmatpush1.msra.mxu0 0.0
  %1604 = vmatprep.subr.mxu0 0.0
  %1605 = vmatpush1.msra.mxu0 0.0
  %1606 = vmatprep.subr.mxu0 0.0
  %1607 = vmatpush1.msra.mxu0 0.0
  %1608 = vmatprep.subr.mxu0 0.0
  %1609 = vmatpush1.msra.mxu0 0.0
  %1610 = vmatprep.subr.mxu0 0.0
  %1611 = vmatpush1.msra.mxu0 0.0
  %1612 = vmatprep.subr.mxu0 0.0
  %1613 = vmatpush1.msra.mxu0 0.0
  %1614 = vmatprep.subr.mxu0 0.0
  %1615 = vmatpush1.msra.mxu0 0.0
  %1616 = vmatprep.subr.mxu0 0.0
  %1617 = vmatpush1.msra.mxu0 0.0
  %1618 = vmatprep.subr.mxu0 0.0
  %1619 = vmatpush1.msra.mxu0 0.0
  %1620 = vmatprep.mubr.f32.mxu0 0.0
  %1621 = vmatmul.mubr.f32.gmra.mrb[0].mxu0 %v1414
  %v1622 = vpop.f32.mrb[0].mxu0
  %v1623 = vadd.f32 %v618, %v1622
  %v1624 = vpop.f32.mrb[0].mxu0
  %1625 = vdwg.mxu0
  %v1626 = vadd.f32 %v208, %v1483
  %v1627 = vxor.u32 %v1626, 2147483648
  %v1628 = vmul.f32 %v1627, 1.442695
  %v1629 = vpow.pop %v1628
  %v1630 = vadd.f32 %v1629, 1.0
  %v1631 = vrcp.pop %v1630
  %v1632 = vmul.f32 1.0, %v1631
  %v1633 = vadd.f32 %v324, %v1553
  %v1634 = vxor.u32 %v1633, 2147483648
  %v1635 = vmul.f32 %v1634, 1.442695
  %v1636 = vpow.pop %v1635
  %v1637 = vadd.f32 %v1636, 1.0
  %v1638 = vrcp.pop %v1637
  %v1639 = vmul.f32 1.0, %v1638
  %v1640 = vmul.f32 %v1632, %v1623
  %v1641 = vadd.f32 %v440, %v1640
  %v1642 = vtanh.pop %v1641
  %v1643 = vsub.f32 1.0, %v1639
  %v1644 = vmul.f32 %v1643, %v1642
  %v1645 = vmul.f32 %v1639, %v1412
  %v1646 = vadd.f32 %v1644, %v1645
  %v1648 = vsel %vm96, %v1646, 0
  %1650 = vmatprep.subr.mxu0 0.0
  %1651 = vmatpush1.msra.mxu0 %v458
  %1652 = vmatprep.subr.mxu0 0.0
  %1653 = vmatpush1.msra.mxu0 %v459
  %1654 = vmatprep.subr.mxu0 0.0
  %1655 = vmatpush1.msra.mxu0 %v460
  %1656 = vmatprep.subr.mxu0 0.0
  %1657 = vmatpush1.msra.mxu0 %v461
  %1658 = vmatprep.subr.mxu0 0.0
  %1659 = vmatpush1.msra.mxu0 0.0
  %1660 = vmatprep.subr.mxu0 0.0
  %1661 = vmatpush1.msra.mxu0 0.0
  %1662 = vmatprep.subr.mxu0 0.0
  %1663 = vmatpush1.msra.mxu0 0.0
  %1664 = vmatprep.subr.mxu0 0.0
  %1665 = vmatpush1.msra.mxu0 0.0
  %1666 = vmatprep.subr.mxu0 0.0
  %1667 = vmatpush1.msra.mxu0 0.0
  %1668 = vmatprep.subr.mxu0 0.0
  %1669 = vmatpush1.msra.mxu0 0.0
  %1670 = vmatprep.subr.mxu0 0.0
  %1671 = vmatpush1.msra.mxu0 0.0
  %1672 = vmatprep.subr.mxu0 0.0
  %1673 = vmatpush1.msra.mxu0 0.0
  %1674 = vmatprep.subr.mxu0 0.0
  %1675 = vmatpush1.msra.mxu0 0.0
  %1676 = vmatprep.subr.mxu0 0.0
  %1677 = vmatpush1.msra.mxu0 0.0
  %1678 = vmatprep.subr.mxu0 0.0
  %1679 = vmatpush1.msra.mxu0 0.0
  %1680 = vmatprep.subr.mxu0 0.0
  %1681 = vmatpush1.msra.mxu0 0.0
  %1682 = vmatprep.subr.mxu0 0.0
  %1683 = vmatpush1.msra.mxu0 0.0
  %1684 = vmatprep.subr.mxu0 0.0
  %1685 = vmatpush1.msra.mxu0 0.0
  %1686 = vmatprep.subr.mxu0 0.0
  %1687 = vmatpush1.msra.mxu0 0.0
  %1688 = vmatprep.subr.mxu0 0.0
  %1689 = vmatpush1.msra.mxu0 0.0
  %1690 = vmatprep.subr.mxu0 0.0
  %1691 = vmatpush1.msra.mxu0 0.0
  %1692 = vmatprep.subr.mxu0 0.0
  %1693 = vmatpush1.msra.mxu0 0.0
  %1694 = vmatprep.subr.mxu0 0.0
  %1695 = vmatpush1.msra.mxu0 0.0
  %1696 = vmatprep.subr.mxu0 0.0
  %1697 = vmatpush1.msra.mxu0 0.0
  %1698 = vmatprep.subr.mxu0 0.0
  %1699 = vmatpush1.msra.mxu0 0.0
  %1700 = vmatprep.subr.mxu0 0.0
  %1701 = vmatpush1.msra.mxu0 0.0
  %1702 = vmatprep.subr.mxu0 0.0
  %1703 = vmatpush1.msra.mxu0 0.0
  %1704 = vmatprep.subr.mxu0 0.0
  %1705 = vmatpush1.msra.mxu0 0.0
  %1706 = vmatprep.subr.mxu0 0.0
  %1707 = vmatpush1.msra.mxu0 0.0
  %1708 = vmatprep.subr.mxu0 0.0
  %1709 = vmatpush1.msra.mxu0 0.0
  %1710 = vmatprep.subr.mxu0 0.0
  %1711 = vmatpush1.msra.mxu0 0.0
  %1712 = vmatprep.subr.mxu0 0.0
  %1713 = vmatpush1.msra.mxu0 0.0
  %1714 = vmatprep.mubr.f32.mxu0 0.0
  %1715 = vmatmul.mubr.f32.gmra.mrb[0].mxu0 %v1648
  %v1716 = vpop.f32.mrb[0].mxu0
  %v1717 = vadd.f32 0.0, %v1716
  %v1718 = vpop.f32.mrb[0].mxu0
  %1719 = vdwg.mxu0
  %1720 = vmatprep.subr.mxu0 0.0
  %1721 = vmatpush1.msra.mxu0 %v462
  %1722 = vmatprep.subr.mxu0 0.0
  %1723 = vmatpush1.msra.mxu0 %v463
  %1724 = vmatprep.subr.mxu0 0.0
  %1725 = vmatpush1.msra.mxu0 %v464
  %1726 = vmatprep.subr.mxu0 0.0
  %1727 = vmatpush1.msra.mxu0 %v465
  %1728 = vmatprep.subr.mxu0 0.0
  %1729 = vmatpush1.msra.mxu0 0.0
  %1730 = vmatprep.subr.mxu0 0.0
  %1731 = vmatpush1.msra.mxu0 0.0
  %1732 = vmatprep.subr.mxu0 0.0
  %1733 = vmatpush1.msra.mxu0 0.0
  %1734 = vmatprep.subr.mxu0 0.0
  %1735 = vmatpush1.msra.mxu0 0.0
  %1736 = vmatprep.subr.mxu0 0.0
  %1737 = vmatpush1.msra.mxu0 0.0
  %1738 = vmatprep.subr.mxu0 0.0
  %1739 = vmatpush1.msra.mxu0 0.0
  %1740 = vmatprep.subr.mxu0 0.0
  %1741 = vmatpush1.msra.mxu0 0.0
  %1742 = vmatprep.subr.mxu0 0.0
  %1743 = vmatpush1.msra.mxu0 0.0
  %1744 = vmatprep.subr.mxu0 0.0
  %1745 = vmatpush1.msra.mxu0 0.0
  %1746 = vmatprep.subr.mxu0 0.0
  %1747 = vmatpush1.msra.mxu0 0.0
  %1748 = vmatprep.subr.mxu0 0.0
  %1749 = vmatpush1.msra.mxu0 0.0
  %1750 = vmatprep.subr.mxu0 0.0
  %1751 = vmatpush1.msra.mxu0 0.0
  %1752 = vmatprep.subr.mxu0 0.0
  %1753 = vmatpush1.msra.mxu0 0.0
  %1754 = vmatprep.subr.mxu0 0.0
  %1755 = vmatpush1.msra.mxu0 0.0
  %1756 = vmatprep.subr.mxu0 0.0
  %1757 = vmatpush1.msra.mxu0 0.0
  %1758 = vmatprep.subr.mxu0 0.0
  %1759 = vmatpush1.msra.mxu0 0.0
  %1760 = vmatprep.subr.mxu0 0.0
  %1761 = vmatpush1.msra.mxu0 0.0
  %1762 = vmatprep.subr.mxu0 0.0
  %1763 = vmatpush1.msra.mxu0 0.0
  %1764 = vmatprep.subr.mxu0 0.0
  %1765 = vmatpush1.msra.mxu0 0.0
  %1766 = vmatprep.subr.mxu0 0.0
  %1767 = vmatpush1.msra.mxu0 0.0
  %1768 = vmatprep.subr.mxu0 0.0
  %1769 = vmatpush1.msra.mxu0 0.0
  %1770 = vmatprep.subr.mxu0 0.0
  %1771 = vmatpush1.msra.mxu0 0.0
  %1772 = vmatprep.subr.mxu0 0.0
  %1773 = vmatpush1.msra.mxu0 0.0
  %1774 = vmatprep.subr.mxu0 0.0
  %1775 = vmatpush1.msra.mxu0 0.0
  %1776 = vmatprep.subr.mxu0 0.0
  %1777 = vmatpush1.msra.mxu0 0.0
  %1778 = vmatprep.subr.mxu0 0.0
  %1779 = vmatpush1.msra.mxu0 0.0
  %1780 = vmatprep.subr.mxu0 0.0
  %1781 = vmatpush1.msra.mxu0 0.0
  %1782 = vmatprep.subr.mxu0 0.0
  %1783 = vmatpush1.msra.mxu0 0.0
  %1784 = vmatprep.mubr.f32.mxu0 0.0
  %1785 = vmatmul.mubr.f32.gmra.mrb[0].mxu0 %v1648
  %v1786 = vpop.f32.mrb[0].mxu0
  %v1787 = vadd.f32 0.0, %v1786
  %v1788 = vpop.f32.mrb[0].mxu0
  %1789 = vdwg.mxu0
  %1790 = vmatprep.subr.mxu0 0.0
  %1791 = vmatpush1.msra.mxu0 %v466
  %1792 = vmatprep.subr.mxu0 0.0
  %1793 = vmatpush1.msra.mxu0 %v467
  %1794 = vmatprep.subr.mxu0 0.0
  %1795 = vmatpush1.msra.mxu0 %v468
  %1796 = vmatprep.subr.mxu0 0.0
  %1797 = vmatpush1.msra.mxu0 %v469
  %1798 = vmatprep.subr.mxu0 0.0
  %1799 = vmatpush1.msra.mxu0 0.0
  %1800 = vmatprep.subr.mxu0 0.0
  %1801 = vmatpush1.msra.mxu0 0.0
  %1802 = vmatprep.subr.mxu0 0.0
  %1803 = vmatpush1.msra.mxu0 0.0
  %1804 = vmatprep.subr.mxu0 0.0
  %1805 = vmatpush1.msra.mxu0 0.0
  %1806 = vmatprep.subr.mxu0 0.0
  %1807 = vmatpush1.msra.mxu0 0.0
  %1808 = vmatprep.subr.mxu0 0.0
  %1809 = vmatpush1.msra.mxu0 0.0
  %1810 = vmatprep.subr.mxu0 0.0
  %1811 = vmatpush1.msra.mxu0 0.0
  %1812 = vmatprep.subr.mxu0 0.0
  %1813 = vmatpush1.msra.mxu0 0.0
  %1814 = vmatprep.subr.mxu0 0.0
  %1815 = vmatpush1.msra.mxu0 0.0
  %1816 = vmatprep.subr.mxu0 0.0
  %1817 = vmatpush1.msra.mxu0 0.0
  %1818 = vmatprep.subr.mxu0 0.0
  %1819 = vmatpush1.msra.mxu0 0.0
  %1820 = vmatprep.subr.mxu0 0.0
  %1821 = vmatpush1.msra.mxu0 0.0
  %1822 = vmatprep.subr.mxu0 0.0
  %1823 = vmatpush1.msra.mxu0 0.0
  %1824 = vmatprep.subr.mxu0 0.0
  %1825 = vmatpush1.msra.mxu0 0.0
  %1826 = vmatprep.subr.mxu0 0.0
  %1827 = vmatpush1.msra.mxu0 0.0
  %1828 = vmatprep.subr.mxu0 0.0
  %1829 = vmatpush1.msra.mxu0 0.0
  %1830 = vmatprep.subr.mxu0 0.0
  %1831 = vmatpush1.msra.mxu0 0.0
  %1832 = vmatprep.subr.mxu0 0.0
  %1833 = vmatpush1.msra.mxu0 0.0
  %1834 = vmatprep.subr.mxu0 0.0
  %1835 = vmatpush1.msra.mxu0 0.0
  %1836 = vmatprep.subr.mxu0 0.0
  %1837 = vmatpush1.msra.mxu0 0.0
  %1838 = vmatprep.subr.mxu0 0.0
  %1839 = vmatpush1.msra.mxu0 0.0
  %1840 = vmatprep.subr.mxu0 0.0
  %1841 = vmatpush1.msra.mxu0 0.0
  %1842 = vmatprep.subr.mxu0 0.0
  %1843 = vmatpush1.msra.mxu0 0.0
  %1844 = vmatprep.subr.mxu0 0.0
  %1845 = vmatpush1.msra.mxu0 0.0
  %1846 = vmatprep.subr.mxu0 0.0
  %1847 = vmatpush1.msra.mxu0 0.0
  %1848 = vmatprep.subr.mxu0 0.0
  %1849 = vmatpush1.msra.mxu0 0.0
  %1850 = vmatprep.subr.mxu0 0.0
  %1851 = vmatpush1.msra.mxu0 0.0
  %1852 = vmatprep.subr.mxu0 0.0
  %1853 = vmatpush1.msra.mxu0 0.0
  %1854 = vmatprep.mubr.f32.mxu0 0.0
  %1855 = vmatmul.mubr.f32.gmra.mrb[0].mxu0 %v1648
  %v1856 = vpop.f32.mrb[0].mxu0
  %v1857 = vadd.f32 %v618, %v1856
  %v1858 = vpop.f32.mrb[0].mxu0
  %1859 = vdwg.mxu0
  %v1860 = vadd.f32 %v213, %v1717
  %v1861 = vxor.u32 %v1860, 2147483648
  %v1862 = vmul.f32 %v1861, 1.442695
  %v1863 = vpow.pop %v1862
  %v1864 = vadd.f32 %v1863, 1.0
  %v1865 = vrcp.pop %v1864
  %v1866 = vmul.f32 1.0, %v1865
  %v1867 = vadd.f32 %v329, %v1787
  %v1868 = vxor.u32 %v1867, 2147483648
  %v1869 = vmul.f32 %v1868, 1.442695
  %v1870 = vpow.pop %v1869
  %v1871 = vadd.f32 %v1870, 1.0
  %v1872 = vrcp.pop %v1871
  %v1873 = vmul.f32 1.0, %v1872
  %v1874 = vmul.f32 %v1866, %v1857
  %v1875 = vadd.f32 %v445, %v1874
  %v1876 = vtanh.pop %v1875
  %v1877 = vsub.f32 1.0, %v1873
  %v1878 = vmul.f32 %v1877, %v1876
  %v1879 = vmul.f32 %v1873, %v1646
  %v1880 = vadd.f32 %v1878, %v1879
  %v1882 = vsel %vm96, %v1880, 0
  %1884 = vmatprep.subr.mxu0 0.0
  %1885 = vmatpush1.msra.mxu0 %v458
  %1886 = vmatprep.subr.mxu0 0.0
  %1887 = vmatpush1.msra.mxu0 %v459
  %1888 = vmatprep.subr.mxu0 0.0
  %1889 = vmatpush1.msra.mxu0 %v460
  %1890 = vmatprep.subr.mxu0 0.0
  %1891 = vmatpush1.msra.mxu0 %v461
  %1892 = vmatprep.subr.mxu0 0.0
  %1893 = vmatpush1.msra.mxu0 0.0
  %1894 = vmatprep.subr.mxu0 0.0
  %1895 = vmatpush1.msra.mxu0 0.0
  %1896 = vmatprep.subr.mxu0 0.0
  %1897 = vmatpush1.msra.mxu0 0.0
  %1898 = vmatprep.subr.mxu0 0.0
  %1899 = vmatpush1.msra.mxu0 0.0
  %1900 = vmatprep.subr.mxu0 0.0
  %1901 = vmatpush1.msra.mxu0 0.0
  %1902 = vmatprep.subr.mxu0 0.0
  %1903 = vmatpush1.msra.mxu0 0.0
  %1904 = vmatprep.subr.mxu0 0.0
  %1905 = vmatpush1.msra.mxu0 0.0
  %1906 = vmatprep.subr.mxu0 0.0
  %1907 = vmatpush1.msra.mxu0 0.0
  %1908 = vmatprep.subr.mxu0 0.0
  %1909 = vmatpush1.msra.mxu0 0.0
  %1910 = vmatprep.subr.mxu0 0.0
  %1911 = vmatpush1.msra.mxu0 0.0
  %1912 = vmatprep.subr.mxu0 0.0
  %1913 = vmatpush1.msra.mxu0 0.0
  %1914 = vmatprep.subr.mxu0 0.0
  %1915 = vmatpush1.msra.mxu0 0.0
  %1916 = vmatprep.subr.mxu0 0.0
  %1917 = vmatpush1.msra.mxu0 0.0
  %1918 = vmatprep.subr.mxu0 0.0
  %1919 = vmatpush1.msra.mxu0 0.0
  %1920 = vmatprep.subr.mxu0 0.0
  %1921 = vmatpush1.msra.mxu0 0.0
  %1922 = vmatprep.subr.mxu0 0.0
  %1923 = vmatpush1.msra.mxu0 0.0
  %1924 = vmatprep.subr.mxu0 0.0
  %1925 = vmatpush1.msra.mxu0 0.0
  %1926 = vmatprep.subr.mxu0 0.0
  %1927 = vmatpush1.msra.mxu0 0.0
  %1928 = vmatprep.subr.mxu0 0.0
  %1929 = vmatpush1.msra.mxu0 0.0
  %1930 = vmatprep.subr.mxu0 0.0
  %1931 = vmatpush1.msra.mxu0 0.0
  %1932 = vmatprep.subr.mxu0 0.0
  %1933 = vmatpush1.msra.mxu0 0.0
  %1934 = vmatprep.subr.mxu0 0.0
  %1935 = vmatpush1.msra.mxu0 0.0
  %1936 = vmatprep.subr.mxu0 0.0
  %1937 = vmatpush1.msra.mxu0 0.0
  %1938 = vmatprep.subr.mxu0 0.0
  %1939 = vmatpush1.msra.mxu0 0.0
  %1940 = vmatprep.subr.mxu0 0.0
  %1941 = vmatpush1.msra.mxu0 0.0
  %1942 = vmatprep.subr.mxu0 0.0
  %1943 = vmatpush1.msra.mxu0 0.0
  %1944 = vmatprep.subr.mxu0 0.0
  %1945 = vmatpush1.msra.mxu0 0.0
  %1946 = vmatprep.subr.mxu0 0.0
  %1947 = vmatpush1.msra.mxu0 0.0
  %1948 = vmatprep.mubr.f32.mxu0 0.0
  %1949 = vmatmul.mubr.f32.gmra.mrb[0].mxu0 %v1882
  %v1950 = vpop.f32.mrb[0].mxu0
  %v1951 = vadd.f32 0.0, %v1950
  %v1952 = vpop.f32.mrb[0].mxu0
  %1953 = vdwg.mxu0
  %1954 = vmatprep.subr.mxu0 0.0
  %1955 = vmatpush1.msra.mxu0 %v462
  %1956 = vmatprep.subr.mxu0 0.0
  %1957 = vmatpush1.msra.mxu0 %v463
  %1958 = vmatprep.subr.mxu0 0.0
  %1959 = vmatpush1.msra.mxu0 %v464
  %1960 = vmatprep.subr.mxu0 0.0
  %1961 = vmatpush1.msra.mxu0 %v465
  %1962 = vmatprep.subr.mxu0 0.0
  %1963 = vmatpush1.msra.mxu0 0.0
  %1964 = vmatprep.subr.mxu0 0.0
  %1965 = vmatpush1.msra.mxu0 0.0
  %1966 = vmatprep.subr.mxu0 0.0
  %1967 = vmatpush1.msra.mxu0 0.0
  %1968 = vmatprep.subr.mxu0 0.0
  %1969 = vmatpush1.msra.mxu0 0.0
  %1970 = vmatprep.subr.mxu0 0.0
  %1971 = vmatpush1.msra.mxu0 0.0
  %1972 = vmatprep.subr.mxu0 0.0
  %1973 = vmatpush1.msra.mxu0 0.0
  %1974 = vmatprep.subr.mxu0 0.0
  %1975 = vmatpush1.msra.mxu0 0.0
  %1976 = vmatprep.subr.mxu0 0.0
  %1977 = vmatpush1.msra.mxu0 0.0
  %1978 = vmatprep.subr.mxu0 0.0
  %1979 = vmatpush1.msra.mxu0 0.0
  %1980 = vmatprep.subr.mxu0 0.0
  %1981 = vmatpush1.msra.mxu0 0.0
  %1982 = vmatprep.subr.mxu0 0.0
  %1983 = vmatpush1.msra.mxu0 0.0
  %1984 = vmatprep.subr.mxu0 0.0
  %1985 = vmatpush1.msra.mxu0 0.0
  %1986 = vmatprep.subr.mxu0 0.0
  %1987 = vmatpush1.msra.mxu0 0.0
  %1988 = vmatprep.subr.mxu0 0.0
  %1989 = vmatpush1.msra.mxu0 0.0
  %1990 = vmatprep.subr.mxu0 0.0
  %1991 = vmatpush1.msra.mxu0 0.0
  %1992 = vmatprep.subr.mxu0 0.0
  %1993 = vmatpush1.msra.mxu0 0.0
  %1994 = vmatprep.subr.mxu0 0.0
  %1995 = vmatpush1.msra.mxu0 0.0
  %1996 = vmatprep.subr.mxu0 0.0
  %1997 = vmatpush1.msra.mxu0 0.0
  %1998 = vmatprep.subr.mxu0 0.0
  %1999 = vmatpush1.msra.mxu0 0.0
  %2000 = vmatprep.subr.mxu0 0.0
  %2001 = vmatpush1.msra.mxu0 0.0
  %2002 = vmatprep.subr.mxu0 0.0
  %2003 = vmatpush1.msra.mxu0 0.0
  %2004 = vmatprep.subr.mxu0 0.0
  %2005 = vmatpush1.msra.mxu0 0.0
  %2006 = vmatprep.subr.mxu0 0.0
  %2007 = vmatpush1.msra.mxu0 0.0
  %2008 = vmatprep.subr.mxu0 0.0
  %2009 = vmatpush1.msra.mxu0 0.0
  %2010 = vmatprep.subr.mxu0 0.0
  %2011 = vmatpush1.msra.mxu0 0.0
  %2012 = vmatprep.subr.mxu0 0.0
  %2013 = vmatpush1.msra.mxu0 0.0
  %2014 = vmatprep.subr.mxu0 0.0
  %2015 = vmatpush1.msra.mxu0 0.0
  %2016 = vmatprep.subr.mxu0 0.0
  %2017 = vmatpush1.msra.mxu0 0.0
  %2018 = vmatprep.mubr.f32.mxu0 0.0
  %2019 = vmatmul.mubr.f32.gmra.mrb[0].mxu0 %v1882
  %v2020 = vpop.f32.mrb[0].mxu0
  %v2021 = vadd.f32 0.0, %v2020
  %v2022 = vpop.f32.mrb[0].mxu0
  %2023 = vdwg.mxu0
  %2024 = vmatprep.subr.mxu0 0.0
  %2025 = vmatpush1.msra.mxu0 %v466
  %2026 = vmatprep.subr.mxu0 0.0
  %2027 = vmatpush1.msra.mxu0 %v467
  %2028 = vmatprep.subr.mxu0 0.0
  %2029 = vmatpush1.msra.mxu0 %v468
  %2030 = vmatprep.subr.mxu0 0.0
  %2031 = vmatpush1.msra.mxu0 %v469
  %2032 = vmatprep.subr.mxu0 0.0
  %2033 = vmatpush1.msra.mxu0 0.0
  %2034 = vmatprep.subr.mxu0 0.0
  %2035 = vmatpush1.msra.mxu0 0.0
  %2036 = vmatprep.subr.mxu0 0.0
  %2037 = vmatpush1.msra.mxu0 0.0
  %2038 = vmatprep.subr.mxu0 0.0
  %2039 = vmatpush1.msra.mxu0 0.0
  %2040 = vmatprep.subr.mxu0 0.0
  %2041 = vmatpush1.msra.mxu0 0.0
  %2042 = vmatprep.subr.mxu0 0.0
  %2043 = vmatpush1.msra.mxu0 0.0
  %2044 = vmatprep.subr.mxu0 0.0
  %2045 = vmatpush1.msra.mxu0 0.0
  %2046 = vmatprep.subr.mxu0 0.0
  %2047 = vmatpush1.msra.mxu0 0.0
  %2048 = vmatprep.subr.mxu0 0.0
  %2049 = vmatpush1.msra.mxu0 0.0
  %2050 = vmatprep.subr.mxu0 0.0
  %2051 = vmatpush1.msra.mxu0 0.0
  %2052 = vmatprep.subr.mxu0 0.0
  %2053 = vmatpush1.msra.mxu0 0.0
  %2054 = vmatprep.subr.mxu0 0.0
  %2055 = vmatpush1.msra.mxu0 0.0
  %2056 = vmatprep.subr.mxu0 0.0
  %2057 = vmatpush1.msra.mxu0 0.0
  %2058 = vmatprep.subr.mxu0 0.0
  %2059 = vmatpush1.msra.mxu0 0.0
  %2060 = vmatprep.subr.mxu0 0.0
  %2061 = vmatpush1.msra.mxu0 0.0
  %2062 = vmatprep.subr.mxu0 0.0
  %2063 = vmatpush1.msra.mxu0 0.0
  %2064 = vmatprep.subr.mxu0 0.0
  %2065 = vmatpush1.msra.mxu0 0.0
  %2066 = vmatprep.subr.mxu0 0.0
  %2067 = vmatpush1.msra.mxu0 0.0
  %2068 = vmatprep.subr.mxu0 0.0
  %2069 = vmatpush1.msra.mxu0 0.0
  %2070 = vmatprep.subr.mxu0 0.0
  %2071 = vmatpush1.msra.mxu0 0.0
  %2072 = vmatprep.subr.mxu0 0.0
  %2073 = vmatpush1.msra.mxu0 0.0
  %2074 = vmatprep.subr.mxu0 0.0
  %2075 = vmatpush1.msra.mxu0 0.0
  %2076 = vmatprep.subr.mxu0 0.0
  %2077 = vmatpush1.msra.mxu0 0.0
  %2078 = vmatprep.subr.mxu0 0.0
  %2079 = vmatpush1.msra.mxu0 0.0
  %2080 = vmatprep.subr.mxu0 0.0
  %2081 = vmatpush1.msra.mxu0 0.0
  %2082 = vmatprep.subr.mxu0 0.0
  %2083 = vmatpush1.msra.mxu0 0.0
  %2084 = vmatprep.subr.mxu0 0.0
  %2085 = vmatpush1.msra.mxu0 0.0
  %2086 = vmatprep.subr.mxu0 0.0
  %2087 = vmatpush1.msra.mxu0 0.0
  %2088 = vmatprep.mubr.f32.mxu0 0.0
  %2089 = vmatmul.mubr.f32.gmra.mrb[0].mxu0 %v1882
  %v2090 = vpop.f32.mrb[0].mxu0
  %v2091 = vadd.f32 %v618, %v2090
  %v2092 = vpop.f32.mrb[0].mxu0
  %2093 = vdwg.mxu0
  %v2094 = vadd.f32 %v218, %v1951
  %v2095 = vxor.u32 %v2094, 2147483648
  %v2096 = vmul.f32 %v2095, 1.442695
  %v2097 = vpow.pop %v2096
  %v2098 = vadd.f32 %v2097, 1.0
  %v2099 = vrcp.pop %v2098
  %v2100 = vmul.f32 1.0, %v2099
  %v2101 = vadd.f32 %v334, %v2021
  %v2102 = vxor.u32 %v2101, 2147483648
  %v2103 = vmul.f32 %v2102, 1.442695
  %v2104 = vpow.pop %v2103
  %v2105 = vadd.f32 %v2104, 1.0
  %v2106 = vrcp.pop %v2105
  %v2107 = vmul.f32 1.0, %v2106
  %v2108 = vmul.f32 %v2100, %v2091
  %v2109 = vadd.f32 %v450, %v2108
  %v2110 = vtanh.pop %v2109
  %v2111 = vsub.f32 1.0, %v2107
  %v2112 = vmul.f32 %v2111, %v2110
  %v2113 = vmul.f32 %v2107, %v1880
  %v2114 = vadd.f32 %v2112, %v2113
  %v2116 = vsel %vm96, %v2114, 0
  %2118 = vmatprep.subr.mxu0 0.0
  %2119 = vmatpush1.msra.mxu0 %v458
  %2120 = vmatprep.subr.mxu0 0.0
  %2121 = vmatpush1.msra.mxu0 %v459
  %2122 = vmatprep.subr.mxu0 0.0
  %2123 = vmatpush1.msra.mxu0 %v460
  %2124 = vmatprep.subr.mxu0 0.0
  %2125 = vmatpush1.msra.mxu0 %v461
  %2126 = vmatprep.subr.mxu0 0.0
  %2127 = vmatpush1.msra.mxu0 0.0
  %2128 = vmatprep.subr.mxu0 0.0
  %2129 = vmatpush1.msra.mxu0 0.0
  %2130 = vmatprep.subr.mxu0 0.0
  %2131 = vmatpush1.msra.mxu0 0.0
  %2132 = vmatprep.subr.mxu0 0.0
  %2133 = vmatpush1.msra.mxu0 0.0
  %2134 = vmatprep.subr.mxu0 0.0
  %2135 = vmatpush1.msra.mxu0 0.0
  %2136 = vmatprep.subr.mxu0 0.0
  %2137 = vmatpush1.msra.mxu0 0.0
  %2138 = vmatprep.subr.mxu0 0.0
  %2139 = vmatpush1.msra.mxu0 0.0
  %2140 = vmatprep.subr.mxu0 0.0
  %2141 = vmatpush1.msra.mxu0 0.0
  %2142 = vmatprep.subr.mxu0 0.0
  %2143 = vmatpush1.msra.mxu0 0.0
  %2144 = vmatprep.subr.mxu0 0.0
  %2145 = vmatpush1.msra.mxu0 0.0
  %2146 = vmatprep.subr.mxu0 0.0
  %2147 = vmatpush1.msra.mxu0 0.0
  %2148 = vmatprep.subr.mxu0 0.0
  %2149 = vmatpush1.msra.mxu0 0.0
  %2150 = vmatprep.subr.mxu0 0.0
  %2151 = vmatpush1.msra.mxu0 0.0
  %2152 = vmatprep.subr.mxu0 0.0
  %2153 = vmatpush1.msra.mxu0 0.0
  %2154 = vmatprep.subr.mxu0 0.0
  %2155 = vmatpush1.msra.mxu0 0.0
  %2156 = vmatprep.subr.mxu0 0.0
  %2157 = vmatpush1.msra.mxu0 0.0
  %2158 = vmatprep.subr.mxu0 0.0
  %2159 = vmatpush1.msra.mxu0 0.0
  %2160 = vmatprep.subr.mxu0 0.0
  %2161 = vmatpush1.msra.mxu0 0.0
  %2162 = vmatprep.subr.mxu0 0.0
  %2163 = vmatpush1.msra.mxu0 0.0
  %2164 = vmatprep.subr.mxu0 0.0
  %2165 = vmatpush1.msra.mxu0 0.0
  %2166 = vmatprep.subr.mxu0 0.0
  %2167 = vmatpush1.msra.mxu0 0.0
  %2168 = vmatprep.subr.mxu0 0.0
  %2169 = vmatpush1.msra.mxu0 0.0
  %2170 = vmatprep.subr.mxu0 0.0
  %2171 = vmatpush1.msra.mxu0 0.0
  %2172 = vmatprep.subr.mxu0 0.0
  %2173 = vmatpush1.msra.mxu0 0.0
  %2174 = vmatprep.subr.mxu0 0.0
  %2175 = vmatpush1.msra.mxu0 0.0
  %2176 = vmatprep.subr.mxu0 0.0
  %2177 = vmatpush1.msra.mxu0 0.0
  %2178 = vmatprep.subr.mxu0 0.0
  %2179 = vmatpush1.msra.mxu0 0.0
  %2180 = vmatprep.subr.mxu0 0.0
  %2181 = vmatpush1.msra.mxu0 0.0
  %2182 = vmatprep.mubr.f32.mxu0 0.0
  %2183 = vmatmul.mubr.f32.gmra.mrb[0].mxu0 %v2116
  %v2184 = vpop.f32.mrb[0].mxu0
  %v2185 = vadd.f32 0.0, %v2184
  %v2186 = vpop.f32.mrb[0].mxu0
  %2187 = vdwg.mxu0
  %2188 = vmatprep.subr.mxu0 0.0
  %2189 = vmatpush1.msra.mxu0 %v462
  %2190 = vmatprep.subr.mxu0 0.0
  %2191 = vmatpush1.msra.mxu0 %v463
  %2192 = vmatprep.subr.mxu0 0.0
  %2193 = vmatpush1.msra.mxu0 %v464
  %2194 = vmatprep.subr.mxu0 0.0
  %2195 = vmatpush1.msra.mxu0 %v465
  %2196 = vmatprep.subr.mxu0 0.0
  %2197 = vmatpush1.msra.mxu0 0.0
  %2198 = vmatprep.subr.mxu0 0.0
  %2199 = vmatpush1.msra.mxu0 0.0
  %2200 = vmatprep.subr.mxu0 0.0
  %2201 = vmatpush1.msra.mxu0 0.0
  %2202 = vmatprep.subr.mxu0 0.0
  %2203 = vmatpush1.msra.mxu0 0.0
  %2204 = vmatprep.subr.mxu0 0.0
  %2205 = vmatpush1.msra.mxu0 0.0
  %2206 = vmatprep.subr.mxu0 0.0
  %2207 = vmatpush1.msra.mxu0 0.0
  %2208 = vmatprep.subr.mxu0 0.0
  %2209 = vmatpush1.msra.mxu0 0.0
  %2210 = vmatprep.subr.mxu0 0.0
  %2211 = vmatpush1.msra.mxu0 0.0
  %2212 = vmatprep.subr.mxu0 0.0
  %2213 = vmatpush1.msra.mxu0 0.0
  %2214 = vmatprep.subr.mxu0 0.0
  %2215 = vmatpush1.msra.mxu0 0.0
  %2216 = vmatprep.subr.mxu0 0.0
  %2217 = vmatpush1.msra.mxu0 0.0
  %2218 = vmatprep.subr.mxu0 0.0
  %2219 = vmatpush1.msra.mxu0 0.0
  %2220 = vmatprep.subr.mxu0 0.0
  %2221 = vmatpush1.msra.mxu0 0.0
  %2222 = vmatprep.subr.mxu0 0.0
  %2223 = vmatpush1.msra.mxu0 0.0
  %2224 = vmatprep.subr.mxu0 0.0
  %2225 = vmatpush1.msra.mxu0 0.0
  %2226 = vmatprep.subr.mxu0 0.0
  %2227 = vmatpush1.msra.mxu0 0.0
  %2228 = vmatprep.subr.mxu0 0.0
  %2229 = vmatpush1.msra.mxu0 0.0
  %2230 = vmatprep.subr.mxu0 0.0
  %2231 = vmatpush1.msra.mxu0 0.0
  %2232 = vmatprep.subr.mxu0 0.0
  %2233 = vmatpush1.msra.mxu0 0.0
  %2234 = vmatprep.subr.mxu0 0.0
  %2235 = vmatpush1.msra.mxu0 0.0
  %2236 = vmatprep.subr.mxu0 0.0
  %2237 = vmatpush1.msra.mxu0 0.0
  %2238 = vmatprep.subr.mxu0 0.0
  %2239 = vmatpush1.msra.mxu0 0.0
  %2240 = vmatprep.subr.mxu0 0.0
  %2241 = vmatpush1.msra.mxu0 0.0
  %2242 = vmatprep.subr.mxu0 0.0
  %2243 = vmatpush1.msra.mxu0 0.0
  %2244 = vmatprep.subr.mxu0 0.0
  %2245 = vmatpush1.msra.mxu0 0.0
  %2246 = vmatprep.subr.mxu0 0.0
  %2247 = vmatpush1.msra.mxu0 0.0
  %2248 = vmatprep.subr.mxu0 0.0
  %2249 = vmatpush1.msra.mxu0 0.0
  %2250 = vmatprep.subr.mxu0 0.0
  %2251 = vmatpush1.msra.mxu0 0.0
  %2252 = vmatprep.mubr.f32.mxu0 0.0
  %2253 = vmatmul.mubr.f32.gmra.mrb[0].mxu0 %v2116
  %v2254 = vpop.f32.mrb[0].mxu0
  %v2255 = vadd.f32 0.0, %v2254
  %v2256 = vpop.f32.mrb[0].mxu0
  %2257 = vdwg.mxu0
  %2258 = vmatprep.subr.mxu0 0.0
  %2259 = vmatpush1.msra.mxu0 %v466
  %2260 = vmatprep.subr.mxu0 0.0
  %2261 = vmatpush1.msra.mxu0 %v467
  %2262 = vmatprep.subr.mxu0 0.0
  %2263 = vmatpush1.msra.mxu0 %v468
  %2264 = vmatprep.subr.mxu0 0.0
  %2265 = vmatpush1.msra.mxu0 %v469
  %2266 = vmatprep.subr.mxu0 0.0
  %2267 = vmatpush1.msra.mxu0 0.0
  %2268 = vmatprep.subr.mxu0 0.0
  %2269 = vmatpush1.msra.mxu0 0.0
  %2270 = vmatprep.subr.mxu0 0.0
  %2271 = vmatpush1.msra.mxu0 0.0
  %2272 = vmatprep.subr.mxu0 0.0
  %2273 = vmatpush1.msra.mxu0 0.0
  %2274 = vmatprep.subr.mxu0 0.0
  %2275 = vmatpush1.msra.mxu0 0.0
  %2276 = vmatprep.subr.mxu0 0.0
  %2277 = vmatpush1.msra.mxu0 0.0
  %2278 = vmatprep.subr.mxu0 0.0
  %2279 = vmatpush1.msra.mxu0 0.0
  %2280 = vmatprep.subr.mxu0 0.0
  %2281 = vmatpush1.msra.mxu0 0.0
  %2282 = vmatprep.subr.mxu0 0.0
  %2283 = vmatpush1.msra.mxu0 0.0
  %2284 = vmatprep.subr.mxu0 0.0
  %2285 = vmatpush1.msra.mxu0 0.0
  %2286 = vmatprep.subr.mxu0 0.0
  %2287 = vmatpush1.msra.mxu0 0.0
  %2288 = vmatprep.subr.mxu0 0.0
  %2289 = vmatpush1.msra.mxu0 0.0
  %2290 = vmatprep.subr.mxu0 0.0
  %2291 = vmatpush1.msra.mxu0 0.0
  %2292 = vmatprep.subr.mxu0 0.0
  %2293 = vmatpush1.msra.mxu0 0.0
  %2294 = vmatprep.subr.mxu0 0.0
  %2295 = vmatpush1.msra.mxu0 0.0
  %2296 = vmatprep.subr.mxu0 0.0
  %2297 = vmatpush1.msra.mxu0 0.0
  %2298 = vmatprep.subr.mxu0 0.0
  %2299 = vmatpush1.msra.mxu0 0.0
  %2300 = vmatprep.subr.mxu0 0.0
  %2301 = vmatpush1.msra.mxu0 0.0
  %2302 = vmatprep.subr.mxu0 0.0
  %2303 = vmatpush1.msra.mxu0 0.0
  %2304 = vmatprep.subr.mxu0 0.0
  %2305 = vmatpush1.msra.mxu0 0.0
  %2306 = vmatprep.subr.mxu0 0.0
  %2307 = vmatpush1.msra.mxu0 0.0
  %2308 = vmatprep.subr.mxu0 0.0
  %2309 = vmatpush1.msra.mxu0 0.0
  %2310 = vmatprep.subr.mxu0 0.0
  %2311 = vmatpush1.msra.mxu0 0.0
  %2312 = vmatprep.subr.mxu0 0.0
  %2313 = vmatpush1.msra.mxu0 0.0
  %2314 = vmatprep.subr.mxu0 0.0
  %2315 = vmatpush1.msra.mxu0 0.0
  %2316 = vmatprep.subr.mxu0 0.0
  %2317 = vmatpush1.msra.mxu0 0.0
  %2318 = vmatprep.subr.mxu0 0.0
  %2319 = vmatpush1.msra.mxu0 0.0
  %2320 = vmatprep.subr.mxu0 0.0
  %2321 = vmatpush1.msra.mxu0 0.0
  %2322 = vmatprep.mubr.f32.mxu0 0.0
  %2323 = vmatmul.mubr.f32.gmra.mrb[0].mxu0 %v2116
  %v2324 = vpop.f32.mrb[0].mxu0
  %v2325 = vadd.f32 %v618, %v2324
  %v2326 = vpop.f32.mrb[0].mxu0
  %2327 = vdwg.mxu0
  %v2328 = vadd.f32 %v223, %v2185
  %v2329 = vxor.u32 %v2328, 2147483648
  %v2330 = vmul.f32 %v2329, 1.442695
  %v2331 = vpow.pop %v2330
  %v2332 = vadd.f32 %v2331, 1.0
  %v2333 = vrcp.pop %v2332
  %v2334 = vmul.f32 1.0, %v2333
  %v2335 = vadd.f32 %v339, %v2255
  %v2336 = vxor.u32 %v2335, 2147483648
  %v2337 = vmul.f32 %v2336, 1.442695
  %v2338 = vpow.pop %v2337
  %v2339 = vadd.f32 %v2338, 1.0
  %v2340 = vrcp.pop %v2339
  %v2341 = vmul.f32 1.0, %v2340
  %v2342 = vmul.f32 %v2334, %v2325
  %v2343 = vadd.f32 %v455, %v2342
  %v2344 = vtanh.pop %v2343
  %v2345 = vsub.f32 1.0, %v2341
  %v2346 = vmul.f32 %v2345, %v2344
  %v2347 = vmul.f32 %v2341, %v2114
  %v2348 = vadd.f32 %v2346, %v2347
  %v2349 = vld [vmem:[%s1] sm:$0xff]
  %v2350 = vld [vmem:[%s1 + $0x8] sm:$0xff]
  %v2351 = vld [vmem:[%s1 + $0x10] sm:$0xff]
  %v2352 = vld [vmem:[%s1 + $0x18] sm:$0xff]
  %v2353 = vld [vmem:[%s1 + $0x20] sm:$0xff]
  %v2354 = vld [vmem:[%s1 + $0x28] sm:$0xff]
  %v2355 = vld [vmem:[%s1 + $0x30] sm:$0xff]
  %v2356 = vld [vmem:[%s1 + $0x38] sm:$0xff]
  %v2357 = vld [vmem:[%s1 + $0x40] sm:$0xff]
  %v2358 = vld [vmem:[%s1 + $0x48] sm:$0xff]
  %v2359 = vld [vmem:[%s1 + $0x50] sm:$0xff]
  %v2360 = vld [vmem:[%s1 + $0x58] sm:$0xff]
  %v2361 = vld [vmem:[%s1 + $0x60] sm:$0xff]
  %v2362 = vld [vmem:[%s1 + $0x68] sm:$0xff]
  %v2363 = vld [vmem:[%s1 + $0x70] sm:$0xff]
  %v2364 = vld [vmem:[%s1 + $0x78] sm:$0xff]
  %v2365 = vld [vmem:[%s12] sm:$0xff]
  %v2366 = vld [vmem:[%s12 + $0x8] sm:$0xff]
  %v2367 = vld [vmem:[%s12 + $0x10] sm:$0xff]
  %v2368 = vld [vmem:[%s12 + $0x18] sm:$0xff]
  %v2370 = vsel %vm96, %v2349, 0
  %v2373 = vsel %vm96, %v2350, 0
  %v2376 = vsel %vm96, %v2351, 0
  %v2379 = vsel %vm96, %v2352, 0
  %v2382 = vsel %vm96, %v2353, 0
  %v2385 = vsel %vm96, %v2354, 0
  %v2388 = vsel %vm96, %v2355, 0
  %v2391 = vsel %vm96, %v2356, 0
  %v2394 = vsel %vm96, %v2357, 0
  %v2397 = vsel %vm96, %v2358, 0
  %v2400 = vsel %vm96, %v2359, 0
  %v2403 = vsel %vm96, %v2360, 0
  %v2406 = vsel %vm96, %v2361, 0
  %v2409 = vsel %vm96, %v2362, 0
  %v2412 = vsel %vm96, %v2363, 0
  %v2415 = vsel %vm96, %v2364, 0
  %2417 = vmatprep.subr.mxu0 0.0
  %2418 = vmatpush1.msra.mxu0 %v2365
  %2419 = vmatprep.subr.mxu0 0.0
  %2420 = vmatpush1.msra.mxu0 %v2366
  %2421 = vmatprep.subr.mxu0 0.0
  %2422 = vmatpush1.msra.mxu0 %v2367
  %2423 = vmatprep.subr.mxu0 0.0
  %2424 = vmatpush1.msra.mxu0 %v2368
  %2425 = vmatprep.subr.mxu0 0.0
  %2426 = vmatpush1.msra.mxu0 0.0
  %2427 = vmatprep.subr.mxu0 0.0
  %2428 = vmatpush1.msra.mxu0 0.0
  %2429 = vmatprep.subr.mxu0 0.0
  %2430 = vmatpush1.msra.mxu0 0.0
  %2431 = vmatprep.subr.mxu0 0.0
  %2432 = vmatpush1.msra.mxu0 0.0
  %2433 = vmatprep.subr.mxu0 0.0
  %2434 = vmatpush1.msra.mxu0 0.0
  %2435 = vmatprep.subr.mxu0 0.0
  %2436 = vmatpush1.msra.mxu0 0.0
  %2437 = vmatprep.subr.mxu0 0.0
  %2438 = vmatpush1.msra.mxu0 0.0
  %2439 = vmatprep.subr.mxu0 0.0
  %2440 = vmatpush1.msra.mxu0 0.0
  %2441 = vmatprep.subr.mxu0 0.0
  %2442 = vmatpush1.msra.mxu0 0.0
  %2443 = vmatprep.subr.mxu0 0.0
  %2444 = vmatpush1.msra.mxu0 0.0
  %2445 = vmatprep.subr.mxu0 0.0
  %2446 = vmatpush1.msra.mxu0 0.0
  %2447 = vmatprep.subr.mxu0 0.0
  %2448 = vmatpush1.msra.mxu0 0.0
  %2449 = vmatprep.subr.mxu0 0.0
  %2450 = vmatpush1.msra.mxu0 0.0
  %2451 = vmatprep.subr.mxu0 0.0
  %2452 = vmatpush1.msra.mxu0 0.0
  %2453 = vmatprep.subr.mxu0 0.0
  %2454 = vmatpush1.msra.mxu0 0.0
  %2455 = vmatprep.subr.mxu0 0.0
  %2456 = vmatpush1.msra.mxu0 0.0
  %2457 = vmatprep.subr.mxu0 0.0
  %2458 = vmatpush1.msra.mxu0 0.0
  %2459 = vmatprep.subr.mxu0 0.0
  %2460 = vmatpush1.msra.mxu0 0.0
  %2461 = vmatprep.subr.mxu0 0.0
  %2462 = vmatpush1.msra.mxu0 0.0
  %2463 = vmatprep.subr.mxu0 0.0
  %2464 = vmatpush1.msra.mxu0 0.0
  %2465 = vmatprep.subr.mxu0 0.0
  %2466 = vmatpush1.msra.mxu0 0.0
  %2467 = vmatprep.subr.mxu0 0.0
  %2468 = vmatpush1.msra.mxu0 0.0
  %2469 = vmatprep.subr.mxu0 0.0
  %2470 = vmatpush1.msra.mxu0 0.0
  %2471 = vmatprep.subr.mxu0 0.0
  %2472 = vmatpush1.msra.mxu0 0.0
  %2473 = vmatprep.subr.mxu0 0.0
  %2474 = vmatpush1.msra.mxu0 0.0
  %2475 = vmatprep.subr.mxu0 0.0
  %2476 = vmatpush1.msra.mxu0 0.0
  %2477 = vmatprep.subr.mxu0 0.0
  %2478 = vmatpush1.msra.mxu0 0.0
  %2479 = vmatprep.subr.mxu0 0.0
  %2480 = vmatpush1.msra.mxu0 0.0
  %2481 = vmatprep.mubr.f32.mxu0 0.0
  %2482 = vmatmul.mubr.f32.gmra.mrb[0].mxu0 %v2370
  %v2483 = vpop.f32.mrb[0].mxu0
  %v2484 = vadd.f32 0.0, %v2483
  %v2485 = vpop.f32.mrb[0].mxu0
  %2486 = vmatprep.mubr.f32.mxu0 0.0
  %2487 = vmatmul.mubr.f32.gmra.mrb[0].mxu0 %v2373
  %v2488 = vpop.f32.mrb[0].mxu0
  %v2489 = vadd.f32 0.0, %v2488
  %v2490 = vpop.f32.mrb[0].mxu0
  %2491 = vmatprep.mubr.f32.mxu0 0.0
  %2492 = vmatmul.mubr.f32.gmra.mrb[0].mxu0 %v2376
  %v2493 = vpop.f32.mrb[0].mxu0
  %v2494 = vadd.f32 0.0, %v2493
  %v2495 = vpop.f32.mrb[0].mxu0
  %2496 = vmatprep.mubr.f32.mxu0 0.0
  %2497 = vmatmul.mubr.f32.gmra.mrb[0].mxu0 %v2379
  %v2498 = vpop.f32.mrb[0].mxu0
  %v2499 = vadd.f32 0.0, %v2498
  %v2500 = vpop.f32.mrb[0].mxu0
  %2501 = vmatprep.mubr.f32.mxu0 0.0
  %2502 = vmatmul.mubr.f32.gmra.mrb[0].mxu0 %v2382
  %v2503 = vpop.f32.mrb[0].mxu0
  %v2504 = vadd.f32 0.0, %v2503
  %v2505 = vpop.f32.mrb[0].mxu0
  %2506 = vmatprep.mubr.f32.mxu0 0.0
  %2507 = vmatmul.mubr.f32.gmra.mrb[0].mxu0 %v2385
  %v2508 = vpop.f32.mrb[0].mxu0
  %v2509 = vadd.f32 0.0, %v2508
  %v2510 = vpop.f32.mrb[0].mxu0
  %2511 = vmatprep.mubr.f32.mxu0 0.0
  %2512 = vmatmul.mubr.f32.gmra.mrb[0].mxu0 %v2388
  %v2513 = vpop.f32.mrb[0].mxu0
  %v2514 = vadd.f32 0.0, %v2513
  %v2515 = vpop.f32.mrb[0].mxu0
  %2516 = vmatprep.mubr.f32.mxu0 0.0
  %2517 = vmatmul.mubr.f32.gmra.mrb[0].mxu0 %v2391
  %v2518 = vpop.f32.mrb[0].mxu0
  %v2519 = vadd.f32 0.0, %v2518
  %v2520 = vpop.f32.mrb[0].mxu0
  %2521 = vmatprep.mubr.f32.mxu0 0.0
  %2522 = vmatmul.mubr.f32.gmra.mrb[0].mxu0 %v2394
  %v2523 = vpop.f32.mrb[0].mxu0
  %v2524 = vadd.f32 0.0, %v2523
  %v2525 = vpop.f32.mrb[0].mxu0
  %2526 = vmatprep.mubr.f32.mxu0 0.0
  %2527 = vmatmul.mubr.f32.gmra.mrb[0].mxu0 %v2397
  %v2528 = vpop.f32.mrb[0].mxu0
  %v2529 = vadd.f32 0.0, %v2528
  %v2530 = vpop.f32.mrb[0].mxu0
  %2531 = vmatprep.mubr.f32.mxu0 0.0
  %2532 = vmatmul.mubr.f32.gmra.mrb[0].mxu0 %v2400
  %v2533 = vpop.f32.mrb[0].mxu0
  %v2534 = vadd.f32 0.0, %v2533
  %v2535 = vpop.f32.mrb[0].mxu0
  %2536 = vmatprep.mubr.f32.mxu0 0.0
  %2537 = vmatmul.mubr.f32.gmra.mrb[0].mxu0 %v2403
  %v2538 = vpop.f32.mrb[0].mxu0
  %v2539 = vadd.f32 0.0, %v2538
  %v2540 = vpop.f32.mrb[0].mxu0
  %2541 = vmatprep.mubr.f32.mxu0 0.0
  %2542 = vmatmul.mubr.f32.gmra.mrb[0].mxu0 %v2406
  %v2543 = vpop.f32.mrb[0].mxu0
  %v2544 = vadd.f32 0.0, %v2543
  %v2545 = vpop.f32.mrb[0].mxu0
  %2546 = vmatprep.mubr.f32.mxu0 0.0
  %2547 = vmatmul.mubr.f32.gmra.mrb[0].mxu0 %v2409
  %v2548 = vpop.f32.mrb[0].mxu0
  %v2549 = vadd.f32 0.0, %v2548
  %v2550 = vpop.f32.mrb[0].mxu0
  %2551 = vmatprep.mubr.f32.mxu0 0.0
  %2552 = vmatmul.mubr.f32.gmra.mrb[0].mxu0 %v2412
  %v2553 = vpop.f32.mrb[0].mxu0
  %v2554 = vadd.f32 0.0, %v2553
  %v2555 = vpop.f32.mrb[0].mxu0
  %2556 = vmatprep.mubr.f32.mxu0 0.0
  %2557 = vmatmul.mubr.f32.gmra.mrb[0].mxu0 %v2415
  %v2558 = vpop.f32.mrb[0].mxu0
  %v2559 = vadd.f32 0.0, %v2558
  %v2560 = vpop.f32.mrb[0].mxu0
  %2561 = vdwg.mxu0
  %v2562 = vld [vmem:[%s13] sm:$0xff]
  %v2563 = vld [vmem:[%s13 + $0x8] sm:$0xff]
  %v2564 = vld [vmem:[%s13 + $0x10] sm:$0xff]
  %v2565 = vld [vmem:[%s13 + $0x18] sm:$0xff]
  %v2567 = vsel %vm96, %v2348, 0
  %2569 = vmatprep.subr.mxu0 0.0
  %2570 = vmatpush1.msra.mxu0 %v2562
  %2571 = vmatprep.subr.mxu0 0.0
  %2572 = vmatpush1.msra.mxu0 %v2563
  %2573 = vmatprep.subr.mxu0 0.0
  %2574 = vmatpush1.msra.mxu0 %v2564
  %2575 = vmatprep.subr.mxu0 0.0
  %2576 = vmatpush1.msra.mxu0 %v2565
  %2577 = vmatprep.subr.mxu0 0.0
  %2578 = vmatpush1.msra.mxu0 0.0
  %2579 = vmatprep.subr.mxu0 0.0
  %2580 = vmatpush1.msra.mxu0 0.0
  %2581 = vmatprep.subr.mxu0 0.0
  %2582 = vmatpush1.msra.mxu0 0.0
  %2583 = vmatprep.subr.mxu0 0.0
  %2584 = vmatpush1.msra.mxu0 0.0
  %2585 = vmatprep.subr.mxu0 0.0
  %2586 = vmatpush1.msra.mxu0 0.0
  %2587 = vmatprep.subr.mxu0 0.0
  %2588 = vmatpush1.msra.mxu0 0.0
  %2589 = vmatprep.subr.mxu0 0.0
  %2590 = vmatpush1.msra.mxu0 0.0
  %2591 = vmatprep.subr.mxu0 0.0
  %2592 = vmatpush1.msra.mxu0 0.0
  %2593 = vmatprep.subr.mxu0 0.0
  %2594 = vmatpush1.msra.mxu0 0.0
  %2595 = vmatprep.subr.mxu0 0.0
  %2596 = vmatpush1.msra.mxu0 0.0
  %2597 = vmatprep.subr.mxu0 0.0
  %2598 = vmatpush1.msra.mxu0 0.0
  %2599 = vmatprep.subr.mxu0 0.0
  %2600 = vmatpush1.msra.mxu0 0.0
  %2601 = vmatprep.subr.mxu0 0.0
  %2602 = vmatpush1.msra.mxu0 0.0
  %2603 = vmatprep.subr.mxu0 0.0
  %2604 = vmatpush1.msra.mxu0 0.0
  %2605 = vmatprep.subr.mxu0 0.0
  %2606 = vmatpush1.msra.mxu0 0.0
  %2607 = vmatprep.subr.mxu0 0.0
  %2608 = vmatpush1.msra.mxu0 0.0
  %2609 = vmatprep.subr.mxu0 0.0
  %2610 = vmatpush1.msra.mxu0 0.0
  %2611 = vmatprep.subr.mxu0 0.0
  %2612 = vmatpush1.msra.mxu0 0.0
  %2613 = vmatprep.subr.mxu0 0.0
  %2614 = vmatpush1.msra.mxu0 0.0
  %2615 = vmatprep.subr.mxu0 0.0
  %2616 = vmatpush1.msra.mxu0 0.0
  %2617 = vmatprep.subr.mxu0 0.0
  %2618 = vmatpush1.msra.mxu0 0.0
  %2619 = vmatprep.subr.mxu0 0.0
  %2620 = vmatpush1.msra.mxu0 0.0
  %2621 = vmatprep.subr.mxu0 0.0
  %2622 = vmatpush1.msra.mxu0 0.0
  %2623 = vmatprep.subr.mxu0 0.0
  %2624 = vmatpush1.msra.mxu0 0.0
  %2625 = vmatprep.subr.mxu0 0.0
  %2626 = vmatpush1.msra.mxu0 0.0
  %2627 = vmatprep.subr.mxu0 0.0
  %2628 = vmatpush1.msra.mxu0 0.0
  %2629 = vmatprep.subr.mxu0 0.0
  %2630 = vmatpush1.msra.mxu0 0.0
  %2631 = vmatprep.subr.mxu0 0.0
  %2632 = vmatpush1.msra.mxu0 0.0
  %2633 = vmatprep.mubr.f32.mxu0 0.0
  %2634 = vmatmul.mubr.f32.gmra.mrb[0].mxu0 %v2567
  %v2635 = vpop.f32.mrb[0].mxu0
  %v2636 = vadd.f32 0.0, %v2635
  %v2637 = vpop.f32.mrb[0].mxu0
  %2638 = vdwg.mxu0
  %v2640 = vcombine.high %v2636, %v2636
  %v2642 = vunpack.c.l.s4 1966171168
  %v2643 = vunpack.c.0.s8 %v2642
  %v2644 = vlaneseq
  %v2645 = vshrl.u32 %v2644, 7
  %v2646 = vsub.s32 %v2643, %v2645
  %v2647 = vrot.slane %v2636, %v2646
  %v2649 = vunpack.c.l.s4 1966171168
  %v2650 = vunpack.c.0.s8 %v2649
  %v2651 = vlaneseq
  %v2652 = vshrl.u32 %v2651, 7
  %v2653 = vsub.s32 %v2650, %v2652
  %v2654 = vrot.slane %v2640, %v2653
  %v2655 = vcombine.high %v2647, %v2647
  %v2656 = vcombine.high %v2654, %v2654
  %v2658 = vunpack.c.l.s4 1966171168
  %v2659 = vunpack.c.0.s8 %v2658
  %v2660 = vlaneseq
  %v2661 = vshrl.u32 %v2660, 7
  %v2662 = vsub.s32 %v2659, %v2661
  %v2663 = vrot.slane %v2647, %v2662
  %v2665 = vunpack.c.l.s4 1966171168
  %v2666 = vunpack.c.0.s8 %v2665
  %v2667 = vlaneseq
  %v2668 = vshrl.u32 %v2667, 7
  %v2669 = vsub.s32 %v2666, %v2668
  %v2670 = vrot.slane %v2654, %v2669
  %v2672 = vunpack.c.l.s4 1966171168
  %v2673 = vunpack.c.0.s8 %v2672
  %v2674 = vlaneseq
  %v2675 = vshrl.u32 %v2674, 7
  %v2676 = vsub.s32 %v2673, %v2675
  %v2677 = vrot.slane %v2655, %v2676
  %v2679 = vunpack.c.l.s4 1966171168
  %v2680 = vunpack.c.0.s8 %v2679
  %v2681 = vlaneseq
  %v2682 = vshrl.u32 %v2681, 7
  %v2683 = vsub.s32 %v2680, %v2682
  %v2684 = vrot.slane %v2656, %v2683
  %v2685 = vcombine.high %v2663, %v2663
  %v2686 = vcombine.high %v2670, %v2670
  %v2687 = vcombine.high %v2677, %v2677
  %v2688 = vcombine.high %v2684, %v2684
  %v2689 = vlaneseq
  %v2690 = vshrl.u32 %v2689, 7
  %v2691 = vsub.s32 0, %v2690
  %v2692 = vrot.slane %v2663, %v2691
  %v2693 = vlaneseq
  %v2694 = vshrl.u32 %v2693, 7
  %v2695 = vsub.s32 0, %v2694
  %v2696 = vrot.slane %v2677, %v2695
  %v2697 = vlaneseq
  %v2698 = vshrl.u32 %v2697, 7
  %v2699 = vsub.s32 0, %v2698
  %v2700 = vrot.slane %v2685, %v2699
  %v2701 = vlaneseq
  %v2702 = vshrl.u32 %v2701, 7
  %v2703 = vsub.s32 0, %v2702
  %v2704 = vrot.slane %v2687, %v2703
  %v2705 = vlaneseq
  %v2706 = vshrl.u32 %v2705, 7
  %v2707 = vsub.s32 0, %v2706
  %v2708 = vrot.slane %v2670, %v2707
  %v2709 = vlaneseq
  %v2710 = vshrl.u32 %v2709, 7
  %v2711 = vsub.s32 0, %v2710
  %v2712 = vrot.slane %v2684, %v2711
  %v2713 = vlaneseq
  %v2714 = vshrl.u32 %v2713, 7
  %v2715 = vsub.s32 0, %v2714
  %v2716 = vrot.slane %v2686, %v2715
  %v2717 = vlaneseq
  %v2718 = vshrl.u32 %v2717, 7
  %v2719 = vsub.s32 0, %v2718
  %v2720 = vrot.slane %v2688, %v2719
  %v2729 = vadd.f32 %v2484, %v2692
  %v2730 = vadd.f32 %v2489, %v2692
  %v2731 = vadd.f32 %v2494, %v2696
  %v2732 = vadd.f32 %v2499, %v2696
  %v2733 = vadd.f32 %v2504, %v2700
  %v2734 = vadd.f32 %v2509, %v2700
  %v2735 = vadd.f32 %v2514, %v2704
  %v2736 = vadd.f32 %v2519, %v2704
  %v2737 = vadd.f32 %v2524, %v2708
  %v2738 = vadd.f32 %v2529, %v2708
  %v2739 = vadd.f32 %v2534, %v2712
  %v2740 = vadd.f32 %v2539, %v2712
  %v2741 = vadd.f32 %v2544, %v2716
  %v2742 = vadd.f32 %v2549, %v2716
  %v2743 = vadd.f32 %v2554, %v2720
  %v2744 = vadd.f32 %v2559, %v2720
  %v2745 = vld [vmem:[%s14] sm:$0x1]
  %v2747 = vlaneseq
  %v2748 = vshrl.u32 %v2747, 7
  %v2749 = vsub.s32 0, %v2748
  %v2750 = vrot.slane %v2745, %v2749
  %v2752 = vadd.f32 %v2729, %v2750
  %v2753 = vadd.f32 %v2730, %v2750
  %v2754 = vadd.f32 %v2731, %v2750
  %v2755 = vadd.f32 %v2732, %v2750
  %v2756 = vadd.f32 %v2733, %v2750
  %v2757 = vadd.f32 %v2734, %v2750
  %v2758 = vadd.f32 %v2735, %v2750
  %v2759 = vadd.f32 %v2736, %v2750
  %v2760 = vadd.f32 %v2737, %v2750
  %v2761 = vadd.f32 %v2738, %v2750
  %v2762 = vadd.f32 %v2739, %v2750
  %v2763 = vadd.f32 %v2740, %v2750
  %v2764 = vadd.f32 %v2741, %v2750
  %v2765 = vadd.f32 %v2742, %v2750
  %v2766 = vadd.f32 %v2743, %v2750
  %v2767 = vadd.f32 %v2744, %v2750
  %v2768 = vmax.f32 %v2752, 0.0
  %v2769 = vmax.f32 %v2753, 0.0
  %v2770 = vmax.f32 %v2754, 0.0
  %v2771 = vmax.f32 %v2755, 0.0
  %v2772 = vmax.f32 %v2756, 0.0
  %v2773 = vmax.f32 %v2757, 0.0
  %v2774 = vmax.f32 %v2758, 0.0
  %v2775 = vmax.f32 %v2759, 0.0
  %v2776 = vmax.f32 %v2760, 0.0
  %v2777 = vmax.f32 %v2761, 0.0
  %v2778 = vmax.f32 %v2762, 0.0
  %v2779 = vmax.f32 %v2763, 0.0
  %v2780 = vmax.f32 %v2764, 0.0
  %v2781 = vmax.f32 %v2765, 0.0
  %v2782 = vmax.f32 %v2766, 0.0
  %v2783 = vmax.f32 %v2767, 0.0
  %v2784 = vld [vmem:[%s15] sm:$0x1]
  %v2786 = vlaneseq
  %v2787 = vshrl.u32 %v2786, 7
  %v2788 = vsub.s32 0, %v2787
  %v2789 = vrot.slane %v2784, %v2788
  %v2791 = vmul.f32 %v2768, %v2789
  %v2792 = vmul.f32 %v2769, %v2789
  %v2793 = vmul.f32 %v2770, %v2789
  %v2794 = vmul.f32 %v2771, %v2789
  %v2795 = vmul.f32 %v2772, %v2789
  %v2796 = vmul.f32 %v2773, %v2789
  %v2797 = vmul.f32 %v2774, %v2789
  %v2798 = vmul.f32 %v2775, %v2789
  %v2799 = vmul.f32 %v2776, %v2789
  %v2800 = vmul.f32 %v2777, %v2789
  %v2801 = vmul.f32 %v2778, %v2789
  %v2802 = vmul.f32 %v2779, %v2789
  %v2803 = vmul.f32 %v2780, %v2789
  %v2804 = vmul.f32 %v2781, %v2789
  %v2805 = vmul.f32 %v2782, %v2789
  %v2806 = vmul.f32 %v2783, %v2789
  %v2807 = vsel %vm96, %v2791, 0.0
  %2808 = vadd.xlane.f32.xlu0 %v2807
  %v2809 = vpop.xlane.xlu0 %2808
  %v2810 = vsel %vm96, %v2792, 0.0
  %2811 = vadd.xlane.f32.xlu0 %v2810
  %v2812 = vpop.xlane.xlu0 %2811
  %v2813 = vsel %vm96, %v2793, 0.0
  %2814 = vadd.xlane.f32.xlu0 %v2813
  %v2815 = vpop.xlane.xlu0 %2814
  %v2816 = vsel %vm96, %v2794, 0.0
  %2817 = vadd.xlane.f32.xlu0 %v2816
  %v2818 = vpop.xlane.xlu0 %2817
  %v2819 = vsel %vm96, %v2795, 0.0
  %2820 = vadd.xlane.f32.xlu0 %v2819
  %v2821 = vpop.xlane.xlu0 %2820
  %v2822 = vsel %vm96, %v2796, 0.0
  %2823 = vadd.xlane.f32.xlu0 %v2822
  %v2824 = vpop.xlane.xlu0 %2823
  %v2825 = vsel %vm96, %v2797, 0.0
  %2826 = vadd.xlane.f32.xlu0 %v2825
  %v2827 = vpop.xlane.xlu0 %2826
  %v2828 = vsel %vm96, %v2798, 0.0
  %2829 = vadd.xlane.f32.xlu0 %v2828
  %v2830 = vpop.xlane.xlu0 %2829
  %v2831 = vsel %vm96, %v2799, 0.0
  %2832 = vadd.xlane.f32.xlu0 %v2831
  %v2833 = vpop.xlane.xlu0 %2832
  %v2834 = vsel %vm96, %v2800, 0.0
  %2835 = vadd.xlane.f32.xlu0 %v2834
  %v2836 = vpop.xlane.xlu0 %2835
  %v2837 = vsel %vm96, %v2801, 0.0
  %2838 = vadd.xlane.f32.xlu0 %v2837
  %v2839 = vpop.xlane.xlu0 %2838
  %v2840 = vsel %vm96, %v2802, 0.0
  %2841 = vadd.xlane.f32.xlu0 %v2840
  %v2842 = vpop.xlane.xlu0 %2841
  %v2843 = vsel %vm96, %v2803, 0.0
  %2844 = vadd.xlane.f32.xlu0 %v2843
  %v2845 = vpop.xlane.xlu0 %2844
  %v2846 = vsel %vm96, %v2804, 0.0
  %2847 = vadd.xlane.f32.xlu0 %v2846
  %v2848 = vpop.xlane.xlu0 %2847
  %v2849 = vsel %vm96, %v2805, 0.0
  %2850 = vadd.xlane.f32.xlu0 %v2849
  %v2851 = vpop.xlane.xlu0 %2850
  %v2852 = vsel %vm96, %v2806, 0.0
  %2853 = vadd.xlane.f32.xlu0 %v2852
  %v2854 = vpop.xlane.xlu0 %2853
  %v2871 = vlaneseq
  %v2872 = vand.u32 %v2871, 127
  %v2873 = vlaneseq
  %v2874 = vshrl.u32 %v2873, 7
  %v2875 = vsub.s32 %v2872, %v2874
  %v2876 = vrot.slane %v2809, %v2875
  %v2877 = vadd.s32 %v2872, 4294967288
  %v2878 = vlaneseq
  %v2879 = vshrl.u32 %v2878, 7
  %v2880 = vsub.s32 %v2877, %v2879
  %v2881 = vrot.slane %v2812, %v2880
  %vm2882 = vcmask 130112
  %v2883 = vsel %vm2882, %v2881, %v2876
  %v2884 = vlaneseq
  %v2885 = vshrl.u32 %v2884, 7
  %v2886 = vsub.s32 %v2872, %v2885
  %v2887 = vrot.slane %v2815, %v2886
  %v2888 = vlaneseq
  %v2889 = vshrl.u32 %v2888, 7
  %v2890 = vsub.s32 %v2877, %v2889
  %v2891 = vrot.slane %v2818, %v2890
  %v2892 = vsel %vm2882, %v2891, %v2887
  %v2893 = vlaneseq
  %v2894 = vshrl.u32 %v2893, 7
  %v2895 = vsub.s32 %v2872, %v2894
  %v2896 = vrot.slane %v2821, %v2895
  %v2897 = vlaneseq
  %v2898 = vshrl.u32 %v2897, 7
  %v2899 = vsub.s32 %v2877, %v2898
  %v2900 = vrot.slane %v2824, %v2899
  %v2901 = vsel %vm2882, %v2900, %v2896
  %v2902 = vlaneseq
  %v2903 = vshrl.u32 %v2902, 7
  %v2904 = vsub.s32 %v2872, %v2903
  %v2905 = vrot.slane %v2827, %v2904
  %v2906 = vlaneseq
  %v2907 = vshrl.u32 %v2906, 7
  %v2908 = vsub.s32 %v2877, %v2907
  %v2909 = vrot.slane %v2830, %v2908
  %v2910 = vsel %vm2882, %v2909, %v2905
  %v2911 = vlaneseq
  %v2912 = vshrl.u32 %v2911, 7
  %v2913 = vsub.s32 %v2872, %v2912
  %v2914 = vrot.slane %v2833, %v2913
  %v2915 = vlaneseq
  %v2916 = vshrl.u32 %v2915, 7
  %v2917 = vsub.s32 %v2877, %v2916
  %v2918 = vrot.slane %v2836, %v2917
  %v2919 = vsel %vm2882, %v2918, %v2914
  %v2920 = vlaneseq
  %v2921 = vshrl.u32 %v2920, 7
  %v2922 = vsub.s32 %v2872, %v2921
  %v2923 = vrot.slane %v2839, %v2922
  %v2924 = vlaneseq
  %v2925 = vshrl.u32 %v2924, 7
  %v2926 = vsub.s32 %v2877, %v2925
  %v2927 = vrot.slane %v2842, %v2926
  %v2928 = vsel %vm2882, %v2927, %v2923
  %v2929 = vlaneseq
  %v2930 = vshrl.u32 %v2929, 7
  %v2931 = vsub.s32 %v2872, %v2930
  %v2932 = vrot.slane %v2845, %v2931
  %v2933 = vlaneseq
  %v2934 = vshrl.u32 %v2933, 7
  %v2935 = vsub.s32 %v2877, %v2934
  %v2936 = vrot.slane %v2848, %v2935
  %v2937 = vsel %vm2882, %v2936, %v2932
  %v2938 = vlaneseq
  %v2939 = vshrl.u32 %v2938, 7
  %v2940 = vsub.s32 %v2872, %v2939
  %v2941 = vrot.slane %v2851, %v2940
  %v2942 = vlaneseq
  %v2943 = vshrl.u32 %v2942, 7
  %v2944 = vsub.s32 %v2877, %v2943
  %v2945 = vrot.slane %v2854, %v2944
  %v2946 = vsel %vm2882, %v2945, %v2941
  %vm2947 = vcmask 1041409
  %v2948 = vsel %vm2947, %v2892, %v2883
  %vm2949 = vcmask 1042434
  %v2950 = vsel %vm2949, %v2901, %v2948
  %vm2951 = vcmask 1043459
  %v2952 = vsel %vm2951, %v2910, %v2950
  %vm2953 = vcmask 1044484
  %v2954 = vsel %vm2953, %v2919, %v2952
  %vm2955 = vcmask 1045509
  %v2956 = vsel %vm2955, %v2928, %v2954
  %vm2957 = vcmask 1046534
  %v2958 = vsel %vm2957, %v2937, %v2956
  %vm2959 = vcmask 1047559
  %v2960 = vsel %vm2959, %v2946, %v2958
  %vm2962 = vcmask 130048
  %v2963 = vsel %vm2962, %v2960, -inf
  %2964 = vmax.xlane.f32.xlu0 %v2963
  %v2965 = vpop.xlane.xlu0 %2964
  %v2967 = vlaneseq
  %v2968 = vshrl.u32 %v2967, 7
  %v2969 = vsub.s32 0, %v2968
  %v2970 = vrot.slane %v2965, %v2969
  %v2971 = vlaneseq
  %v2972 = vshrl.u32 %v2971, 7
  %v2973 = vsub.s32 1, %v2972
  %v2974 = vrot.slane %v2965, %v2973
  %v2975 = vlaneseq
  %v2976 = vshrl.u32 %v2975, 7
  %v2977 = vsub.s32 2, %v2976
  %v2978 = vrot.slane %v2965, %v2977
  %v2979 = vlaneseq
  %v2980 = vshrl.u32 %v2979, 7
  %v2981 = vsub.s32 3, %v2980
  %v2982 = vrot.slane %v2965, %v2981
  %v2983 = vlaneseq
  %v2984 = vshrl.u32 %v2983, 7
  %v2985 = vsub.s32 4, %v2984
  %v2986 = vrot.slane %v2965, %v2985
  %v2987 = vlaneseq
  %v2988 = vshrl.u32 %v2987, 7
  %v2989 = vsub.s32 5, %v2988
  %v2990 = vrot.slane %v2965, %v2989
  %v2991 = vlaneseq
  %v2992 = vshrl.u32 %v2991, 7
  %v2993 = vsub.s32 6, %v2992
  %v2994 = vrot.slane %v2965, %v2993
  %v2995 = vlaneseq
  %v2996 = vshrl.u32 %v2995, 7
  %v2997 = vsub.s32 7, %v2996
  %v2998 = vrot.slane %v2965, %v2997
  %v3007 = vsub.f32 %v2809, %v2970
  %v3008 = vsub.f32 %v2812, %v2970
  %v3009 = vsub.f32 %v2815, %v2974
  %v3010 = vsub.f32 %v2818, %v2974
  %v3011 = vsub.f32 %v2821, %v2978
  %v3012 = vsub.f32 %v2824, %v2978
  %v3013 = vsub.f32 %v2827, %v2982
  %v3014 = vsub.f32 %v2830, %v2982
  %v3015 = vsub.f32 %v2833, %v2986
  %v3016 = vsub.f32 %v2836, %v2986
  %v3017 = vsub.f32 %v2839, %v2990
  %v3018 = vsub.f32 %v2842, %v2990
  %v3019 = vsub.f32 %v2845, %v2994
  %v3020 = vsub.f32 %v2848, %v2994
  %v3021 = vsub.f32 %v2851, %v2998
  %v3022 = vsub.f32 %v2854, %v2998
  %v3023 = vmul.f32 %v3007, 1.442695
  %v3024 = vpow.pop %v3023
  %v3025 = vmul.f32 %v3008, 1.442695
  %v3026 = vpow.pop %v3025
  %v3027 = vmul.f32 %v3009, 1.442695
  %v3028 = vpow.pop %v3027
  %v3029 = vmul.f32 %v3010, 1.442695
  %v3030 = vpow.pop %v3029
  %v3031 = vmul.f32 %v3011, 1.442695
  %v3032 = vpow.pop %v3031
  %v3033 = vmul.f32 %v3012, 1.442695
  %v3034 = vpow.pop %v3033
  %v3035 = vmul.f32 %v3013, 1.442695
  %v3036 = vpow.pop %v3035
  %v3037 = vmul.f32 %v3014, 1.442695
  %v3038 = vpow.pop %v3037
  %v3039 = vmul.f32 %v3015, 1.442695
  %v3040 = vpow.pop %v3039
  %v3041 = vmul.f32 %v3016, 1.442695
  %v3042 = vpow.pop %v3041
  %v3043 = vmul.f32 %v3017, 1.442695
  %v3044 = vpow.pop %v3043
  %v3045 = vmul.f32 %v3018, 1.442695
  %v3046 = vpow.pop %v3045
  %v3047 = vmul.f32 %v3019, 1.442695
  %v3048 = vpow.pop %v3047
  %v3049 = vmul.f32 %v3020, 1.442695
  %v3050 = vpow.pop %v3049
  %v3051 = vmul.f32 %v3021, 1.442695
  %v3052 = vpow.pop %v3051
  %v3053 = vmul.f32 %v3022, 1.442695
  %v3054 = vpow.pop %v3053
  %3071 = vset.pattern.permute.xlu0 0
  %3072 = vperm.xlu0 %3071, %v3024
  %v3073 = vpop.permute.xlu0 %3072
  %3074 = vset.pattern.permute.xlu0 0
  %3075 = vperm.xlu0 %3074, %v3026
  %v3076 = vpop.permute.xlu0 %3075
  %3077 = vset.pattern.permute.xlu0 0
  %3078 = vperm.xlu0 %3077, %v3028
  %v3079 = vpop.permute.xlu0 %3078
  %3080 = vset.pattern.permute.xlu0 0
  %3081 = vperm.xlu0 %3080, %v3030
  %v3082 = vpop.permute.xlu0 %3081
  %3083 = vset.pattern.permute.xlu0 0
  %3084 = vperm.xlu0 %3083, %v3032
  %v3085 = vpop.permute.xlu0 %3084
  %3086 = vset.pattern.permute.xlu0 0
  %3087 = vperm.xlu0 %3086, %v3034
  %v3088 = vpop.permute.xlu0 %3087
  %3089 = vset.pattern.permute.xlu0 0
  %3090 = vperm.xlu0 %3089, %v3036
  %v3091 = vpop.permute.xlu0 %3090
  %3092 = vset.pattern.permute.xlu0 0
  %3093 = vperm.xlu0 %3092, %v3038
  %v3094 = vpop.permute.xlu0 %3093
  %3095 = vset.pattern.permute.xlu0 0
  %3096 = vperm.xlu0 %3095, %v3040
  %v3097 = vpop.permute.xlu0 %3096
  %3098 = vset.pattern.permute.xlu0 0
  %3099 = vperm.xlu0 %3098, %v3042
  %v3100 = vpop.permute.xlu0 %3099
  %3101 = vset.pattern.permute.xlu0 0
  %3102 = vperm.xlu0 %3101, %v3044
  %v3103 = vpop.permute.xlu0 %3102
  %3104 = vset.pattern.permute.xlu0 0
  %3105 = vperm.xlu0 %3104, %v3046
  %v3106 = vpop.permute.xlu0 %3105
  %3107 = vset.pattern.permute.xlu0 0
  %3108 = vperm.xlu0 %3107, %v3048
  %v3109 = vpop.permute.xlu0 %3108
  %3110 = vset.pattern.permute.xlu0 0
  %3111 = vperm.xlu0 %3110, %v3050
  %v3112 = vpop.permute.xlu0 %3111
  %3113 = vset.pattern.permute.xlu0 0
  %3114 = vperm.xlu0 %3113, %v3052
  %v3115 = vpop.permute.xlu0 %3114
  %3116 = vset.pattern.permute.xlu0 0
  %3117 = vperm.xlu0 %3116, %v3054
  %v3118 = vpop.permute.xlu0 %3117
  %v3119 = vlaneseq
  %v3120 = vshrl.u32 %v3119, 7
  %v3121 = vsub.s32 %v2872, %v3120
  %v3122 = vrot.slane %v3073, %v3121
  %v3123 = vlaneseq
  %v3124 = vshrl.u32 %v3123, 7
  %v3125 = vsub.s32 %v2877, %v3124
  %v3126 = vrot.slane %v3076, %v3125
  %v3127 = vsel %vm2882, %v3126, %v3122
  %v3128 = vlaneseq
  %v3129 = vshrl.u32 %v3128, 7
  %v3130 = vsub.s32 %v2872, %v3129
  %v3131 = vrot.slane %v3079, %v3130
  %v3132 = vlaneseq
  %v3133 = vshrl.u32 %v3132, 7
  %v3134 = vsub.s32 %v2877, %v3133
  %v3135 = vrot.slane %v3082, %v3134
  %v3136 = vsel %vm2882, %v3135, %v3131
  %v3137 = vlaneseq
  %v3138 = vshrl.u32 %v3137, 7
  %v3139 = vsub.s32 %v2872, %v3138
  %v3140 = vrot.slane %v3085, %v3139
  %v3141 = vlaneseq
  %v3142 = vshrl.u32 %v3141, 7
  %v3143 = vsub.s32 %v2877, %v3142
  %v3144 = vrot.slane %v3088, %v3143
  %v3145 = vsel %vm2882, %v3144, %v3140
  %v3146 = vlaneseq
  %v3147 = vshrl.u32 %v3146, 7
  %v3148 = vsub.s32 %v2872, %v3147
  %v3149 = vrot.slane %v3091, %v3148
  %v3150 = vlaneseq
  %v3151 = vshrl.u32 %v3150, 7
  %v3152 = vsub.s32 %v2877, %v3151
  %v3153 = vrot.slane %v3094, %v3152
  %v3154 = vsel %vm2882, %v3153, %v3149
  %v3155 = vlaneseq
  %v3156 = vshrl.u32 %v3155, 7
  %v3157 = vsub.s32 %v2872, %v3156
  %v3158 = vrot.slane %v3097, %v3157
  %v3159 = vlaneseq
  %v3160 = vshrl.u32 %v3159, 7
  %v3161 = vsub.s32 %v2877, %v3160
  %v3162 = vrot.slane %v3100, %v3161
  %v3163 = vsel %vm2882, %v3162, %v3158
  %v3164 = vlaneseq
  %v3165 = vshrl.u32 %v3164, 7
  %v3166 = vsub.s32 %v2872, %v3165
  %v3167 = vrot.slane %v3103, %v3166
  %v3168 = vlaneseq
  %v3169 = vshrl.u32 %v3168, 7
  %v3170 = vsub.s32 %v2877, %v3169
  %v3171 = vrot.slane %v3106, %v3170
  %v3172 = vsel %vm2882, %v3171, %v3167
  %v3173 = vlaneseq
  %v3174 = vshrl.u32 %v3173, 7
  %v3175 = vsub.s32 %v2872, %v3174
  %v3176 = vrot.slane %v3109, %v3175
  %v3177 = vlaneseq
  %v3178 = vshrl.u32 %v3177, 7
  %v3179 = vsub.s32 %v2877, %v3178
  %v3180 = vrot.slane %v3112, %v3179
  %v3181 = vsel %vm2882, %v3180, %v3176
  %v3182 = vlaneseq
  %v3183 = vshrl.u32 %v3182, 7
  %v3184 = vsub.s32 %v2872, %v3183
  %v3185 = vrot.slane %v3115, %v3184
  %v3186 = vlaneseq
  %v3187 = vshrl.u32 %v3186, 7
  %v3188 = vsub.s32 %v2877, %v3187
  %v3189 = vrot.slane %v3118, %v3188
  %v3190 = vsel %vm2882, %v3189, %v3185
  %v3191 = vsel %vm2947, %v3136, %v3127
  %v3192 = vsel %vm2949, %v3145, %v3191
  %v3193 = vsel %vm2951, %v3154, %v3192
  %v3194 = vsel %vm2953, %v3163, %v3193
  %v3195 = vsel %vm2955, %v3172, %v3194
  %v3196 = vsel %vm2957, %v3181, %v3195
  %v3197 = vsel %vm2959, %v3190, %v3196
  %v3199 = vsel %vm2962, %v3197, 0.0
  %3200 = vadd.xlane.f32.xlu0 %v3199
  %v3201 = vpop.xlane.xlu0 %3200
  %v3203 = vlaneseq
  %v3204 = vshrl.u32 %v3203, 7
  %v3205 = vsub.s32 0, %v3204
  %v3206 = vrot.slane %v3201, %v3205
  %v3207 = vlaneseq
  %v3208 = vshrl.u32 %v3207, 7
  %v3209 = vsub.s32 1, %v3208
  %v3210 = vrot.slane %v3201, %v3209
  %v3211 = vlaneseq
  %v3212 = vshrl.u32 %v3211, 7
  %v3213 = vsub.s32 2, %v3212
  %v3214 = vrot.slane %v3201, %v3213
  %v3215 = vlaneseq
  %v3216 = vshrl.u32 %v3215, 7
  %v3217 = vsub.s32 3, %v3216
  %v3218 = vrot.slane %v3201, %v3217
  %v3219 = vlaneseq
  %v3220 = vshrl.u32 %v3219, 7
  %v3221 = vsub.s32 4, %v3220
  %v3222 = vrot.slane %v3201, %v3221
  %v3223 = vlaneseq
  %v3224 = vshrl.u32 %v3223, 7
  %v3225 = vsub.s32 5, %v3224
  %v3226 = vrot.slane %v3201, %v3225
  %v3227 = vlaneseq
  %v3228 = vshrl.u32 %v3227, 7
  %v3229 = vsub.s32 6, %v3228
  %v3230 = vrot.slane %v3201, %v3229
  %v3231 = vlaneseq
  %v3232 = vshrl.u32 %v3231, 7
  %v3233 = vsub.s32 7, %v3232
  %v3234 = vrot.slane %v3201, %v3233
  %v3243 = vrcp.pop %v3206
  %v3244 = vmul.f32 %v3024, %v3243
  %v3245 = vmul.f32 %v3026, %v3243
  %v3246 = vrcp.pop %v3210
  %v3247 = vmul.f32 %v3028, %v3246
  %v3248 = vmul.f32 %v3030, %v3246
  %v3249 = vrcp.pop %v3214
  %v3250 = vmul.f32 %v3032, %v3249
  %v3251 = vmul.f32 %v3034, %v3249
  %v3252 = vrcp.pop %v3218
  %v3253 = vmul.f32 %v3036, %v3252
  %v3254 = vmul.f32 %v3038, %v3252
  %v3255 = vrcp.pop %v3222
  %v3256 = vmul.f32 %v3040, %v3255
  %v3257 = vmul.f32 %v3042, %v3255
  %v3258 = vrcp.pop %v3226
  %v3259 = vmul.f32 %v3044, %v3258
  %v3260 = vmul.f32 %v3046, %v3258
  %v3261 = vrcp.pop %v3230
  %v3262 = vmul.f32 %v3048, %v3261
  %v3263 = vmul.f32 %v3050, %v3261
  %v3264 = vrcp.pop %v3234
  %v3265 = vmul.f32 %v3052, %v3264
  %v3266 = vmul.f32 %v3054, %v3264
  %3268 = vset.pattern.permute.xlu0 0
  %3269 = vperm.xlu0 %3268, %v3244
  %v3270 = vpop.permute.xlu0 %3269
  %3273 = vset.pattern.permute.xlu0 0
  %3274 = vperm.xlu0 %3273, %v3245
  %v3275 = vpop.permute.xlu0 %3274
  %3278 = vset.pattern.permute.xlu0 0
  %3279 = vperm.xlu0 %3278, %v3247
  %v3280 = vpop.permute.xlu0 %3279
  %3283 = vset.pattern.permute.xlu0 0
  %3284 = vperm.xlu0 %3283, %v3248
  %v3285 = vpop.permute.xlu0 %3284
  %3288 = vset.pattern.permute.xlu0 0
  %3289 = vperm.xlu0 %3288, %v3250
  %v3290 = vpop.permute.xlu0 %3289
  %3293 = vset.pattern.permute.xlu0 0
  %3294 = vperm.xlu0 %3293, %v3251
  %v3295 = vpop.permute.xlu0 %3294
  %3298 = vset.pattern.permute.xlu0 0
  %3299 = vperm.xlu0 %3298, %v3253
  %v3300 = vpop.permute.xlu0 %3299
  %3303 = vset.pattern.permute.xlu0 0
  %3304 = vperm.xlu0 %3303, %v3254
  %v3305 = vpop.permute.xlu0 %3304
  %3308 = vset.pattern.permute.xlu0 0
  %3309 = vperm.xlu0 %3308, %v3256
  %v3310 = vpop.permute.xlu0 %3309
  %3313 = vset.pattern.permute.xlu0 0
  %3314 = vperm.xlu0 %3313, %v3257
  %v3315 = vpop.permute.xlu0 %3314
  %3318 = vset.pattern.permute.xlu0 0
  %3319 = vperm.xlu0 %3318, %v3259
  %v3320 = vpop.permute.xlu0 %3319
  %3323 = vset.pattern.permute.xlu0 0
  %3324 = vperm.xlu0 %3323, %v3260
  %v3325 = vpop.permute.xlu0 %3324
  %3328 = vset.pattern.permute.xlu0 0
  %3329 = vperm.xlu0 %3328, %v3262
  %v3330 = vpop.permute.xlu0 %3329
  %3333 = vset.pattern.permute.xlu0 0
  %3334 = vperm.xlu0 %3333, %v3263
  %v3335 = vpop.permute.xlu0 %3334
  %3338 = vset.pattern.permute.xlu0 0
  %3339 = vperm.xlu0 %3338, %v3265
  %v3340 = vpop.permute.xlu0 %3339
  %3343 = vset.pattern.permute.xlu0 0
  %3344 = vperm.xlu0 %3343, %v3266
  %v3345 = vpop.permute.xlu0 %3344
  %v3347 = vmul.f32 %v3270, %v2349
  %v3348 = vmul.f32 %v3275, %v2350
  %v3349 = vmul.f32 %v3280, %v2351
  %v3350 = vmul.f32 %v3285, %v2352
  %v3351 = vmul.f32 %v3290, %v2353
  %v3352 = vmul.f32 %v3295, %v2354
  %v3353 = vmul.f32 %v3300, %v2355
  %v3354 = vmul.f32 %v3305, %v2356
  %v3355 = vmul.f32 %v3310, %v2357
  %v3356 = vmul.f32 %v3315, %v2358
  %v3357 = vmul.f32 %v3320, %v2359
  %v3358 = vmul.f32 %v3325, %v2360
  %v3359 = vmul.f32 %v3330, %v2361
  %v3360 = vmul.f32 %v3335, %v2362
  %v3361 = vmul.f32 %v3340, %v2363
  %v3362 = vmul.f32 %v3345, %v2364
  %v3363 = vsel %vm96, %v3347, 0.0
  %v3364 = vsel %vm96, %v3348, 0.0
  %v3365 = vadd.f32 %v3363, %v3364
  %v3366 = vrot.slane %v3365, 4
  %v3367 = vadd.f32 %v3365, %v3366
  %v3368 = vrot.slane %v3367, 2
  %v3369 = vadd.f32 %v3367, %v3368
  %v3370 = vrot.slane %v3369, 1
  %v3371 = vadd.f32 %v3369, %v3370
  %v3372 = vsel %vm96, %v3349, 0.0
  %v3373 = vsel %vm96, %v3350, 0.0
  %v3374 = vadd.f32 %v3372, %v3373
  %v3375 = vrot.slane %v3374, 4
  %v3376 = vadd.f32 %v3374, %v3375
  %v3377 = vrot.slane %v3376, 2
  %v3378 = vadd.f32 %v3376, %v3377
  %v3379 = vrot.slane %v3378, 1
  %v3380 = vadd.f32 %v3378, %v3379
  %v3381 = vsel %vm96, %v3351, 0.0
  %v3382 = vsel %vm96, %v3352, 0.0
  %v3383 = vadd.f32 %v3381, %v3382
  %v3384 = vrot.slane %v3383, 4
  %v3385 = vadd.f32 %v3383, %v3384
  %v3386 = vrot.slane %v3385, 2
  %v3387 = vadd.f32 %v3385, %v3386
  %v3388 = vrot.slane %v3387, 1
  %v3389 = vadd.f32 %v3387, %v3388
  %v3390 = vsel %vm96, %v3353, 0.0
  %v3391 = vsel %vm96, %v3354, 0.0
  %v3392 = vadd.f32 %v3390, %v3391
  %v3393 = vrot.slane %v3392, 4
  %v3394 = vadd.f32 %v3392, %v3393
  %v3395 = vrot.slane %v3394, 2
  %v3396 = vadd.f32 %v3394, %v3395
  %v3397 = vrot.slane %v3396, 1
  %v3398 = vadd.f32 %v3396, %v3397
  %v3399 = vsel %vm96, %v3355, 0.0
  %v3400 = vsel %vm96, %v3356, 0.0
  %v3401 = vadd.f32 %v3399, %v3400
  %v3402 = vrot.slane %v3401, 4
  %v3403 = vadd.f32 %v3401, %v3402
  %v3404 = vrot.slane %v3403, 2
  %v3405 = vadd.f32 %v3403, %v3404
  %v3406 = vrot.slane %v3405, 1
  %v3407 = vadd.f32 %v3405, %v3406
  %v3408 = vsel %vm96, %v3357, 0.0
  %v3409 = vsel %vm96, %v3358, 0.0
  %v3410 = vadd.f32 %v3408, %v3409
  %v3411 = vrot.slane %v3410, 4
  %v3412 = vadd.f32 %v3410, %v3411
  %v3413 = vrot.slane %v3412, 2
  %v3414 = vadd.f32 %v3412, %v3413
  %v3415 = vrot.slane %v3414, 1
  %v3416 = vadd.f32 %v3414, %v3415
  %v3417 = vsel %vm96, %v3359, 0.0
  %v3418 = vsel %vm96, %v3360, 0.0
  %v3419 = vadd.f32 %v3417, %v3418
  %v3420 = vrot.slane %v3419, 4
  %v3421 = vadd.f32 %v3419, %v3420
  %v3422 = vrot.slane %v3421, 2
  %v3423 = vadd.f32 %v3421, %v3422
  %v3424 = vrot.slane %v3423, 1
  %v3425 = vadd.f32 %v3423, %v3424
  %v3426 = vsel %vm96, %v3361, 0.0
  %v3427 = vsel %vm96, %v3362, 0.0
  %v3428 = vadd.f32 %v3426, %v3427
  %v3429 = vrot.slane %v3428, 4
  %v3430 = vadd.f32 %v3428, %v3429
  %v3431 = vrot.slane %v3430, 2
  %v3432 = vadd.f32 %v3430, %v3431
  %v3433 = vrot.slane %v3432, 1
  %v3434 = vadd.f32 %v3432, %v3433
  %v3435 = vld [vmem:[%s16] sm:$0xff]
  %v3436 = vld [vmem:[%s16 + $0x8] sm:$0xff]
  %v3437 = vld [vmem:[%s16 + $0x10] sm:$0xff]
  %v3438 = vld [vmem:[%s16 + $0x18] sm:$0xff]
  %v3439 = vld [vmem:[%s17] sm:$0x1]
  %v3441 = vlaneseq
  %v3442 = vshrl.u32 %v3441, 7
  %v3443 = vsub.s32 0, %v3442
  %v3444 = vrot.slane %v3439, %v3443
  %3446 = vmatprep.subr.mxu0 0.0
  %3447 = vmatpush1.msra.mxu0 %v3435
  %3448 = vmatprep.subr.mxu0 0.0
  %3449 = vmatpush1.msra.mxu0 %v3436
  %3450 = vmatprep.subr.mxu0 0.0
  %3451 = vmatpush1.msra.mxu0 %v3437
  %3452 = vmatprep.subr.mxu0 0.0
  %3453 = vmatpush1.msra.mxu0 %v3438
  %3454 = vmatprep.subr.mxu0 0.0
  %3455 = vmatpush1.msra.mxu0 0.0
  %3456 = vmatprep.subr.mxu0 0.0
  %3457 = vmatpush1.msra.mxu0 0.0
  %3458 = vmatprep.subr.mxu0 0.0
  %3459 = vmatpush1.msra.mxu0 0.0
  %3460 = vmatprep.subr.mxu0 0.0
  %3461 = vmatpush1.msra.mxu0 0.0
  %3462 = vmatprep.subr.mxu0 0.0
  %3463 = vmatpush1.msra.mxu0 0.0
  %3464 = vmatprep.subr.mxu0 0.0
  %3465 = vmatpush1.msra.mxu0 0.0
  %3466 = vmatprep.subr.mxu0 0.0
  %3467 = vmatpush1.msra.mxu0 0.0
  %3468 = vmatprep.subr.mxu0 0.0
  %3469 = vmatpush1.msra.mxu0 0.0
  %3470 = vmatprep.subr.mxu0 0.0
  %3471 = vmatpush1.msra.mxu0 0.0
  %3472 = vmatprep.subr.mxu0 0.0
  %3473 = vmatpush1.msra.mxu0 0.0
  %3474 = vmatprep.subr.mxu0 0.0
  %3475 = vmatpush1.msra.mxu0 0.0
  %3476 = vmatprep.subr.mxu0 0.0
  %3477 = vmatpush1.msra.mxu0 0.0
  %3478 = vmatprep.subr.mxu0 0.0
  %3479 = vmatpush1.msra.mxu0 0.0
  %3480 = vmatprep.subr.mxu0 0.0
  %3481 = vmatpush1.msra.mxu0 0.0
  %3482 = vmatprep.subr.mxu0 0.0
  %3483 = vmatpush1.msra.mxu0 0.0
  %3484 = vmatprep.subr.mxu0 0.0
  %3485 = vmatpush1.msra.mxu0 0.0
  %3486 = vmatprep.subr.mxu0 0.0
  %3487 = vmatpush1.msra.mxu0 0.0
  %3488 = vmatprep.subr.mxu0 0.0
  %3489 = vmatpush1.msra.mxu0 0.0
  %3490 = vmatprep.subr.mxu0 0.0
  %3491 = vmatpush1.msra.mxu0 0.0
  %3492 = vmatprep.subr.mxu0 0.0
  %3493 = vmatpush1.msra.mxu0 0.0
  %3494 = vmatprep.subr.mxu0 0.0
  %3495 = vmatpush1.msra.mxu0 0.0
  %3496 = vmatprep.subr.mxu0 0.0
  %3497 = vmatpush1.msra.mxu0 0.0
  %3498 = vmatprep.subr.mxu0 0.0
  %3499 = vmatpush1.msra.mxu0 0.0
  %3500 = vmatprep.subr.mxu0 0.0
  %3501 = vmatpush1.msra.mxu0 0.0
  %3502 = vmatprep.subr.mxu0 0.0
  %3503 = vmatpush1.msra.mxu0 0.0
  %3504 = vmatprep.subr.mxu0 0.0
  %3505 = vmatpush1.msra.mxu0 0.0
  %3506 = vmatprep.subr.mxu0 0.0
  %3507 = vmatpush1.msra.mxu0 0.0
  %3508 = vmatprep.subr.mxu0 0.0
  %3509 = vmatpush1.msra.mxu0 0.0
  %3510 = vmatprep.mubr.f32.mxu0 0.0
  %3511 = vmatmul.mubr.f32.gmra.mrb[0].mxu0 %v2567
  %v3512 = vpop.f32.mrb[0].mxu0
  %v3513 = vadd.f32 %v3444, %v3512
  %v3514 = vpop.f32.mrb[0].mxu0
  %3515 = vdwg.mxu0
  %v3516 = vmax.f32 %v3513, 0.0
  %v3517 = vxor.u32 %v3513, 2147483648
  %v3518 = vmul.f32 %v3517, 1.442695
  %v3519 = vpow.pop %v3518
  %v3520 = vadd.f32 %v3519, 1.0
  %v3521 = vrcp.pop %v3520
  %v3522 = vmul.f32 1.0, %v3521
  %v3523 = vld [vmem:[%s18] sm:$0xff]
  %v3524 = vld [vmem:[%s18 + $0x8] sm:$0xff]
  %v3525 = vld [vmem:[%s18 + $0x10] sm:$0xff]
  %v3526 = vld [vmem:[%s18 + $0x18] sm:$0xff]
  %v3527 = vld [vmem:[%s19] sm:$0x1]
  %v3529 = vlaneseq
  %v3530 = vshrl.u32 %v3529, 7
  %v3531 = vsub.s32 0, %v3530
  %v3532 = vrot.slane %v3527, %v3531
  %v3542 = vsel %vm2947, %v3380, %v3371
  %v3543 = vsel %vm2949, %v3389, %v3542
  %v3544 = vsel %vm2951, %v3398, %v3543
  %v3545 = vsel %vm2953, %v3407, %v3544
  %v3546 = vsel %vm2955, %v3416, %v3545
  %v3547 = vsel %vm2957, %v3425, %v3546
  %v3548 = vsel %vm2959, %v3434, %v3547
  %v3549 = vsel %vm96, %v3548, 0
  %3551 = vmatprep.subr.mxu0 0.0
  %3552 = vmatpush1.msra.mxu0 %v3523
  %3553 = vmatprep.subr.mxu0 0.0
  %3554 = vmatpush1.msra.mxu0 %v3524
  %3555 = vmatprep.subr.mxu0 0.0
  %3556 = vmatpush1.msra.mxu0 %v3525
  %3557 = vmatprep.subr.mxu0 0.0
  %3558 = vmatpush1.msra.mxu0 %v3526
  %3559 = vmatprep.subr.mxu0 0.0
  %3560 = vmatpush1.msra.mxu0 0.0
  %3561 = vmatprep.subr.mxu0 0.0
  %3562 = vmatpush1.msra.mxu0 0.0
  %3563 = vmatprep.subr.mxu0 0.0
  %3564 = vmatpush1.msra.mxu0 0.0
  %3565 = vmatprep.subr.mxu0 0.0
  %3566 = vmatpush1.msra.mxu0 0.0
  %3567 = vmatprep.subr.mxu0 0.0
  %3568 = vmatpush1.msra.mxu0 0.0
  %3569 = vmatprep.subr.mxu0 0.0
  %3570 = vmatpush1.msra.mxu0 0.0
  %3571 = vmatprep.subr.mxu0 0.0
  %3572 = vmatpush1.msra.mxu0 0.0
  %3573 = vmatprep.subr.mxu0 0.0
  %3574 = vmatpush1.msra.mxu0 0.0
  %3575 = vmatprep.subr.mxu0 0.0
  %3576 = vmatpush1.msra.mxu0 0.0
  %3577 = vmatprep.subr.mxu0 0.0
  %3578 = vmatpush1.msra.mxu0 0.0
  %3579 = vmatprep.subr.mxu0 0.0
  %3580 = vmatpush1.msra.mxu0 0.0
  %3581 = vmatprep.subr.mxu0 0.0
  %3582 = vmatpush1.msra.mxu0 0.0
  %3583 = vmatprep.subr.mxu0 0.0
  %3584 = vmatpush1.msra.mxu0 0.0
  %3585 = vmatprep.subr.mxu0 0.0
  %3586 = vmatpush1.msra.mxu0 0.0
  %3587 = vmatprep.subr.mxu0 0.0
  %3588 = vmatpush1.msra.mxu0 0.0
  %3589 = vmatprep.subr.mxu0 0.0
  %3590 = vmatpush1.msra.mxu0 0.0
  %3591 = vmatprep.subr.mxu0 0.0
  %3592 = vmatpush1.msra.mxu0 0.0
  %3593 = vmatprep.subr.mxu0 0.0
  %3594 = vmatpush1.msra.mxu0 0.0
  %3595 = vmatprep.subr.mxu0 0.0
  %3596 = vmatpush1.msra.mxu0 0.0
  %3597 = vmatprep.subr.mxu0 0.0
  %3598 = vmatpush1.msra.mxu0 0.0
  %3599 = vmatprep.subr.mxu0 0.0
  %3600 = vmatpush1.msra.mxu0 0.0
  %3601 = vmatprep.subr.mxu0 0.0
  %3602 = vmatpush1.msra.mxu0 0.0
  %3603 = vmatprep.subr.mxu0 0.0
  %3604 = vmatpush1.msra.mxu0 0.0
  %3605 = vmatprep.subr.mxu0 0.0
  %3606 = vmatpush1.msra.mxu0 0.0
  %3607 = vmatprep.subr.mxu0 0.0
  %3608 = vmatpush1.msra.mxu0 0.0
  %3609 = vmatprep.subr.mxu0 0.0
  %3610 = vmatpush1.msra.mxu0 0.0
  %3611 = vmatprep.subr.mxu0 0.0
  %3612 = vmatpush1.msra.mxu0 0.0
  %3613 = vmatprep.subr.mxu0 0.0
  %3614 = vmatpush1.msra.mxu0 0.0
  %3615 = vmatprep.mubr.f32.mxu0 0.0
  %3616 = vmatmul.mubr.f32.gmra.mrb[0].mxu0 %v3549
  %v3617 = vpop.f32.mrb[0].mxu0
  %v3618 = vadd.f32 %v3532, %v3617
  %v3619 = vpop.f32.mrb[0].mxu0
  %3620 = vdwg.mxu0
  %v3621 = vmax.f32 %v3618, 0.0
  %v3622 = vmul.f32 %v3516, %v3621
  %v3623 = vld [vmem:[%s20] sm:$0xff]
  %v3624 = vld [vmem:[%s20 + $0x8] sm:$0xff]
  %v3625 = vld [vmem:[%s20 + $0x10] sm:$0xff]
  %v3626 = vld [vmem:[%s20 + $0x18] sm:$0xff]
  %v3627 = vld [vmem:[%s21] sm:$0x1]
  %v3629 = vlaneseq
  %v3630 = vshrl.u32 %v3629, 7
  %v3631 = vsub.s32 0, %v3630
  %v3632 = vrot.slane %v3627, %v3631
  %v3635 = vsel %vm96, %v3622, 0
  %3637 = vmatprep.subr.mxu0 0.0
  %3638 = vmatpush1.msra.mxu0 %v3623
  %3639 = vmatprep.subr.mxu0 0.0
  %3640 = vmatpush1.msra.mxu0 %v3624
  %3641 = vmatprep.subr.mxu0 0.0
  %3642 = vmatpush1.msra.mxu0 %v3625
  %3643 = vmatprep.subr.mxu0 0.0
  %3644 = vmatpush1.msra.mxu0 %v3626
  %3645 = vmatprep.subr.mxu0 0.0
  %3646 = vmatpush1.msra.mxu0 0.0
  %3647 = vmatprep.subr.mxu0 0.0
  %3648 = vmatpush1.msra.mxu0 0.0
  %3649 = vmatprep.subr.mxu0 0.0
  %3650 = vmatpush1.msra.mxu0 0.0
  %3651 = vmatprep.subr.mxu0 0.0
  %3652 = vmatpush1.msra.mxu0 0.0
  %3653 = vmatprep.subr.mxu0 0.0
  %3654 = vmatpush1.msra.mxu0 0.0
  %3655 = vmatprep.subr.mxu0 0.0
  %3656 = vmatpush1.msra.mxu0 0.0
  %3657 = vmatprep.subr.mxu0 0.0
  %3658 = vmatpush1.msra.mxu0 0.0
  %3659 = vmatprep.subr.mxu0 0.0
  %3660 = vmatpush1.msra.mxu0 0.0
  %3661 = vmatprep.subr.mxu0 0.0
  %3662 = vmatpush1.msra.mxu0 0.0
  %3663 = vmatprep.subr.mxu0 0.0
  %3664 = vmatpush1.msra.mxu0 0.0
  %3665 = vmatprep.subr.mxu0 0.0
  %3666 = vmatpush1.msra.mxu0 0.0
  %3667 = vmatprep.subr.mxu0 0.0
  %3668 = vmatpush1.msra.mxu0 0.0
  %3669 = vmatprep.subr.mxu0 0.0
  %3670 = vmatpush1.msra.mxu0 0.0
  %3671 = vmatprep.subr.mxu0 0.0
  %3672 = vmatpush1.msra.mxu0 0.0
  %3673 = vmatprep.subr.mxu0 0.0
  %3674 = vmatpush1.msra.mxu0 0.0
  %3675 = vmatprep.subr.mxu0 0.0
  %3676 = vmatpush1.msra.mxu0 0.0
  %3677 = vmatprep.subr.mxu0 0.0
  %3678 = vmatpush1.msra.mxu0 0.0
  %3679 = vmatprep.subr.mxu0 0.0
  %3680 = vmatpush1.msra.mxu0 0.0
  %3681 = vmatprep.subr.mxu0 0.0
  %3682 = vmatpush1.msra.mxu0 0.0
  %3683 = vmatprep.subr.mxu0 0.0
  %3684 = vmatpush1.msra.mxu0 0.0
  %3685 = vmatprep.subr.mxu0 0.0
  %3686 = vmatpush1.msra.mxu0 0.0
  %3687 = vmatprep.subr.mxu0 0.0
  %3688 = vmatpush1.msra.mxu0 0.0
  %3689 = vmatprep.subr.mxu0 0.0
  %3690 = vmatpush1.msra.mxu0 0.0
  %3691 = vmatprep.subr.mxu0 0.0
  %3692 = vmatpush1.msra.mxu0 0.0
  %3693 = vmatprep.subr.mxu0 0.0
  %3694 = vmatpush1.msra.mxu0 0.0
  %3695 = vmatprep.subr.mxu0 0.0
  %3696 = vmatpush1.msra.mxu0 0.0
  %3697 = vmatprep.subr.mxu0 0.0
  %3698 = vmatpush1.msra.mxu0 0.0
  %3699 = vmatprep.subr.mxu0 0.0
  %3700 = vmatpush1.msra.mxu0 0.0
  %3701 = vmatprep.mubr.f32.mxu0 0.0
  %3702 = vmatmul.mubr.f32.gmra.mrb[0].mxu0 %v3635
  %v3703 = vpop.f32.mrb[0].mxu0
  %v3704 = vadd.f32 %v3632, %v3703
  %v3705 = vpop.f32.mrb[0].mxu0
  %3706 = vdwg.mxu0
  %v3707 = vmax.f32 %v3704, 0.0
  %v3708 = vld [vmem:[%s22] sm:$0xff]
  %v3709 = vld [vmem:[%s22 + $0x8] sm:$0xff]
  %v3710 = vld [vmem:[%s22 + $0x10] sm:$0xff]
  %v3711 = vld [vmem:[%s22 + $0x18] sm:$0xff]
  %v3712 = vld [vmem:[%s22 + $0x20] sm:$0xff]
  %v3713 = vld [vmem:[%s22 + $0x28] sm:$0xff]
  %v3714 = vld [vmem:[%s22 + $0x30] sm:$0xff]
  %v3715 = vld [vmem:[%s22 + $0x38] sm:$0xff]
  %v3716 = vld [vmem:[%s23] sm:$0x1]
  %v3718 = vlaneseq
  %v3719 = vshrl.u32 %v3718, 7
  %v3720 = vsub.s32 0, %v3719
  %v3721 = vrot.slane %v3716, %v3720
  %vm3723 = vcmask 523264
  %v3725 = vsel %vm3723, %v3707, 0
  %3727 = vmatprep.subr.mxu0 0.0
  %3728 = vmatpush1.msra.mxu0 %v3708
  %3729 = vmatprep.subr.mxu0 0.0
  %3730 = vmatpush1.msra.mxu0 %v3709
  %3731 = vmatprep.subr.mxu0 0.0
  %3732 = vmatpush1.msra.mxu0 %v3710
  %3733 = vmatprep.subr.mxu0 0.0
  %3734 = vmatpush1.msra.mxu0 %v3711
  %3735 = vmatprep.subr.mxu0 0.0
  %3736 = vmatpush1.msra.mxu0 %v3712
  %3737 = vmatprep.subr.mxu0 0.0
  %3738 = vmatpush1.msra.mxu0 %v3713
  %3739 = vmatprep.subr.mxu0 0.0
  %3740 = vmatpush1.msra.mxu0 %v3714
  %3741 = vmatprep.subr.mxu0 0.0
  %3742 = vmatpush1.msra.mxu0 %v3715
  %3743 = vmatprep.subr.mxu0 0.0
  %3744 = vmatpush1.msra.mxu0 0.0
  %3745 = vmatprep.subr.mxu0 0.0
  %3746 = vmatpush1.msra.mxu0 0.0
  %3747 = vmatprep.subr.mxu0 0.0
  %3748 = vmatpush1.msra.mxu0 0.0
  %3749 = vmatprep.subr.mxu0 0.0
  %3750 = vmatpush1.msra.mxu0 0.0
  %3751 = vmatprep.subr.mxu0 0.0
  %3752 = vmatpush1.msra.mxu0 0.0
  %3753 = vmatprep.subr.mxu0 0.0
  %3754 = vmatpush1.msra.mxu0 0.0
  %3755 = vmatprep.subr.mxu0 0.0
  %3756 = vmatpush1.msra.mxu0 0.0
  %3757 = vmatprep.subr.mxu0 0.0
  %3758 = vmatpush1.msra.mxu0 0.0
  %3759 = vmatprep.subr.mxu0 0.0
  %3760 = vmatpush1.msra.mxu0 0.0
  %3761 = vmatprep.subr.mxu0 0.0
  %3762 = vmatpush1.msra.mxu0 0.0
  %3763 = vmatprep.subr.mxu0 0.0
  %3764 = vmatpush1.msra.mxu0 0.0
  %3765 = vmatprep.subr.mxu0 0.0
  %3766 = vmatpush1.msra.mxu0 0.0
  %3767 = vmatprep.subr.mxu0 0.0
  %3768 = vmatpush1.msra.mxu0 0.0
  %3769 = vmatprep.subr.mxu0 0.0
  %3770 = vmatpush1.msra.mxu0 0.0
  %3771 = vmatprep.subr.mxu0 0.0
  %3772 = vmatpush1.msra.mxu0 0.0
  %3773 = vmatprep.subr.mxu0 0.0
  %3774 = vmatpush1.msra.mxu0 0.0
  %3775 = vmatprep.subr.mxu0 0.0
  %3776 = vmatpush1.msra.mxu0 0.0
  %3777 = vmatprep.subr.mxu0 0.0
  %3778 = vmatpush1.msra.mxu0 0.0
  %3779 = vmatprep.subr.mxu0 0.0
  %3780 = vmatpush1.msra.mxu0 0.0
  %3781 = vmatprep.subr.mxu0 0.0
  %3782 = vmatpush1.msra.mxu0 0.0
  %3783 = vmatprep.subr.mxu0 0.0
  %3784 = vmatpush1.msra.mxu0 0.0
  %3785 = vmatprep.subr.mxu0 0.0
  %3786 = vmatpush1.msra.mxu0 0.0
  %3787 = vmatprep.subr.mxu0 0.0
  %3788 = vmatpush1.msra.mxu0 0.0
  %3789 = vmatprep.subr.mxu0 0.0
  %3790 = vmatpush1.msra.mxu0 0.0
  %3791 = vmatprep.mubr.f32.mxu0 0.0
  %3792 = vmatmul.mubr.f32.gmra.mrb[0].mxu0 %v3725
  %v3793 = vpop.f32.mrb[0].mxu0
  %v3794 = vadd.f32 %v3721, %v3793
  %v3795 = vpop.f32.mrb[0].mxu0
  %3796 = vdwg.mxu0
  %3798 = vrot.lane.b32.xlu0 %v3522, 96
  %v3799 = vpop.permute.xlu0 %3798
  %v3801 = vmul.f32 %v3794, %v3799
  %3802 = vrot.lane.b32.xlu0 %v3522, 112
  %v3803 = vpop.permute.xlu0 %3802
  %3805 = vrot.lane.b32.xlu0 %v3622, 32
  %v3806 = vpop.permute.xlu0 %3805
  %v3808 = vsel %vm2962, %v3801, %v3803
  %v3809 = vsel %vm96, %v3808, %v3806
  %v3810 = vsel %vm3723, %v3809, 0.0
  %3811 = vst [vmem:[%s24] sm:$0xff] %v3810
  // Predicated region
  $region98: #{base_model_forward.1} parent=0 // pred_check
    _
  $region99: #{base_model_forward.1} parent=0 // pred_check_branch
    %3813 = sbr.rel (0) target = $region101
  $region100: #{base_model_forward.1} parent=0 // pred_region
    _
  $region101: #{base_model_forward.1} parent=0 // pred_fallthru
    _
  // Predicated region
  $region102: #{base_model_forward.1} parent=0 // pred_check
    _
  $region103: #{base_model_forward.1} parent=0 // pred_check_branch
    %3815 = sbr.rel (0) target = $region105
  $region104: #{base_model_forward.1} parent=0 // pred_region
    _
  $region105: #{base_model_forward.1} parent=0 // pred_fallthru
    _

</llo_original>
